<compile_context>
chip_gen: v7x
topology: tpu7x:2x2x1
jax: 0.10.0
libtpu: 0.0.40
codegen_flags: <defaults>
</compile_context>

<pallas_src>
import numpy as np
import jax
import jax.numpy as jnp
from jax.experimental import pallas as pl
from jax.experimental.pallas import tpu as pltpu

D_MODEL = 192
INPUT_DIM = 3072
NHEAD = 2
NUM_CHUNKS = 16          # power of two (mask uses & (NUM_CHUNKS - 1))
NUM_CLASSES = 21
NUM_LAYERS = 2
HEAD_DIM = D_MODEL // NHEAD           # 96
HEAD_PAD = 128                        # lane-aligned per-head segment width
QKV_PAD = 3 * NHEAD * HEAD_PAD        # 768  (6 full lane tiles)
CAT_PAD = NHEAD * HEAD_PAD            # 256  (padded concatenated heads)
FFN_DIM = 4 * D_MODEL                 # 768
FOLD_DIM = NUM_CHUNKS * NUM_CLASSES   # 336
LN_EPS = 1e-5


def _layer_norm(x, w, b):
    mu = jnp.mean(x, axis=-1, keepdims=True)
    var = jnp.mean(jnp.square(x - mu), axis=-1, keepdims=True)
    return (x - mu) * jax.lax.rsqrt(var + LN_EPS) * w + b


def _transformer_kernel(x_ref, pe_ref,
                        wqkv_ref, bqkv_ref, wo_ref, bo_ref, ln1w_ref, ln1b_ref,
                        w1_ref, b1_ref, w2_ref, b2_ref, ln2w_ref, ln2b_ref,
                        clf_wcat_ref, clf_fold_ref, clf_mask_ref, clf_b_ref,
                        out_ref, x_state):
    l = pl.program_id(0)
    N, D = x_state.shape                     # N = B * NUM_CHUNKS tokens, batch-major rows
    B = N // NUM_CHUNKS
    scale = np.float32(1.0 / np.sqrt(HEAD_DIM))
    neg_big = np.float32(-1e30)

    # ---- init (layer 0 only): tokens + positional encoding ---------------
    # Batch-major row r = b*NUM_CHUNKS + c gets pe[c] = pe[r % NUM_CHUNKS].
    @pl.when(l == 0)
    def _():
        pe_full = jnp.concatenate([pe_ref[...]] * B, axis=0)        # (N, 192)
        x_state[...] = x_ref[...] + pe_full

    x = x_state[...]

    # nn.TransformerEncoderLayer defaults to batch_first=False, so attention
    # mixes the B data-batch rows *within* each chunk -> same-chunk mask.
    row_c = jax.lax.broadcasted_iota(jnp.int32, (N, N), 0) & (NUM_CHUNKS - 1)
    col_c = jax.lax.broadcasted_iota(jnp.int32, (N, N), 1) & (NUM_CHUNKS - 1)
    same_chunk = row_c == col_c

    # ---- fused, lane-aligned QKV projection: (N,192) @ (192,768) ---------
    qkv = jnp.dot(x.astype(jnp.bfloat16), wqkv_ref[0],
                  preferred_element_type=jnp.float32) + bqkv_ref[0]  # (N, 768)

    heads = []
    for h in range(NHEAD):
        q_off = (0 * NHEAD + h) * HEAD_PAD
        k_off = (1 * NHEAD + h) * HEAD_PAD
        v_off = (2 * NHEAD + h) * HEAD_PAD
        qh = qkv[:, q_off:q_off + HEAD_PAD].astype(jnp.bfloat16)     # pad cols are 0
        kh = qkv[:, k_off:k_off + HEAD_PAD].astype(jnp.bfloat16)
        vh = qkv[:, v_off:v_off + HEAD_PAD].astype(jnp.bfloat16)

        s = jax.lax.dot_general(qh, kh, (((1,), (1,)), ((), ())),
                                preferred_element_type=jnp.float32) * scale
        s = jnp.where(same_chunk, s, neg_big)
        m = jnp.max(s, axis=-1, keepdims=True)
        e = jnp.exp(s - m)                    # masked entries underflow to exactly 0
        denom = jnp.sum(e, axis=-1, keepdims=True)
        a = e * pl.reciprocal(denom, approx=True)
        heads.append(jnp.dot(a.astype(jnp.bfloat16), vh,
                             preferred_element_type=jnp.float32))    # (N, 128)

    attn = jnp.concatenate(heads, axis=-1)                           # (N, 256) lane-dense
    attn = jnp.dot(attn.astype(jnp.bfloat16), wo_ref[0],
                   preferred_element_type=jnp.float32) + bo_ref[0]   # (N, 192)
    x = _layer_norm(x + attn, ln1w_ref[0], ln1b_ref[0])              # post-norm

    # ---- feed-forward (relu) ---------------------------------------------
    h1 = jnp.maximum(
        jnp.dot(x.astype(jnp.bfloat16), w1_ref[0],
                preferred_element_type=jnp.float32) + b1_ref[0], 0.0)  # (N, 768)
    h2 = jnp.dot(h1.astype(jnp.bfloat16), w2_ref[0],
                 preferred_element_type=jnp.float32) + b2_ref[0]       # (N, 192)
    x = _layer_norm(x + h2, ln2w_ref[0], ln2b_ref[0])

    x_state[...] = x

    # ---- classifier (last layer only): Linear(16*192 -> 21) ---------------
    # logits[b,k] = sum_{c,f} x[b*16+c, f] * W[k, c*192+f]
    #   G[r, c*21+k]   = x[r,:] @ W_c[:,k]        (all chunk blocks side by side)
    #   mask keeps only each token's own chunk block (same-chunk mask),
    #   fold (336,21)  sums the 16 column blocks  -> per-token projection y,
    #   agg  (B, N)    sums the 16 tokens of each batch row.
    @pl.when(l == NUM_LAYERS - 1)
    def _():
        g = jnp.dot(x.astype(jnp.bfloat16), clf_wcat_ref[...],
                    preferred_element_type=jnp.float32)              # (N, 336)
        same_mask = jnp.concatenate([clf_mask_ref[...]] * B, axis=0)  # (N, 336) 0/1 f32
        y = jnp.dot(g * same_mask, clf_fold_ref[...],
                    preferred_element_type=jnp.float32)              # (N, 21)

        rows = jax.lax.broadcasted_iota(jnp.int32, (B, N), 0)
        cols = jax.lax.broadcasted_iota(jnp.int32, (B, N), 1)
        in_row = (cols >= rows * NUM_CHUNKS) & (cols < (rows + 1) * NUM_CHUNKS)
        agg = jnp.where(in_row, np.float32(1.0), np.float32(0.0))    # (B, N) 0/1 f32
        out_ref[...] = jnp.dot(agg, y, preferred_element_type=jnp.float32) \
            + clf_b_ref[...]


def pack_params(params):
    """One-time repack of PyTorch-layout weights into kernel slabs (cache it)."""
    def pad_last(a, width):
        return jnp.pad(a, [(0, 0)] * (a.ndim - 1) + [(0, width - a.shape[-1])])

    wqkv, bqkv, wo, bo = [], [], [], []
    ln1w, ln1b, w1, b1, w2, b2, ln2w, ln2b = [], [], [], [], [], [], [], []
    for L in params["layers"]:
        # Fused QKV with 128-lane per-(type, head) segments: [Q0|Q1|K0|K1|V0|V1].
        w_segs, b_segs = [], []
        for t in range(3):                                            # Q, K, V
            Wt = L["in_proj_w"][t * D_MODEL:(t + 1) * D_MODEL, :]     # (192, 192)
            bt = L["in_proj_b"][t * D_MODEL:(t + 1) * D_MODEL]
            for h in range(NHEAD):
                rows = slice(h * HEAD_DIM, (h + 1) * HEAD_DIM)
                w_segs.append(pad_last(Wt[rows, :].T, HEAD_PAD))      # (192, 128)
                b_segs.append(pad_last(bt[rows], HEAD_PAD))           # (128,)
        wqkv.append(jnp.concatenate(w_segs, axis=1))                  # (192, 768)
        bqkv.append(jnp.concatenate(b_segs).reshape(1, QKV_PAD))

        # Out-projection with zero rows matching the padded head concat.
        wo_blocks = []
        for h in range(NHEAD):
            Woh = L["out_proj_w"][:, h * HEAD_DIM:(h + 1) * HEAD_DIM].T   # (96, 192)
            wo_blocks.append(jnp.concatenate(
                [Woh, jnp.zeros((HEAD_PAD - HEAD_DIM, D_MODEL), Woh.dtype)], axis=0))
        wo.append(jnp.concatenate(wo_blocks, axis=0))                 # (256, 192)
        bo.append(L["out_proj_b"].reshape(1, D_MODEL))

        ln1w.append(L["ln1_w"].reshape(1, D_MODEL))
        ln1b.append(L["ln1_b"].reshape(1, D_MODEL))
        w1.append(L["lin1_w"].T)                                      # (192, 768)
        b1.append(L["lin1_b"].reshape(1, FFN_DIM))
        w2.append(L["lin2_w"].T)                                      # (768, 192)
        b2.append(L["lin2_b"].reshape(1, D_MODEL))
        ln2w.append(L["ln2_w"].reshape(1, D_MODEL))
        ln2b.append(L["ln2_b"].reshape(1, D_MODEL))

    def stack(xs, dtype=jnp.float32):
        return jnp.stack(xs).astype(dtype)

    # Classifier: flatten order is (chunk major, feature minor).
    # clf_wcat[f, c*21+k] = W[k, c*192+f]   (per-chunk blocks side by side).
    clf_wcat = (params["clf_w"].reshape(NUM_CLASSES, NUM_CHUNKS, D_MODEL)
                .transpose(2, 1, 0).reshape(D_MODEL, FOLD_DIM).astype(jnp.bfloat16))
    # fold[c*21+k', k] = 1 iff k'==k  -> sums the 16 column blocks.
    clf_fold = jnp.tile(jnp.eye(NUM_CLASSES, dtype=jnp.float32), (NUM_CHUNKS, 1))
    # mask[c, c'*21+k] = 1 iff c'==c  -> keeps each token's own chunk block.
    clf_mask = jnp.repeat(jnp.eye(NUM_CHUNKS, dtype=jnp.float32), NUM_CLASSES, axis=1)

    return dict(
        pe=params["pe"].astype(jnp.float32),
        wqkv=stack(wqkv, jnp.bfloat16), bqkv=stack(bqkv),
        wo=stack(wo, jnp.bfloat16), bo=stack(bo),
        ln1w=stack(ln1w), ln1b=stack(ln1b),
        w1=stack(w1, jnp.bfloat16), b1=stack(b1),
        w2=stack(w2, jnp.bfloat16), b2=stack(b2),
        ln2w=stack(ln2w), ln2b=stack(ln2b),
        clf_wcat=clf_wcat, clf_fold=clf_fold, clf_mask=clf_mask,
        clf_b=params["clf_b"].reshape(1, NUM_CLASSES).astype(jnp.float32),
    )


def transformer_classifier_forward(x, packed):
    B = x.shape[0]
    N = B * NUM_CHUNKS
    x_tok = x.reshape(N, D_MODEL)    # batch-major token rows (row = b*16 + c), free

    def layer_spec(a):               # per-layer slab, indexed by the grid
        nd_rest = a.ndim - 1
        return pl.BlockSpec((1,) + a.shape[1:],
                            lambda l, _n=nd_rest: (l,) + (0,) * _n)

    def whole_spec(a):               # whole array, same block every grid step
        nd = a.ndim
        return pl.BlockSpec(a.shape, lambda l, _n=nd: (0,) * _n)

    inputs = (
        x_tok, packed["pe"],
        packed["wqkv"], packed["bqkv"], packed["wo"], packed["bo"],
        packed["ln1w"], packed["ln1b"],
        packed["w1"], packed["b1"], packed["w2"], packed["b2"],
        packed["ln2w"], packed["ln2b"],
        packed["clf_wcat"], packed["clf_fold"], packed["clf_mask"], packed["clf_b"],
    )
    in_specs = [
        whole_spec(x_tok), whole_spec(packed["pe"]),
        layer_spec(packed["wqkv"]), layer_spec(packed["bqkv"]),
        layer_spec(packed["wo"]), layer_spec(packed["bo"]),
        layer_spec(packed["ln1w"]), layer_spec(packed["ln1b"]),
        layer_spec(packed["w1"]), layer_spec(packed["b1"]),
        layer_spec(packed["w2"]), layer_spec(packed["b2"]),
        layer_spec(packed["ln2w"]), layer_spec(packed["ln2b"]),
        whole_spec(packed["clf_wcat"]), whole_spec(packed["clf_fold"]),
        whole_spec(packed["clf_mask"]), whole_spec(packed["clf_b"]),
    ]

    return pl.pallas_call(
        _transformer_kernel,
        out_shape=jax.ShapeDtypeStruct((B, NUM_CLASSES), jnp.float32),
        grid=(NUM_LAYERS,),
        in_specs=in_specs,
        out_specs=pl.BlockSpec((B, NUM_CLASSES), lambda l: (0, 0)),
        scratch_shapes=[pltpu.VMEM((N, D_MODEL), jnp.float32)],
        compiler_params=pltpu.CompilerParams(
            dimension_semantics=("arbitrary",)),
    )(*inputs)


def make_params(key):
    keys = iter(jax.random.split(key, 32))

    def unif(shape, fan_in):
        bound = 1.0 / np.sqrt(fan_in)
        return jax.random.uniform(next(keys), shape, jnp.float32,
                                  minval=-bound, maxval=bound)

    layers = []
    for _ in range(NUM_LAYERS):
        layers.append(dict(
            in_proj_w=unif((3 * D_MODEL, D_MODEL), D_MODEL),
            in_proj_b=unif((3 * D_MODEL,), D_MODEL),
            out_proj_w=unif((D_MODEL, D_MODEL), D_MODEL),
            out_proj_b=unif((D_MODEL,), D_MODEL),
            ln1_w=jnp.ones((D_MODEL,), jnp.float32),
            ln1_b=jnp.zeros((D_MODEL,), jnp.float32),
            lin1_w=unif((FFN_DIM, D_MODEL), D_MODEL),
            lin1_b=unif((FFN_DIM,), D_MODEL),
            lin2_w=unif((D_MODEL, FFN_DIM), FFN_DIM),
            lin2_b=unif((D_MODEL,), FFN_DIM),
            ln2_w=jnp.ones((D_MODEL,), jnp.float32),
            ln2_b=jnp.zeros((D_MODEL,), jnp.float32),
        ))
    return dict(
        # positional_encoding is a trainable Parameter (zeros at init); use small
        # deterministic random values so the add is exercised.
        pe=0.02 * jax.random.normal(next(keys), (NUM_CHUNKS, D_MODEL), jnp.float32),
        layers=layers,
        clf_w=unif((NUM_CLASSES, NUM_CHUNKS * D_MODEL), NUM_CHUNKS * D_MODEL),
        clf_b=unif((NUM_CLASSES,), NUM_CHUNKS * D_MODEL),
    )


def reference_forward(x, params):
    """Pure-JAX f32 re-implementation of the PyTorch module (eval mode)."""
    B = x.shape[0]
    h = x.reshape(B, NUM_CHUNKS, D_MODEL) + params["pe"][None]
    # nn.TransformerEncoderLayer (batch_first=False): dim0 = sequence (B),
    # dim1 = batch (chunks).
    for L in params["layers"]:
        q = h @ L["in_proj_w"][:D_MODEL].T + L["in_proj_b"][:D_MODEL]
        k = h @ L["in_proj_w"][D_MODEL:2 * D_MODEL].T + L["in_proj_b"][D_MODEL:2 * D_MODEL]
        v = h @ L["in_proj_w"][2 * D_MODEL:].T + L["in_proj_b"][2 * D_MODEL:]

        def split(t):  # (B, 16, 192) -> (16, nhead, B, 96)
            return t.reshape(B, NUM_CHUNKS, NHEAD, HEAD_DIM).transpose(1, 2, 0, 3)

        qh, kh, vh = split(q), split(k), split(v)
        s = jnp.einsum("cnbd,cned->cnbe", qh, kh) / np.sqrt(HEAD_DIM)
        a = jax.nn.softmax(s, axis=-1)
        o = jnp.einsum("cnbe,cned->cnbd", a, vh)
        o = o.transpose(2, 0, 1, 3).reshape(B, NUM_CHUNKS, D_MODEL)
        o = o @ L["out_proj_w"].T + L["out_proj_b"]
        h = _layer_norm(h + o, L["ln1_w"], L["ln1_b"])
        f = jax.nn.relu(h @ L["lin1_w"].T + L["lin1_b"]) @ L["lin2_w"].T + L["lin2_b"]
        h = _layer_norm(h + f, L["ln2_w"], L["ln2_b"])
    flat = h.reshape(B, NUM_CHUNKS * D_MODEL)
    return flat @ params["clf_w"].T + params["clf_b"]


if __name__ == "__main__":
    key = jax.random.PRNGKey(0)
    kx, kp = jax.random.split(key)
    B = 2
    x = jax.random.normal(kx, (B, INPUT_DIM), jnp.float32)
    params = make_params(kp)

    packed = pack_params(params)          # one-time weight repack (cache in production)

    fwd = jax.jit(transformer_classifier_forward)
    out = jax.block_until_ready(fwd(x, packed))

    assert out.shape == (B, NUM_CLASSES), out.shape
    assert bool(jnp.all(jnp.isfinite(out)))

    ref = reference_forward(x, params)    # pure-JAX f32 reference (eval mode)
    max_diff = float(jnp.max(jnp.abs(out - ref)))
    assert bool(jnp.allclose(out, ref, rtol=5e-2, atol=2e-1)), max_diff

    print("KERNEL_OK")
</pallas_src>

<mosaic_0001>
module attributes {stable_mosaic.version = 11 : i64} {
  func.func @_transformer_kernel(%arg0: i32, %arg1: memref<32x192xf32, #tpu.memory_space<vmem>>, %arg2: memref<16x192xf32, #tpu.memory_space<vmem>>, %arg3: memref<1x192x768xbf16, #tpu.memory_space<vmem>>, %arg4: memref<1x1x768xf32, #tpu.memory_space<vmem>>, %arg5: memref<1x256x192xbf16, #tpu.memory_space<vmem>>, %arg6: memref<1x1x192xf32, #tpu.memory_space<vmem>>, %arg7: memref<1x1x192xf32, #tpu.memory_space<vmem>>, %arg8: memref<1x1x192xf32, #tpu.memory_space<vmem>>, %arg9: memref<1x192x768xbf16, #tpu.memory_space<vmem>>, %arg10: memref<1x1x768xf32, #tpu.memory_space<vmem>>, %arg11: memref<1x768x192xbf16, #tpu.memory_space<vmem>>, %arg12: memref<1x1x192xf32, #tpu.memory_space<vmem>>, %arg13: memref<1x1x192xf32, #tpu.memory_space<vmem>>, %arg14: memref<1x1x192xf32, #tpu.memory_space<vmem>>, %arg15: memref<192x336xbf16, #tpu.memory_space<vmem>>, %arg16: memref<336x21xf32, #tpu.memory_space<vmem>>, %arg17: memref<16x336xf32, #tpu.memory_space<vmem>>, %arg18: memref<1x21xf32, #tpu.memory_space<vmem>>, %arg19: memref<2x21xf32, #tpu.memory_space<vmem>>, %arg20: memref<32x192xf32, #tpu.memory_space<vmem>>) attributes {dimension_semantics = [#tpu.dimension_semantics<arbitrary>], iteration_bounds = array<i64: 2>, scalar_prefetch = 0 : i64, scratch_operands = 1 : i64, tpu.core_type = #tpu.core_type<tc>, window_params = [{pipeline_mode = #tpu.pipeline_mode<synchronous>, transform_indices = @transform_0, window_bounds = array<i64: 32, 192>}, {pipeline_mode = #tpu.pipeline_mode<synchronous>, transform_indices = @transform_1, window_bounds = array<i64: 16, 192>}, {transform_indices = @transform_2, window_bounds = array<i64: 1, 192, 768>}, {transform_indices = @transform_3, window_bounds = array<i64: 1, 1, 768>}, {transform_indices = @transform_4, window_bounds = array<i64: 1, 256, 192>}, {transform_indices = @transform_5, window_bounds = array<i64: 1, 1, 192>}, {transform_indices = @transform_6, window_bounds = array<i64: 1, 1, 192>}, {transform_indices = @transform_7, window_bounds = array<i64: 1, 1, 192>}, {transform_indices = @transform_8, window_bounds = array<i64: 1, 192, 768>}, {transform_indices = @transform_9, window_bounds = array<i64: 1, 1, 768>}, {transform_indices = @transform_10, window_bounds = array<i64: 1, 768, 192>}, {transform_indices = @transform_11, window_bounds = array<i64: 1, 1, 192>}, {transform_indices = @transform_12, window_bounds = array<i64: 1, 1, 192>}, {transform_indices = @transform_13, window_bounds = array<i64: 1, 1, 192>}, {pipeline_mode = #tpu.pipeline_mode<synchronous>, transform_indices = @transform_14, window_bounds = array<i64: 192, 336>}, {pipeline_mode = #tpu.pipeline_mode<synchronous>, transform_indices = @transform_15, window_bounds = array<i64: 336, 21>}, {pipeline_mode = #tpu.pipeline_mode<synchronous>, transform_indices = @transform_16, window_bounds = array<i64: 16, 336>}, {pipeline_mode = #tpu.pipeline_mode<synchronous>, transform_indices = @transform_17, window_bounds = array<i64: 1, 21>}, {pipeline_mode = #tpu.pipeline_mode<synchronous>, transform_indices = @transform_18, window_bounds = array<i64: 2, 21>}]} {
    %c0_i32 = arith.constant 0 : i32
    %0 = arith.cmpi eq, %arg0, %c0_i32 : i32
    %1 = arith.extui %0 : i1 to i32
    %c0_i32_0 = arith.constant 0 : i32
    %2 = arith.cmpi ne, %1, %c0_i32_0 : i32
    scf.if %2 {
      %c0_68 = arith.constant 0 : index
      %c0_69 = arith.constant 0 : index
      %150 = vector.load %arg2[%c0_68, %c0_69] : memref<16x192xf32, #tpu.memory_space<vmem>>, vector<16x192xf32>
      %151 = tpu.concatenate %150, %150 in 0 : vector<16x192xf32>, vector<16x192xf32> -> vector<32x192xf32>
      %c0_70 = arith.constant 0 : index
      %c0_71 = arith.constant 0 : index
      %152 = vector.load %arg1[%c0_70, %c0_71] : memref<32x192xf32, #tpu.memory_space<vmem>>, vector<32x192xf32>
      %153 = arith.addf %152, %151 : vector<32x192xf32>
      %c0_72 = arith.constant 0 : index
      %c0_73 = arith.constant 0 : index
      %154 = vector.load %arg20[%c0_72, %c0_73] : memref<32x192xf32, #tpu.memory_space<vmem>>, vector<32x192xf32>
      tpu.vector_store %arg20[%c0_72, %c0_73], %153 {strides = array<i32>} : memref<32x192xf32, #tpu.memory_space<vmem>>, vector<32x192xf32>,
    } else {
    }
    %c0 = arith.constant 0 : index
    %c0_1 = arith.constant 0 : index
    %3 = vector.load %arg20[%c0, %c0_1] : memref<32x192xf32, #tpu.memory_space<vmem>>, vector<32x192xf32>
    %4 = tpu.iota {dimensions = array<i32: 0>} : vector<32x32xi32>
    %c15_i32 = arith.constant 15 : i32
    %5 = vector.broadcast %c15_i32 : i32 to vector<32x32xi32>
    %6 = arith.andi %4, %5 : vector<32x32xi32>
    %7 = tpu.iota {dimensions = array<i32: 1>} : vector<32x32xi32>
    %c15_i32_2 = arith.constant 15 : i32
    %8 = vector.broadcast %c15_i32_2 : i32 to vector<32x32xi32>
    %9 = arith.andi %7, %8 : vector<32x32xi32>
    %10 = arith.cmpi eq, %6, %9 : vector<32x32xi32>
    %11 = arith.truncf %3 : vector<32x192xf32> to vector<32x192xbf16>
    %c0_3 = arith.constant 0 : index
    %c0_4 = arith.constant 0 : index
    %c0_5 = arith.constant 0 : index
    %12 = vector.load %arg3[%c0_3, %c0_4, %c0_5] : memref<1x192x768xbf16, #tpu.memory_space<vmem>>, vector<1x192x768xbf16>
    %13 = vector.shape_cast %12 : vector<1x192x768xbf16> to vector<192x768xbf16>
    %cst = arith.constant dense<0.000000e+00> : vector<32x768xf32>
    %14 = tpu.matmul %11, %13, %cst {dimension_numbers = #tpu.dot_dimension_numbers<[1], [0], [0], [1], [0, 0, 1, 1], [], []>} : vector<32x192xbf16>, vector<192x768xbf16>, vector<32x768xf32> -> vector<32x768xf32>
    %c0_6 = arith.constant 0 : index
    %c0_7 = arith.constant 0 : index
    %c0_8 = arith.constant 0 : index
    %15 = vector.load %arg4[%c0_6, %c0_7, %c0_8] : memref<1x1x768xf32, #tpu.memory_space<vmem>>, vector<1x1x768xf32>
    %16 = vector.shape_cast %15 : vector<1x1x768xf32> to vector<1x768xf32>
    %17 = vector.broadcast %16 : vector<1x768xf32> to vector<32x768xf32>
    %18 = arith.addf %14, %17 : vector<32x768xf32>
    %19 = vector.extract_strided_slice %18 {offsets = [0, 0], sizes = [32, 128], strides = [1, 1]} : vector<32x768xf32> to vector<32x128xf32>
    %20 = arith.truncf %19 : vector<32x128xf32> to vector<32x128xbf16>
    %21 = vector.extract_strided_slice %18 {offsets = [0, 256], sizes = [32, 128], strides = [1, 1]} : vector<32x768xf32> to vector<32x128xf32>
    %22 = arith.truncf %21 : vector<32x128xf32> to vector<32x128xbf16>
    %23 = vector.extract_strided_slice %18 {offsets = [0, 512], sizes = [32, 128], strides = [1, 1]} : vector<32x768xf32> to vector<32x128xf32>
    %24 = arith.truncf %23 : vector<32x128xf32> to vector<32x128xbf16>
    %cst_9 = arith.constant dense<0.000000e+00> : vector<32x32xf32>
    %25 = tpu.matmul %20, %22, %cst_9 {dimension_numbers = #tpu.dot_dimension_numbers<[1], [1], [0], [0], [0, 0, 1, 0], [], []>} : vector<32x128xbf16>, vector<32x128xbf16>, vector<32x32xf32> -> vector<32x32xf32>
    %cst_10 = arith.constant 0.102062076 : f32
    %26 = vector.broadcast %cst_10 : f32 to vector<32x32xf32>
    %27 = arith.mulf %25, %26 : vector<32x32xf32>
    %cst_11 = arith.constant -1.000000e+30 : f32
    %28 = vector.broadcast %cst_11 : f32 to vector<32x32xf32>
    %29 = arith.select %10, %27, %28 : vector<32x32xi1>, vector<32x32xf32>
    %cst_12 = arith.constant dense<0xFF800000> : vector<32xf32>
    %30 = vector.multi_reduction <maximumf>, %29, %cst_12 [1] : vector<32x32xf32> to vector<32xf32>
    %31 = vector.shape_cast %30 : vector<32xf32> to vector<32x1xf32>
    %32 = vector.broadcast %31 : vector<32x1xf32> to vector<32x32xf32>
    %33 = arith.subf %29, %32 : vector<32x32xf32>
    %34 = math.exp %33 : vector<32x32xf32>
    %cst_13 = arith.constant dense<0.000000e+00> : vector<32xf32>
    %35 = vector.multi_reduction <add>, %34, %cst_13 [1] : vector<32x32xf32> to vector<32xf32>
    %36 = vector.shape_cast %35 : vector<32xf32> to vector<32x1xf32>
    %37 = tpu.reciprocal %36 {approx = true} : vector<32x1xf32> -> vector<32x1xf32>
    %38 = vector.broadcast %37 : vector<32x1xf32> to vector<32x32xf32>
    %39 = arith.mulf %34, %38 : vector<32x32xf32>
    %40 = arith.truncf %39 : vector<32x32xf32> to vector<32x32xbf16>
    %cst_14 = arith.constant dense<0.000000e+00> : vector<32x128xf32>
    %41 = tpu.matmul %40, %24, %cst_14 {dimension_numbers = #tpu.dot_dimension_numbers<[1], [0], [0], [1], [0, 0, 1, 1], [], []>} : vector<32x32xbf16>, vector<32x128xbf16>, vector<32x128xf32> -> vector<32x128xf32>
    %42 = vector.extract_strided_slice %18 {offsets = [0, 128], sizes = [32, 128], strides = [1, 1]} : vector<32x768xf32> to vector<32x128xf32>
    %43 = arith.truncf %42 : vector<32x128xf32> to vector<32x128xbf16>
    %44 = vector.extract_strided_slice %18 {offsets = [0, 384], sizes = [32, 128], strides = [1, 1]} : vector<32x768xf32> to vector<32x128xf32>
    %45 = arith.truncf %44 : vector<32x128xf32> to vector<32x128xbf16>
    %46 = vector.extract_strided_slice %18 {offsets = [0, 640], sizes = [32, 128], strides = [1, 1]} : vector<32x768xf32> to vector<32x128xf32>
    %47 = arith.truncf %46 : vector<32x128xf32> to vector<32x128xbf16>
    %cst_15 = arith.constant dense<0.000000e+00> : vector<32x32xf32>
    %48 = tpu.matmul %43, %45, %cst_15 {dimension_numbers = #tpu.dot_dimension_numbers<[1], [1], [0], [0], [0, 0, 1, 0], [], []>} : vector<32x128xbf16>, vector<32x128xbf16>, vector<32x32xf32> -> vector<32x32xf32>
    %cst_16 = arith.constant 0.102062076 : f32
    %49 = vector.broadcast %cst_16 : f32 to vector<32x32xf32>
    %50 = arith.mulf %48, %49 : vector<32x32xf32>
    %cst_17 = arith.constant -1.000000e+30 : f32
    %51 = vector.broadcast %cst_17 : f32 to vector<32x32xf32>
    %52 = arith.select %10, %50, %51 : vector<32x32xi1>, vector<32x32xf32>
    %cst_18 = arith.constant dense<0xFF800000> : vector<32xf32>
    %53 = vector.multi_reduction <maximumf>, %52, %cst_18 [1] : vector<32x32xf32> to vector<32xf32>
    %54 = vector.shape_cast %53 : vector<32xf32> to vector<32x1xf32>
    %55 = vector.broadcast %54 : vector<32x1xf32> to vector<32x32xf32>
    %56 = arith.subf %52, %55 : vector<32x32xf32>
    %57 = math.exp %56 : vector<32x32xf32>
    %cst_19 = arith.constant dense<0.000000e+00> : vector<32xf32>
    %58 = vector.multi_reduction <add>, %57, %cst_19 [1] : vector<32x32xf32> to vector<32xf32>
    %59 = vector.shape_cast %58 : vector<32xf32> to vector<32x1xf32>
    %60 = tpu.reciprocal %59 {approx = true} : vector<32x1xf32> -> vector<32x1xf32>
    %61 = vector.broadcast %60 : vector<32x1xf32> to vector<32x32xf32>
    %62 = arith.mulf %57, %61 : vector<32x32xf32>
    %63 = arith.truncf %62 : vector<32x32xf32> to vector<32x32xbf16>
    %cst_20 = arith.constant dense<0.000000e+00> : vector<32x128xf32>
    %64 = tpu.matmul %63, %47, %cst_20 {dimension_numbers = #tpu.dot_dimension_numbers<[1], [0], [0], [1], [0, 0, 1, 1], [], []>} : vector<32x32xbf16>, vector<32x128xbf16>, vector<32x128xf32> -> vector<32x128xf32>
    %65 = tpu.concatenate %41, %64 in 1 : vector<32x128xf32>, vector<32x128xf32> -> vector<32x256xf32>
    %66 = arith.truncf %65 : vector<32x256xf32> to vector<32x256xbf16>
    %c0_21 = arith.constant 0 : index
    %c0_22 = arith.constant 0 : index
    %c0_23 = arith.constant 0 : index
    %67 = vector.load %arg5[%c0_21, %c0_22, %c0_23] : memref<1x256x192xbf16, #tpu.memory_space<vmem>>, vector<1x256x192xbf16>
    %68 = vector.shape_cast %67 : vector<1x256x192xbf16> to vector<256x192xbf16>
    %cst_24 = arith.constant dense<0.000000e+00> : vector<32x192xf32>
    %69 = tpu.matmul %66, %68, %cst_24 {dimension_numbers = #tpu.dot_dimension_numbers<[1], [0], [0], [1], [0, 0, 1, 1], [], []>} : vector<32x256xbf16>, vector<256x192xbf16>, vector<32x192xf32> -> vector<32x192xf32>
    %c0_25 = arith.constant 0 : index
    %c0_26 = arith.constant 0 : index
    %c0_27 = arith.constant 0 : index
    %70 = vector.load %arg6[%c0_25, %c0_26, %c0_27] : memref<1x1x192xf32, #tpu.memory_space<vmem>>, vector<1x1x192xf32>
    %71 = vector.shape_cast %70 : vector<1x1x192xf32> to vector<1x192xf32>
    %72 = vector.broadcast %71 : vector<1x192xf32> to vector<32x192xf32>
    %73 = arith.addf %69, %72 : vector<32x192xf32>
    %74 = arith.addf %3, %73 : vector<32x192xf32>
    %c0_28 = arith.constant 0 : index
    %c0_29 = arith.constant 0 : index
    %c0_30 = arith.constant 0 : index
    %75 = vector.load %arg7[%c0_28, %c0_29, %c0_30] : memref<1x1x192xf32, #tpu.memory_space<vmem>>, vector<1x1x192xf32>
    %76 = vector.shape_cast %75 : vector<1x1x192xf32> to vector<1x192xf32>
    %c0_31 = arith.constant 0 : index
    %c0_32 = arith.constant 0 : index
    %c0_33 = arith.constant 0 : index
    %77 = vector.load %arg8[%c0_31, %c0_32, %c0_33] : memref<1x1x192xf32, #tpu.memory_space<vmem>>, vector<1x1x192xf32>
    %78 = vector.shape_cast %77 : vector<1x1x192xf32> to vector<1x192xf32>
    %cst_34 = arith.constant dense<0.000000e+00> : vector<32xf32>
    %79 = vector.multi_reduction <add>, %74, %cst_34 [1] : vector<32x192xf32> to vector<32xf32>
    %80 = vector.shape_cast %79 : vector<32xf32> to vector<32x1xf32>
    %cst_35 = arith.constant 1.920000e+02 : f32
    %81 = vector.broadcast %cst_35 : f32 to vector<32x1xf32>
    %82 = arith.divf %80, %81 : vector<32x1xf32>
    %83 = vector.broadcast %82 : vector<32x1xf32> to vector<32x192xf32>
    %84 = arith.subf %74, %83 : vector<32x192xf32>
    %85 = arith.mulf %84, %84 : vector<32x192xf32>
    %cst_36 = arith.constant dense<0.000000e+00> : vector<32xf32>
    %86 = vector.multi_reduction <add>, %85, %cst_36 [1] : vector<32x192xf32> to vector<32xf32>
    %87 = vector.shape_cast %86 : vector<32xf32> to vector<32x1xf32>
    %cst_37 = arith.constant 1.920000e+02 : f32
    %88 = vector.broadcast %cst_37 : f32 to vector<32x1xf32>
    %89 = arith.divf %87, %88 : vector<32x1xf32>
    %90 = vector.broadcast %82 : vector<32x1xf32> to vector<32x192xf32>
    %91 = arith.subf %74, %90 : vector<32x192xf32>
    %cst_38 = arith.constant 9.99999974E-6 : f32
    %92 = vector.broadcast %cst_38 : f32 to vector<32x1xf32>
    %93 = arith.addf %89, %92 : vector<32x1xf32>
    %94 = math.rsqrt %93 : vector<32x1xf32>
    %95 = vector.broadcast %94 : vector<32x1xf32> to vector<32x192xf32>
    %96 = arith.mulf %91, %95 : vector<32x192xf32>
    %97 = vector.broadcast %76 : vector<1x192xf32> to vector<32x192xf32>
    %98 = arith.mulf %96, %97 : vector<32x192xf32>
    %99 = vector.broadcast %78 : vector<1x192xf32> to vector<32x192xf32>
    %100 = arith.addf %98, %99 : vector<32x192xf32>
    %101 = arith.truncf %100 : vector<32x192xf32> to vector<32x192xbf16>
    %c0_39 = arith.constant 0 : index
    %c0_40 = arith.constant 0 : index
    %c0_41 = arith.constant 0 : index
    %102 = vector.load %arg9[%c0_39, %c0_40, %c0_41] : memref<1x192x768xbf16, #tpu.memory_space<vmem>>, vector<1x192x768xbf16>
    %103 = vector.shape_cast %102 : vector<1x192x768xbf16> to vector<192x768xbf16>
    %cst_42 = arith.constant dense<0.000000e+00> : vector<32x768xf32>
    %104 = tpu.matmul %101, %103, %cst_42 {dimension_numbers = #tpu.dot_dimension_numbers<[1], [0], [0], [1], [0, 0, 1, 1], [], []>} : vector<32x192xbf16>, vector<192x768xbf16>, vector<32x768xf32> -> vector<32x768xf32>
    %c0_43 = arith.constant 0 : index
    %c0_44 = arith.constant 0 : index
    %c0_45 = arith.constant 0 : index
    %105 = vector.load %arg10[%c0_43, %c0_44, %c0_45] : memref<1x1x768xf32, #tpu.memory_space<vmem>>, vector<1x1x768xf32>
    %106 = vector.shape_cast %105 : vector<1x1x768xf32> to vector<1x768xf32>
    %107 = vector.broadcast %106 : vector<1x768xf32> to vector<32x768xf32>
    %108 = arith.addf %104, %107 : vector<32x768xf32>
    %cst_46 = arith.constant 0.000000e+00 : f32
    %109 = vector.broadcast %cst_46 : f32 to vector<32x768xf32>
    %110 = arith.maximumf %108, %109 : vector<32x768xf32>
    %111 = arith.truncf %110 : vector<32x768xf32> to vector<32x768xbf16>
    %c0_47 = arith.constant 0 : index
    %c0_48 = arith.constant 0 : index
    %c0_49 = arith.constant 0 : index
    %112 = vector.load %arg11[%c0_47, %c0_48, %c0_49] : memref<1x768x192xbf16, #tpu.memory_space<vmem>>, vector<1x768x192xbf16>
    %113 = vector.shape_cast %112 : vector<1x768x192xbf16> to vector<768x192xbf16>
    %cst_50 = arith.constant dense<0.000000e+00> : vector<32x192xf32>
    %114 = tpu.matmul %111, %113, %cst_50 {dimension_numbers = #tpu.dot_dimension_numbers<[1], [0], [0], [1], [0, 0, 1, 1], [], []>} : vector<32x768xbf16>, vector<768x192xbf16>, vector<32x192xf32> -> vector<32x192xf32>
    %c0_51 = arith.constant 0 : index
    %c0_52 = arith.constant 0 : index
    %c0_53 = arith.constant 0 : index
    %115 = vector.load %arg12[%c0_51, %c0_52, %c0_53] : memref<1x1x192xf32, #tpu.memory_space<vmem>>, vector<1x1x192xf32>
    %116 = vector.shape_cast %115 : vector<1x1x192xf32> to vector<1x192xf32>
    %117 = vector.broadcast %116 : vector<1x192xf32> to vector<32x192xf32>
    %118 = arith.addf %114, %117 : vector<32x192xf32>
    %119 = arith.addf %100, %118 : vector<32x192xf32>
    %c0_54 = arith.constant 0 : index
    %c0_55 = arith.constant 0 : index
    %c0_56 = arith.constant 0 : index
    %120 = vector.load %arg13[%c0_54, %c0_55, %c0_56] : memref<1x1x192xf32, #tpu.memory_space<vmem>>, vector<1x1x192xf32>
    %121 = vector.shape_cast %120 : vector<1x1x192xf32> to vector<1x192xf32>
    %c0_57 = arith.constant 0 : index
    %c0_58 = arith.constant 0 : index
    %c0_59 = arith.constant 0 : index
    %122 = vector.load %arg14[%c0_57, %c0_58, %c0_59] : memref<1x1x192xf32, #tpu.memory_space<vmem>>, vector<1x1x192xf32>
    %123 = vector.shape_cast %122 : vector<1x1x192xf32> to vector<1x192xf32>
    %cst_60 = arith.constant dense<0.000000e+00> : vector<32xf32>
    %124 = vector.multi_reduction <add>, %119, %cst_60 [1] : vector<32x192xf32> to vector<32xf32>
    %125 = vector.shape_cast %124 : vector<32xf32> to vector<32x1xf32>
    %cst_61 = arith.constant 1.920000e+02 : f32
    %126 = vector.broadcast %cst_61 : f32 to vector<32x1xf32>
    %127 = arith.divf %125, %126 : vector<32x1xf32>
    %128 = vector.broadcast %127 : vector<32x1xf32> to vector<32x192xf32>
    %129 = arith.subf %119, %128 : vector<32x192xf32>
    %130 = arith.mulf %129, %129 : vector<32x192xf32>
    %cst_62 = arith.constant dense<0.000000e+00> : vector<32xf32>
    %131 = vector.multi_reduction <add>, %130, %cst_62 [1] : vector<32x192xf32> to vector<32xf32>
    %132 = vector.shape_cast %131 : vector<32xf32> to vector<32x1xf32>
    %cst_63 = arith.constant 1.920000e+02 : f32
    %133 = vector.broadcast %cst_63 : f32 to vector<32x1xf32>
    %134 = arith.divf %132, %133 : vector<32x1xf32>
    %135 = vector.broadcast %127 : vector<32x1xf32> to vector<32x192xf32>
    %136 = arith.subf %119, %135 : vector<32x192xf32>
    %cst_64 = arith.constant 9.99999974E-6 : f32
    %137 = vector.broadcast %cst_64 : f32 to vector<32x1xf32>
    %138 = arith.addf %134, %137 : vector<32x1xf32>
    %139 = math.rsqrt %138 : vector<32x1xf32>
    %140 = vector.broadcast %139 : vector<32x1xf32> to vector<32x192xf32>
    %141 = arith.mulf %136, %140 : vector<32x192xf32>
    %142 = vector.broadcast %121 : vector<1x192xf32> to vector<32x192xf32>
    %143 = arith.mulf %141, %142 : vector<32x192xf32>
    %144 = vector.broadcast %123 : vector<1x192xf32> to vector<32x192xf32>
    %145 = arith.addf %143, %144 : vector<32x192xf32>
    %c0_65 = arith.constant 0 : index
    %c0_66 = arith.constant 0 : index
    %146 = vector.load %arg20[%c0_65, %c0_66] : memref<32x192xf32, #tpu.memory_space<vmem>>, vector<32x192xf32>
    tpu.vector_store %arg20[%c0_65, %c0_66], %145 {strides = array<i32>} : memref<32x192xf32, #tpu.memory_space<vmem>>, vector<32x192xf32>,
    %c1_i32 = arith.constant 1 : i32
    %147 = arith.cmpi eq, %arg0, %c1_i32 : i32
    %148 = arith.extui %147 : i1 to i32
    %c0_i32_67 = arith.constant 0 : i32
    %149 = arith.cmpi ne, %148, %c0_i32_67 : i32
    scf.if %149 {
      %150 = arith.truncf %145 : vector<32x192xf32> to vector<32x192xbf16>
      %c0_68 = arith.constant 0 : index
      %c0_69 = arith.constant 0 : index
      %151 = vector.load %arg15[%c0_68, %c0_69] : memref<192x336xbf16, #tpu.memory_space<vmem>>, vector<192x336xbf16>
      %cst_70 = arith.constant dense<0.000000e+00> : vector<32x336xf32>
      %152 = tpu.matmul %150, %151, %cst_70 {dimension_numbers = #tpu.dot_dimension_numbers<[1], [0], [0], [1], [0, 0, 1, 1], [], []>} : vector<32x192xbf16>, vector<192x336xbf16>, vector<32x336xf32> -> vector<32x336xf32>
      %c0_71 = arith.constant 0 : index
      %c0_72 = arith.constant 0 : index
      %153 = vector.load %arg17[%c0_71, %c0_72] : memref<16x336xf32, #tpu.memory_space<vmem>>, vector<16x336xf32>
      %154 = tpu.concatenate %153, %153 in 0 : vector<16x336xf32>, vector<16x336xf32> -> vector<32x336xf32>
      %155 = arith.mulf %152, %154 : vector<32x336xf32>
      %c0_73 = arith.constant 0 : index
      %c0_74 = arith.constant 0 : index
      %156 = vector.load %arg16[%c0_73, %c0_74] : memref<336x21xf32, #tpu.memory_space<vmem>>, vector<336x21xf32>
      %cst_75 = arith.constant dense<0.000000e+00> : vector<32x21xf32>
      %157 = tpu.matmul %155, %156, %cst_75 {dimension_numbers = #tpu.dot_dimension_numbers<[1], [0], [0], [1], [0, 0, 1, 1], [], []>} : vector<32x336xf32>, vector<336x21xf32>, vector<32x21xf32> -> vector<32x21xf32>
      %158 = tpu.iota {dimensions = array<i32: 0>} : vector<2x32xi32>
      %159 = tpu.iota {dimensions = array<i32: 1>} : vector<2x32xi32>
      %c16_i32 = arith.constant 16 : i32
      %160 = vector.broadcast %c16_i32 : i32 to vector<2x32xi32>
      %161 = arith.muli %158, %160 : vector<2x32xi32>
      %162 = arith.cmpi sge, %159, %161 : vector<2x32xi32>
      %c1_i32_76 = arith.constant 1 : i32
      %163 = vector.broadcast %c1_i32_76 : i32 to vector<2x32xi32>
      %164 = arith.addi %158, %163 : vector<2x32xi32>
      %c16_i32_77 = arith.constant 16 : i32
      %165 = vector.broadcast %c16_i32_77 : i32 to vector<2x32xi32>
      %166 = arith.muli %164, %165 : vector<2x32xi32>
      %167 = arith.cmpi slt, %159, %166 : vector<2x32xi32>
      %168 = arith.andi %162, %167 : vector<2x32xi1>
      %cst_78 = arith.constant 1.000000e+00 : f32
      %cst_79 = arith.constant 0.000000e+00 : f32
      %169 = vector.broadcast %cst_78 : f32 to vector<2x32xf32>
      %170 = vector.broadcast %cst_79 : f32 to vector<2x32xf32>
      %171 = arith.select %168, %169, %170 : vector<2x32xi1>, vector<2x32xf32>
      %cst_80 = arith.constant dense<0.000000e+00> : vector<2x21xf32>
      %172 = tpu.matmul %171, %157, %cst_80 {dimension_numbers = #tpu.dot_dimension_numbers<[1], [0], [0], [1], [0, 0, 1, 1], [], []>} : vector<2x32xf32>, vector<32x21xf32>, vector<2x21xf32> -> vector<2x21xf32>
      %c0_81 = arith.constant 0 : index
      %c0_82 = arith.constant 0 : index
      %173 = vector.load %arg18[%c0_81, %c0_82] : memref<1x21xf32, #tpu.memory_space<vmem>>, vector<1x21xf32>
      %174 = vector.broadcast %173 : vector<1x21xf32> to vector<2x21xf32>
      %175 = arith.addf %172, %174 : vector<2x21xf32>
      %c0_83 = arith.constant 0 : index
      %c0_84 = arith.constant 0 : index
      %176 = vector.load %arg19[%c0_83, %c0_84] : memref<2x21xf32, #tpu.memory_space<vmem>>, vector<2x21xf32>
      tpu.vector_store %arg19[%c0_83, %c0_84], %175 {strides = array<i32>} : memref<2x21xf32, #tpu.memory_space<vmem>>, vector<2x21xf32>,
    } else {
    }
    return
  }
  func.func @transform_0(%arg0: i32) -> (i32, i32) {
    %c0_i32 = arith.constant 0 : i32
    %c0_i32_0 = arith.constant 0 : i32
    %c0_i32_1 = arith.constant 0 : i32
    return %c0_i32, %c0_i32_0 : i32, i32
  }
  func.func @transform_1(%arg0: i32) -> (i32, i32) {
    %c0_i32 = arith.constant 0 : i32
    %c0_i32_0 = arith.constant 0 : i32
    %c0_i32_1 = arith.constant 0 : i32
    return %c0_i32, %c0_i32_0 : i32, i32
  }
  func.func @transform_2(%arg0: i32) -> (i32, i32, i32) {
    %c0_i32 = arith.constant 0 : i32
    %c0_i32_0 = arith.constant 0 : i32
    %c0_i32_1 = arith.constant 0 : i32
    return %arg0, %c0_i32, %c0_i32_0 : i32, i32, i32
  }
  func.func @transform_3(%arg0: i32) -> (i32, i32, i32) {
    %c0_i32 = arith.constant 0 : i32
    %c0_i32_0 = arith.constant 0 : i32
    %c0_i32_1 = arith.constant 0 : i32
    return %arg0, %c0_i32, %c0_i32_0 : i32, i32, i32
  }
  func.func @transform_4(%arg0: i32) -> (i32, i32, i32) {
    %c0_i32 = arith.constant 0 : i32
    %c0_i32_0 = arith.constant 0 : i32
    %c0_i32_1 = arith.constant 0 : i32
    return %arg0, %c0_i32, %c0_i32_0 : i32, i32, i32
  }
  func.func @transform_5(%arg0: i32) -> (i32, i32, i32) {
    %c0_i32 = arith.constant 0 : i32
    %c0_i32_0 = arith.constant 0 : i32
    %c0_i32_1 = arith.constant 0 : i32
    return %arg0, %c0_i32, %c0_i32_0 : i32, i32, i32
  }
  func.func @transform_6(%arg0: i32) -> (i32, i32, i32) {
    %c0_i32 = arith.constant 0 : i32
    %c0_i32_0 = arith.constant 0 : i32
    %c0_i32_1 = arith.constant 0 : i32
    return %arg0, %c0_i32, %c0_i32_0 : i32, i32, i32
  }
  func.func @transform_7(%arg0: i32) -> (i32, i32, i32) {
    %c0_i32 = arith.constant 0 : i32
    %c0_i32_0 = arith.constant 0 : i32
    %c0_i32_1 = arith.constant 0 : i32
    return %arg0, %c0_i32, %c0_i32_0 : i32, i32, i32
  }
  func.func @transform_8(%arg0: i32) -> (i32, i32, i32) {
    %c0_i32 = arith.constant 0 : i32
    %c0_i32_0 = arith.constant 0 : i32
    %c0_i32_1 = arith.constant 0 : i32
    return %arg0, %c0_i32, %c0_i32_0 : i32, i32, i32
  }
  func.func @transform_9(%arg0: i32) -> (i32, i32, i32) {
    %c0_i32 = arith.constant 0 : i32
    %c0_i32_0 = arith.constant 0 : i32
    %c0_i32_1 = arith.constant 0 : i32
    return %arg0, %c0_i32, %c0_i32_0 : i32, i32, i32
  }
  func.func @transform_10(%arg0: i32) -> (i32, i32, i32) {
    %c0_i32 = arith.constant 0 : i32
    %c0_i32_0 = arith.constant 0 : i32
    %c0_i32_1 = arith.constant 0 : i32
    return %arg0, %c0_i32, %c0_i32_0 : i32, i32, i32
  }
  func.func @transform_11(%arg0: i32) -> (i32, i32, i32) {
    %c0_i32 = arith.constant 0 : i32
    %c0_i32_0 = arith.constant 0 : i32
    %c0_i32_1 = arith.constant 0 : i32
    return %arg0, %c0_i32, %c0_i32_0 : i32, i32, i32
  }
  func.func @transform_12(%arg0: i32) -> (i32, i32, i32) {
    %c0_i32 = arith.constant 0 : i32
    %c0_i32_0 = arith.constant 0 : i32
    %c0_i32_1 = arith.constant 0 : i32
    return %arg0, %c0_i32, %c0_i32_0 : i32, i32, i32
  }
  func.func @transform_13(%arg0: i32) -> (i32, i32, i32) {
    %c0_i32 = arith.constant 0 : i32
    %c0_i32_0 = arith.constant 0 : i32
    %c0_i32_1 = arith.constant 0 : i32
    return %arg0, %c0_i32, %c0_i32_0 : i32, i32, i32
  }
  func.func @transform_14(%arg0: i32) -> (i32, i32) {
    %c0_i32 = arith.constant 0 : i32
    %c0_i32_0 = arith.constant 0 : i32
    %c0_i32_1 = arith.constant 0 : i32
    return %c0_i32, %c0_i32_0 : i32, i32
  }
  func.func @transform_15(%arg0: i32) -> (i32, i32) {
    %c0_i32 = arith.constant 0 : i32
    %c0_i32_0 = arith.constant 0 : i32
    %c0_i32_1 = arith.constant 0 : i32
    return %c0_i32, %c0_i32_0 : i32, i32
  }
  func.func @transform_16(%arg0: i32) -> (i32, i32) {
    %c0_i32 = arith.constant 0 : i32
    %c0_i32_0 = arith.constant 0 : i32
    %c0_i32_1 = arith.constant 0 : i32
    return %c0_i32, %c0_i32_0 : i32, i32
  }
  func.func @transform_17(%arg0: i32) -> (i32, i32) {
    %c0_i32 = arith.constant 0 : i32
    %c0_i32_0 = arith.constant 0 : i32
    %c0_i32_1 = arith.constant 0 : i32
    return %c0_i32, %c0_i32_0 : i32, i32
  }
  func.func @transform_18(%arg0: i32) -> (i32, i32) {
    %c0_i32 = arith.constant 0 : i32
    %c0_i32_0 = arith.constant 0 : i32
    %c0_i32_1 = arith.constant 0 : i32
    return %c0_i32, %c0_i32_0 : i32, i32
  }
}

</mosaic_0001>

<llo_original>
// kernel: transformer_classifier_forward.1
$region0: #{transformer_classifier_forward.1}
  #allocation0 [shape = 'u32[]', space=smem, size = 0x4, offset = 0x4, fixed_abs, tag = 'smem constant byte address 0x4 - core index']
  #allocation1 [shape = 'u32[144,128]{1,0:T(1,128)}', space=vmem, size = 0x12000, scoped, tag = 'internal scratch']
  #allocation2 [shape = 'f32[32,192]{1,0:T(8,128)}', space=vmem, size = 0x8000, scoped, tag = 'scratch operand']
  %s0 = inlined_call_operand.vmem [shape: f32[32,192], index: 0, kind: input, shape index: {}]
  %s1 = inlined_call_operand.vmem [shape: f32[16,192], index: 1, kind: input, shape index: {}]
  %s2 = inlined_call_operand.vmem [shape: bf16[2,192,768], index: 2, kind: input, shape index: {}]
  %s3 = inlined_call_operand.vmem [shape: f32[2,1,768], index: 3, kind: input, shape index: {}]
  %s4 = inlined_call_operand.vmem [shape: bf16[2,256,192], index: 4, kind: input, shape index: {}]
  %s5 = inlined_call_operand.vmem [shape: f32[2,1,192], index: 5, kind: input, shape index: {}]
  %s6 = inlined_call_operand.vmem [shape: f32[2,1,192], index: 6, kind: input, shape index: {}]
  %s7 = inlined_call_operand.vmem [shape: f32[2,1,192], index: 7, kind: input, shape index: {}]
  %s8 = inlined_call_operand.vmem [shape: bf16[2,192,768], index: 8, kind: input, shape index: {}]
  %s9 = inlined_call_operand.vmem [shape: f32[2,1,768], index: 9, kind: input, shape index: {}]
  %s10 = inlined_call_operand.vmem [shape: bf16[2,768,192], index: 10, kind: input, shape index: {}]
  %s11 = inlined_call_operand.vmem [shape: f32[2,1,192], index: 11, kind: input, shape index: {}]
  %s12 = inlined_call_operand.vmem [shape: f32[2,1,192], index: 12, kind: input, shape index: {}]
  %s13 = inlined_call_operand.vmem [shape: f32[2,1,192], index: 13, kind: input, shape index: {}]
  %s14 = inlined_call_operand.vmem [shape: bf16[192,336], index: 14, kind: input, shape index: {}]
  %s15 = inlined_call_operand.vmem [shape: f32[336,21], index: 15, kind: input, shape index: {}]
  %s16 = inlined_call_operand.vmem [shape: f32[16,336], index: 16, kind: input, shape index: {}]
  %s17 = inlined_call_operand.vmem [shape: f32[1,21], index: 17, kind: input, shape index: {}]
  %s18 = inlined_call_operand.hbm [shape: f32[2,21], index: 18, kind: output, shape index: {}]
  %s19 = sld [smem:[#allocation0]]
  $region113: #{transformer_classifier_forward.1} parent=0
    _
  %s21 = ssub.s32 1, %s19
  %s22 = scalar_select 0, %s21, %s19
  $region1: #{transformer_classifier_forward.1} parent=0
    #allocation3 [shape = 'u8[1024]{0}', space=vmem, size = 0x400, scoped, tag = 'output window, operand 0, single buffered']
    #allocation4 [shape = 's32[2]{0}', space=sflag, size = 0x8, scoped, tag = 'scoped memory for transformer_classifier_forward.1']
    %23 = vsyncpa [#allocation4], 0
    loop: start=0, step=1, limit=4
    $region2: #{transformer_classifier_forward.1} parent=1 // loop_pre_header
      _
    $region3: #{transformer_classifier_forward.1} parent=1 // loop_header
      %s25 = sphi 0, %s29
      %p26 = scmp.ge.s32.totalorder %s25, 4
      %s33 = sphi 0, %s33
      %s35 = sphi 0, %s33
      %s36 = sphi 0, %s35
      %s50 = sphi 0, %s36
      %s54 = sphi 0, %s54
      %s56 = sphi 0, %s54
      %s57 = sphi 0, %s56
      %s71 = sphi 0, %s57
      %s77 = sphi 0, %s79
      %s80 = sphi 0, %s77
      %s81 = sphi 0, %s80
      %s97 = sphi 0, %s81
      %s103 = sphi 0, %s105
      %s106 = sphi 0, %s103
      %s107 = sphi 0, %s106
      %s123 = sphi 0, %s107
      %s129 = sphi 0, %s131
      %s132 = sphi 0, %s129
      %s133 = sphi 0, %s132
      %s149 = sphi 0, %s133
      %s155 = sphi 0, %s157
      %s158 = sphi 0, %s155
      %s159 = sphi 0, %s158
      %s175 = sphi 0, %s159
      %s181 = sphi 0, %s183
      %s184 = sphi 0, %s181
      %s185 = sphi 0, %s184
      %s201 = sphi 0, %s185
      %s207 = sphi 0, %s209
      %s210 = sphi 0, %s207
      %s211 = sphi 0, %s210
      %s227 = sphi 0, %s211
      %s233 = sphi 0, %s235
      %s236 = sphi 0, %s233
      %s237 = sphi 0, %s236
      %s253 = sphi 0, %s237
      %s259 = sphi 0, %s261
      %s262 = sphi 0, %s259
      %s263 = sphi 0, %s262
      %s279 = sphi 0, %s263
      %s285 = sphi 0, %s287
      %s288 = sphi 0, %s285
      %s289 = sphi 0, %s288
      %s305 = sphi 0, %s289
      %s311 = sphi 0, %s313
      %s314 = sphi 0, %s311
      %s315 = sphi 0, %s314
      %s331 = sphi 0, %s315
      %s337 = sphi 0, %s339
      %s340 = sphi 0, %s337
      %s341 = sphi 0, %s340
      %s357 = sphi 0, %s341
      %s363 = sphi 0, %s365
      %s366 = sphi 0, %s363
      %s367 = sphi 0, %s366
      %s383 = sphi 0, %s367
      %s387 = sphi 0, %s387
      %s389 = sphi 0, %s387
      %s390 = sphi 0, %s389
      %s404 = sphi 0, %s390
      %s408 = sphi 0, %s408
      %s410 = sphi 0, %s408
      %s411 = sphi 0, %s410
      %s425 = sphi 0, %s411
      %s429 = sphi 0, %s429
      %s431 = sphi 0, %s429
      %s432 = sphi 0, %s431
      %s446 = sphi 0, %s432
      %s450 = sphi 0, %s450
      %s452 = sphi 0, %s450
      %s453 = sphi 0, %s452
      %s467 = sphi 0, %s453
      %s471 = sphi 0, %s471
      %s473 = sphi 0, %s471
      %s474 = sphi 0, %s473
      %s488 = sphi 0, %s474
    $region4: #{transformer_classifier_forward.1} parent=1 // loop_header_branch
      %28 = sbr.rel (%p26) target = $region8
    $region5: #{transformer_classifier_forward.1} parent=1 // loop_body
      %s30 = ssub.s32 %s25, 1
      %s31 = ssub.s32 %s25, 2
      %s32 = sadd.s32 %s25, 1
      %s34 = sadd.s32 %s33, 1
      %p37 = scmp.eq.s32.totalorder %s25, 1
      %p38 = scmp.ne.s32.totalorder %s33, %s35
      %p39 = scmp.eq.s32.totalorder %s25, 0
      %p40 = por %p38, %p39
      %p41 = scmp.ne.s32.totalorder %s33, %s35
      %p42 = scmp.eq.s32.totalorder %s30, 1
      %p43 = por %p41, %p42
      %p44 = scmp.ne.s32.totalorder %s35, %s36
      %p45 = scmp.eq.s32.totalorder %s30, 0
      %p46 = por %p44, %p45
      %p47 = scmp.ne.s32.totalorder %s35, %s36
      %p48 = scmp.eq.s32.totalorder %s31, 1
      %p49 = por %p47, %p48
      %p51 = scmp.ne.s32.totalorder %s36, %s50
      %p52 = scmp.eq.s32.totalorder %s31, 0
      %p53 = por %p51, %p52
      %s55 = sadd.s32 %s54, 1
      %p58 = scmp.eq.s32.totalorder %s25, 1
      %p59 = scmp.ne.s32.totalorder %s54, %s56
      %p60 = scmp.eq.s32.totalorder %s25, 0
      %p61 = por %p59, %p60
      %p62 = scmp.ne.s32.totalorder %s54, %s56
      %p63 = scmp.eq.s32.totalorder %s30, 1
      %p64 = por %p62, %p63
      %p65 = scmp.ne.s32.totalorder %s56, %s57
      %p66 = scmp.eq.s32.totalorder %s30, 0
      %p67 = por %p65, %p66
      %p68 = scmp.ne.s32.totalorder %s56, %s57
      %p69 = scmp.eq.s32.totalorder %s31, 1
      %p70 = por %p68, %p69
      %p72 = scmp.ne.s32.totalorder %s57, %s71
      %p73 = scmp.eq.s32.totalorder %s31, 0
      %p74 = por %p72, %p73
      %s75 = ssub.s32 %s25, %s32
      %p76 = scmp.eq.s32.totalorder %s75, 0
      %s78 = sadd.s32 %s77, 1
      %s79 = scalar_select %p76, %s77, %s78
      %p82 = pneg %p76
      %p83 = scmp.eq.s32.totalorder %s25, 1
      %p84 = por %p82, %p83
      %p85 = scmp.ne.s32.totalorder %s77, %s80
      %p86 = scmp.eq.s32.totalorder %s25, 0
      %p87 = por %p85, %p86
      %p88 = scmp.ne.s32.totalorder %s77, %s80
      %p89 = scmp.eq.s32.totalorder %s30, 1
      %p90 = por %p88, %p89
      %p91 = scmp.ne.s32.totalorder %s80, %s81
      %p92 = scmp.eq.s32.totalorder %s30, 0
      %p93 = por %p91, %p92
      %p94 = scmp.ne.s32.totalorder %s80, %s81
      %p95 = scmp.eq.s32.totalorder %s31, 1
      %p96 = por %p94, %p95
      %p98 = scmp.ne.s32.totalorder %s81, %s97
      %p99 = scmp.eq.s32.totalorder %s31, 0
      %p100 = por %p98, %p99
      %s101 = ssub.s32 %s25, %s32
      %p102 = scmp.eq.s32.totalorder %s101, 0
      %s104 = sadd.s32 %s103, 1
      %s105 = scalar_select %p102, %s103, %s104
      %p108 = pneg %p102
      %p109 = scmp.eq.s32.totalorder %s25, 1
      %p110 = por %p108, %p109
      %p111 = scmp.ne.s32.totalorder %s103, %s106
      %p112 = scmp.eq.s32.totalorder %s25, 0
      %p113 = por %p111, %p112
      %p114 = scmp.ne.s32.totalorder %s103, %s106
      %p115 = scmp.eq.s32.totalorder %s30, 1
      %p116 = por %p114, %p115
      %p117 = scmp.ne.s32.totalorder %s106, %s107
      %p118 = scmp.eq.s32.totalorder %s30, 0
      %p119 = por %p117, %p118
      %p120 = scmp.ne.s32.totalorder %s106, %s107
      %p121 = scmp.eq.s32.totalorder %s31, 1
      %p122 = por %p120, %p121
      %p124 = scmp.ne.s32.totalorder %s107, %s123
      %p125 = scmp.eq.s32.totalorder %s31, 0
      %p126 = por %p124, %p125
      %s127 = ssub.s32 %s25, %s32
      %p128 = scmp.eq.s32.totalorder %s127, 0
      %s130 = sadd.s32 %s129, 1
      %s131 = scalar_select %p128, %s129, %s130
      %p134 = pneg %p128
      %p135 = scmp.eq.s32.totalorder %s25, 1
      %p136 = por %p134, %p135
      %p137 = scmp.ne.s32.totalorder %s129, %s132
      %p138 = scmp.eq.s32.totalorder %s25, 0
      %p139 = por %p137, %p138
      %p140 = scmp.ne.s32.totalorder %s129, %s132
      %p141 = scmp.eq.s32.totalorder %s30, 1
      %p142 = por %p140, %p141
      %p143 = scmp.ne.s32.totalorder %s132, %s133
      %p144 = scmp.eq.s32.totalorder %s30, 0
      %p145 = por %p143, %p144
      %p146 = scmp.ne.s32.totalorder %s132, %s133
      %p147 = scmp.eq.s32.totalorder %s31, 1
      %p148 = por %p146, %p147
      %p150 = scmp.ne.s32.totalorder %s133, %s149
      %p151 = scmp.eq.s32.totalorder %s31, 0
      %p152 = por %p150, %p151
      %s153 = ssub.s32 %s25, %s32
      %p154 = scmp.eq.s32.totalorder %s153, 0
      %s156 = sadd.s32 %s155, 1
      %s157 = scalar_select %p154, %s155, %s156
      %p160 = pneg %p154
      %p161 = scmp.eq.s32.totalorder %s25, 1
      %p162 = por %p160, %p161
      %p163 = scmp.ne.s32.totalorder %s155, %s158
      %p164 = scmp.eq.s32.totalorder %s25, 0
      %p165 = por %p163, %p164
      %p166 = scmp.ne.s32.totalorder %s155, %s158
      %p167 = scmp.eq.s32.totalorder %s30, 1
      %p168 = por %p166, %p167
      %p169 = scmp.ne.s32.totalorder %s158, %s159
      %p170 = scmp.eq.s32.totalorder %s30, 0
      %p171 = por %p169, %p170
      %p172 = scmp.ne.s32.totalorder %s158, %s159
      %p173 = scmp.eq.s32.totalorder %s31, 1
      %p174 = por %p172, %p173
      %p176 = scmp.ne.s32.totalorder %s159, %s175
      %p177 = scmp.eq.s32.totalorder %s31, 0
      %p178 = por %p176, %p177
      %s179 = ssub.s32 %s25, %s32
      %p180 = scmp.eq.s32.totalorder %s179, 0
      %s182 = sadd.s32 %s181, 1
      %s183 = scalar_select %p180, %s181, %s182
      %p186 = pneg %p180
      %p187 = scmp.eq.s32.totalorder %s25, 1
      %p188 = por %p186, %p187
      %p189 = scmp.ne.s32.totalorder %s181, %s184
      %p190 = scmp.eq.s32.totalorder %s25, 0
      %p191 = por %p189, %p190
      %p192 = scmp.ne.s32.totalorder %s181, %s184
      %p193 = scmp.eq.s32.totalorder %s30, 1
      %p194 = por %p192, %p193
      %p195 = scmp.ne.s32.totalorder %s184, %s185
      %p196 = scmp.eq.s32.totalorder %s30, 0
      %p197 = por %p195, %p196
      %p198 = scmp.ne.s32.totalorder %s184, %s185
      %p199 = scmp.eq.s32.totalorder %s31, 1
      %p200 = por %p198, %p199
      %p202 = scmp.ne.s32.totalorder %s185, %s201
      %p203 = scmp.eq.s32.totalorder %s31, 0
      %p204 = por %p202, %p203
      %s205 = ssub.s32 %s25, %s32
      %p206 = scmp.eq.s32.totalorder %s205, 0
      %s208 = sadd.s32 %s207, 1
      %s209 = scalar_select %p206, %s207, %s208
      %p212 = pneg %p206
      %p213 = scmp.eq.s32.totalorder %s25, 1
      %p214 = por %p212, %p213
      %p215 = scmp.ne.s32.totalorder %s207, %s210
      %p216 = scmp.eq.s32.totalorder %s25, 0
      %p217 = por %p215, %p216
      %p218 = scmp.ne.s32.totalorder %s207, %s210
      %p219 = scmp.eq.s32.totalorder %s30, 1
      %p220 = por %p218, %p219
      %p221 = scmp.ne.s32.totalorder %s210, %s211
      %p222 = scmp.eq.s32.totalorder %s30, 0
      %p223 = por %p221, %p222
      %p224 = scmp.ne.s32.totalorder %s210, %s211
      %p225 = scmp.eq.s32.totalorder %s31, 1
      %p226 = por %p224, %p225
      %p228 = scmp.ne.s32.totalorder %s211, %s227
      %p229 = scmp.eq.s32.totalorder %s31, 0
      %p230 = por %p228, %p229
      %s231 = ssub.s32 %s25, %s32
      %p232 = scmp.eq.s32.totalorder %s231, 0
      %s234 = sadd.s32 %s233, 1
      %s235 = scalar_select %p232, %s233, %s234
      %p238 = pneg %p232
      %p239 = scmp.eq.s32.totalorder %s25, 1
      %p240 = por %p238, %p239
      %p241 = scmp.ne.s32.totalorder %s233, %s236
      %p242 = scmp.eq.s32.totalorder %s25, 0
      %p243 = por %p241, %p242
      %p244 = scmp.ne.s32.totalorder %s233, %s236
      %p245 = scmp.eq.s32.totalorder %s30, 1
      %p246 = por %p244, %p245
      %p247 = scmp.ne.s32.totalorder %s236, %s237
      %p248 = scmp.eq.s32.totalorder %s30, 0
      %p249 = por %p247, %p248
      %p250 = scmp.ne.s32.totalorder %s236, %s237
      %p251 = scmp.eq.s32.totalorder %s31, 1
      %p252 = por %p250, %p251
      %p254 = scmp.ne.s32.totalorder %s237, %s253
      %p255 = scmp.eq.s32.totalorder %s31, 0
      %p256 = por %p254, %p255
      %s257 = ssub.s32 %s25, %s32
      %p258 = scmp.eq.s32.totalorder %s257, 0
      %s260 = sadd.s32 %s259, 1
      %s261 = scalar_select %p258, %s259, %s260
      %p264 = pneg %p258
      %p265 = scmp.eq.s32.totalorder %s25, 1
      %p266 = por %p264, %p265
      %p267 = scmp.ne.s32.totalorder %s259, %s262
      %p268 = scmp.eq.s32.totalorder %s25, 0
      %p269 = por %p267, %p268
      %p270 = scmp.ne.s32.totalorder %s259, %s262
      %p271 = scmp.eq.s32.totalorder %s30, 1
      %p272 = por %p270, %p271
      %p273 = scmp.ne.s32.totalorder %s262, %s263
      %p274 = scmp.eq.s32.totalorder %s30, 0
      %p275 = por %p273, %p274
      %p276 = scmp.ne.s32.totalorder %s262, %s263
      %p277 = scmp.eq.s32.totalorder %s31, 1
      %p278 = por %p276, %p277
      %p280 = scmp.ne.s32.totalorder %s263, %s279
      %p281 = scmp.eq.s32.totalorder %s31, 0
      %p282 = por %p280, %p281
      %s283 = ssub.s32 %s25, %s32
      %p284 = scmp.eq.s32.totalorder %s283, 0
      %s286 = sadd.s32 %s285, 1
      %s287 = scalar_select %p284, %s285, %s286
      %p290 = pneg %p284
      %p291 = scmp.eq.s32.totalorder %s25, 1
      %p292 = por %p290, %p291
      %p293 = scmp.ne.s32.totalorder %s285, %s288
      %p294 = scmp.eq.s32.totalorder %s25, 0
      %p295 = por %p293, %p294
      %p296 = scmp.ne.s32.totalorder %s285, %s288
      %p297 = scmp.eq.s32.totalorder %s30, 1
      %p298 = por %p296, %p297
      %p299 = scmp.ne.s32.totalorder %s288, %s289
      %p300 = scmp.eq.s32.totalorder %s30, 0
      %p301 = por %p299, %p300
      %p302 = scmp.ne.s32.totalorder %s288, %s289
      %p303 = scmp.eq.s32.totalorder %s31, 1
      %p304 = por %p302, %p303
      %p306 = scmp.ne.s32.totalorder %s289, %s305
      %p307 = scmp.eq.s32.totalorder %s31, 0
      %p308 = por %p306, %p307
      %s309 = ssub.s32 %s25, %s32
      %p310 = scmp.eq.s32.totalorder %s309, 0
      %s312 = sadd.s32 %s311, 1
      %s313 = scalar_select %p310, %s311, %s312
      %p316 = pneg %p310
      %p317 = scmp.eq.s32.totalorder %s25, 1
      %p318 = por %p316, %p317
      %p319 = scmp.ne.s32.totalorder %s311, %s314
      %p320 = scmp.eq.s32.totalorder %s25, 0
      %p321 = por %p319, %p320
      %p322 = scmp.ne.s32.totalorder %s311, %s314
      %p323 = scmp.eq.s32.totalorder %s30, 1
      %p324 = por %p322, %p323
      %p325 = scmp.ne.s32.totalorder %s314, %s315
      %p326 = scmp.eq.s32.totalorder %s30, 0
      %p327 = por %p325, %p326
      %p328 = scmp.ne.s32.totalorder %s314, %s315
      %p329 = scmp.eq.s32.totalorder %s31, 1
      %p330 = por %p328, %p329
      %p332 = scmp.ne.s32.totalorder %s315, %s331
      %p333 = scmp.eq.s32.totalorder %s31, 0
      %p334 = por %p332, %p333
      %s335 = ssub.s32 %s25, %s32
      %p336 = scmp.eq.s32.totalorder %s335, 0
      %s338 = sadd.s32 %s337, 1
      %s339 = scalar_select %p336, %s337, %s338
      %p342 = pneg %p336
      %p343 = scmp.eq.s32.totalorder %s25, 1
      %p344 = por %p342, %p343
      %p345 = scmp.ne.s32.totalorder %s337, %s340
      %p346 = scmp.eq.s32.totalorder %s25, 0
      %p347 = por %p345, %p346
      %p348 = scmp.ne.s32.totalorder %s337, %s340
      %p349 = scmp.eq.s32.totalorder %s30, 1
      %p350 = por %p348, %p349
      %p351 = scmp.ne.s32.totalorder %s340, %s341
      %p352 = scmp.eq.s32.totalorder %s30, 0
      %p353 = por %p351, %p352
      %p354 = scmp.ne.s32.totalorder %s340, %s341
      %p355 = scmp.eq.s32.totalorder %s31, 1
      %p356 = por %p354, %p355
      %p358 = scmp.ne.s32.totalorder %s341, %s357
      %p359 = scmp.eq.s32.totalorder %s31, 0
      %p360 = por %p358, %p359
      %s361 = ssub.s32 %s25, %s32
      %p362 = scmp.eq.s32.totalorder %s361, 0
      %s364 = sadd.s32 %s363, 1
      %s365 = scalar_select %p362, %s363, %s364
      %p368 = pneg %p362
      %p369 = scmp.eq.s32.totalorder %s25, 1
      %p370 = por %p368, %p369
      %p371 = scmp.ne.s32.totalorder %s363, %s366
      %p372 = scmp.eq.s32.totalorder %s25, 0
      %p373 = por %p371, %p372
      %p374 = scmp.ne.s32.totalorder %s363, %s366
      %p375 = scmp.eq.s32.totalorder %s30, 1
      %p376 = por %p374, %p375
      %p377 = scmp.ne.s32.totalorder %s366, %s367
      %p378 = scmp.eq.s32.totalorder %s30, 0
      %p379 = por %p377, %p378
      %p380 = scmp.ne.s32.totalorder %s366, %s367
      %p381 = scmp.eq.s32.totalorder %s31, 1
      %p382 = por %p380, %p381
      %p384 = scmp.ne.s32.totalorder %s367, %s383
      %p385 = scmp.eq.s32.totalorder %s31, 0
      %p386 = por %p384, %p385
      %s388 = sadd.s32 %s387, 1
      %p391 = scmp.eq.s32.totalorder %s25, 1
      %p392 = scmp.ne.s32.totalorder %s387, %s389
      %p393 = scmp.eq.s32.totalorder %s25, 0
      %p394 = por %p392, %p393
      %p395 = scmp.ne.s32.totalorder %s387, %s389
      %p396 = scmp.eq.s32.totalorder %s30, 1
      %p397 = por %p395, %p396
      %p398 = scmp.ne.s32.totalorder %s389, %s390
      %p399 = scmp.eq.s32.totalorder %s30, 0
      %p400 = por %p398, %p399
      %p401 = scmp.ne.s32.totalorder %s389, %s390
      %p402 = scmp.eq.s32.totalorder %s31, 1
      %p403 = por %p401, %p402
      %p405 = scmp.ne.s32.totalorder %s390, %s404
      %p406 = scmp.eq.s32.totalorder %s31, 0
      %p407 = por %p405, %p406
      %s409 = sadd.s32 %s408, 1
      %p412 = scmp.eq.s32.totalorder %s25, 1
      %p413 = scmp.ne.s32.totalorder %s408, %s410
      %p414 = scmp.eq.s32.totalorder %s25, 0
      %p415 = por %p413, %p414
      %p416 = scmp.ne.s32.totalorder %s408, %s410
      %p417 = scmp.eq.s32.totalorder %s30, 1
      %p418 = por %p416, %p417
      %p419 = scmp.ne.s32.totalorder %s410, %s411
      %p420 = scmp.eq.s32.totalorder %s30, 0
      %p421 = por %p419, %p420
      %p422 = scmp.ne.s32.totalorder %s410, %s411
      %p423 = scmp.eq.s32.totalorder %s31, 1
      %p424 = por %p422, %p423
      %p426 = scmp.ne.s32.totalorder %s411, %s425
      %p427 = scmp.eq.s32.totalorder %s31, 0
      %p428 = por %p426, %p427
      %s430 = sadd.s32 %s429, 1
      %p433 = scmp.eq.s32.totalorder %s25, 1
      %p434 = scmp.ne.s32.totalorder %s429, %s431
      %p435 = scmp.eq.s32.totalorder %s25, 0
      %p436 = por %p434, %p435
      %p437 = scmp.ne.s32.totalorder %s429, %s431
      %p438 = scmp.eq.s32.totalorder %s30, 1
      %p439 = por %p437, %p438
      %p440 = scmp.ne.s32.totalorder %s431, %s432
      %p441 = scmp.eq.s32.totalorder %s30, 0
      %p442 = por %p440, %p441
      %p443 = scmp.ne.s32.totalorder %s431, %s432
      %p444 = scmp.eq.s32.totalorder %s31, 1
      %p445 = por %p443, %p444
      %p447 = scmp.ne.s32.totalorder %s432, %s446
      %p448 = scmp.eq.s32.totalorder %s31, 0
      %p449 = por %p447, %p448
      %s451 = sadd.s32 %s450, 1
      %p454 = scmp.eq.s32.totalorder %s25, 1
      %p455 = scmp.ne.s32.totalorder %s450, %s452
      %p456 = scmp.eq.s32.totalorder %s25, 0
      %p457 = por %p455, %p456
      %p458 = scmp.ne.s32.totalorder %s450, %s452
      %p459 = scmp.eq.s32.totalorder %s30, 1
      %p460 = por %p458, %p459
      %p461 = scmp.ne.s32.totalorder %s452, %s453
      %p462 = scmp.eq.s32.totalorder %s30, 0
      %p463 = por %p461, %p462
      %p464 = scmp.ne.s32.totalorder %s452, %s453
      %p465 = scmp.eq.s32.totalorder %s31, 1
      %p466 = por %p464, %p465
      %p468 = scmp.ne.s32.totalorder %s453, %s467
      %p469 = scmp.eq.s32.totalorder %s31, 0
      %p470 = por %p468, %p469
      %s472 = sadd.s32 %s471, 1
      %p475 = scmp.eq.s32.totalorder %s25, 1
      %p476 = scmp.ne.s32.totalorder %s471, %s473
      %p477 = scmp.eq.s32.totalorder %s25, 0
      %p478 = por %p476, %p477
      %p479 = scmp.ne.s32.totalorder %s471, %s473
      %p480 = scmp.eq.s32.totalorder %s30, 1
      %p481 = por %p479, %p480
      %p482 = scmp.ne.s32.totalorder %s473, %s474
      %p483 = scmp.eq.s32.totalorder %s30, 0
      %p484 = por %p482, %p483
      %p485 = scmp.ne.s32.totalorder %s473, %s474
      %p486 = scmp.eq.s32.totalorder %s31, 1
      %p487 = por %p485, %p486
      %p489 = scmp.ne.s32.totalorder %s474, %s488
      %p490 = scmp.eq.s32.totalorder %s31, 0
      %p491 = por %p489, %p490
      %p492 = scmp.le.s32.totalorder 1, %s25
      %p493 = scmp.lt.s32.totalorder %s25, 3
      %p494 = pnand %p492, %p493
      %p495 = pneg %p494
      // Predicated region
      $region9: #{transformer_classifier_forward.1} parent=5 // pred_check
        _
      $region10: #{transformer_classifier_forward.1} parent=5 // pred_check_branch
        %497 = sbr.rel (%p494) target = $region12
      $region11: #{transformer_classifier_forward.1} parent=5 // pred_region
        %s498 = ssub.s32 %s25, 1
        // Predicated region
        $region13: #{transformer_classifier_forward.1} parent=11 // pred_check
          %p499 = pneg %p46
        $region14: #{transformer_classifier_forward.1} parent=11 // pred_check_branch
          %501 = sbr.rel (%p499) target = $region16
        $region15: #{transformer_classifier_forward.1} parent=11 // pred_region
          _
        $region16: #{transformer_classifier_forward.1} parent=11 // pred_fallthru
          _
        // Predicated region
        $region17: #{transformer_classifier_forward.1} parent=11 // pred_check
          %p502 = pneg %p67
        $region18: #{transformer_classifier_forward.1} parent=11 // pred_check_branch
          %504 = sbr.rel (%p502) target = $region20
        $region19: #{transformer_classifier_forward.1} parent=11 // pred_region
          _
        $region20: #{transformer_classifier_forward.1} parent=11 // pred_fallthru
          _
        // Predicated region
        $region21: #{transformer_classifier_forward.1} parent=11 // pred_check
          %p505 = pneg %p400
        $region22: #{transformer_classifier_forward.1} parent=11 // pred_check_branch
          %507 = sbr.rel (%p505) target = $region24
        $region23: #{transformer_classifier_forward.1} parent=11 // pred_region
          _
        $region24: #{transformer_classifier_forward.1} parent=11 // pred_fallthru
          _
        // Predicated region
        $region25: #{transformer_classifier_forward.1} parent=11 // pred_check
          %p508 = pneg %p421
        $region26: #{transformer_classifier_forward.1} parent=11 // pred_check_branch
          %510 = sbr.rel (%p508) target = $region28
        $region27: #{transformer_classifier_forward.1} parent=11 // pred_region
          _
        $region28: #{transformer_classifier_forward.1} parent=11 // pred_fallthru
          _
        // Predicated region
        $region29: #{transformer_classifier_forward.1} parent=11 // pred_check
          %p511 = pneg %p442
        $region30: #{transformer_classifier_forward.1} parent=11 // pred_check_branch
          %513 = sbr.rel (%p511) target = $region32
        $region31: #{transformer_classifier_forward.1} parent=11 // pred_region
          _
        $region32: #{transformer_classifier_forward.1} parent=11 // pred_fallthru
          _
        // Predicated region
        $region33: #{transformer_classifier_forward.1} parent=11 // pred_check
          %p514 = pneg %p463
        $region34: #{transformer_classifier_forward.1} parent=11 // pred_check_branch
          %516 = sbr.rel (%p514) target = $region36
        $region35: #{transformer_classifier_forward.1} parent=11 // pred_region
          _
        $region36: #{transformer_classifier_forward.1} parent=11 // pred_fallthru
          _
      $region12: #{transformer_classifier_forward.1} parent=5 // pred_fallthru
        _
      %p517 = scmp.lt.s32.totalorder %s25, 2
      // Predicated region
      $region37: #{transformer_classifier_forward.1} parent=5 // pred_check
        %p518 = pneg %p517
      $region38: #{transformer_classifier_forward.1} parent=5 // pred_check_branch
        %520 = sbr.rel (%p518) target = $region40
      $region39: #{transformer_classifier_forward.1} parent=5 // pred_region
        // Predicated region
        $region41: #{transformer_classifier_forward.1} parent=39 // pred_check
          %p521 = pneg %p87
        $region42: #{transformer_classifier_forward.1} parent=39 // pred_check_branch
          %523 = sbr.rel (%p521) target = $region44
        $region43: #{transformer_classifier_forward.1} parent=39 // pred_region
          %p524 = scmp.lt.s32.totalorder %s25, 1
          %s525 = scalar_select %p524, %s25, 1
          %s526 = smul.addr %s525, 144
          %s527 = smul.addr %s526, 4
          %s528 = scalar_lea.vmem %s2, %s527
        $region44: #{transformer_classifier_forward.1} parent=39 // pred_fallthru
          _
        // Predicated region
        $region45: #{transformer_classifier_forward.1} parent=39 // pred_check
          %p529 = pneg %p113
        $region46: #{transformer_classifier_forward.1} parent=39 // pred_check_branch
          %531 = sbr.rel (%p529) target = $region48
        $region47: #{transformer_classifier_forward.1} parent=39 // pred_region
          %p532 = scmp.lt.s32.totalorder %s25, 1
          %s533 = scalar_select %p532, %s25, 1
          %s534 = smul.addr %s533, 6
          %s535 = scalar_lea.vmem %s3, %s534
        $region48: #{transformer_classifier_forward.1} parent=39 // pred_fallthru
          _
        // Predicated region
        $region49: #{transformer_classifier_forward.1} parent=39 // pred_check
          %p536 = pneg %p139
        $region50: #{transformer_classifier_forward.1} parent=39 // pred_check_branch
          %538 = sbr.rel (%p536) target = $region52
        $region51: #{transformer_classifier_forward.1} parent=39 // pred_region
          %p539 = scmp.lt.s32.totalorder %s25, 1
          %s540 = scalar_select %p539, %s25, 1
          %s541 = smul.addr %s540, 64
          %s542 = smul.addr %s541, 4
          %s543 = scalar_lea.vmem %s4, %s542
        $region52: #{transformer_classifier_forward.1} parent=39 // pred_fallthru
          _
        // Predicated region
        $region53: #{transformer_classifier_forward.1} parent=39 // pred_check
          %p544 = pneg %p165
        $region54: #{transformer_classifier_forward.1} parent=39 // pred_check_branch
          %546 = sbr.rel (%p544) target = $region56
        $region55: #{transformer_classifier_forward.1} parent=39 // pred_region
          %p547 = scmp.lt.s32.totalorder %s25, 1
          %s548 = scalar_select %p547, %s25, 1
          %s549 = smul.addr %s548, 2
          %s550 = scalar_lea.vmem %s5, %s549
        $region56: #{transformer_classifier_forward.1} parent=39 // pred_fallthru
          _
        // Predicated region
        $region57: #{transformer_classifier_forward.1} parent=39 // pred_check
          %p551 = pneg %p191
        $region58: #{transformer_classifier_forward.1} parent=39 // pred_check_branch
          %553 = sbr.rel (%p551) target = $region60
        $region59: #{transformer_classifier_forward.1} parent=39 // pred_region
          %p554 = scmp.lt.s32.totalorder %s25, 1
          %s555 = scalar_select %p554, %s25, 1
          %s556 = smul.addr %s555, 2
          %s557 = scalar_lea.vmem %s6, %s556
        $region60: #{transformer_classifier_forward.1} parent=39 // pred_fallthru
          _
        // Predicated region
        $region61: #{transformer_classifier_forward.1} parent=39 // pred_check
          %p558 = pneg %p217
        $region62: #{transformer_classifier_forward.1} parent=39 // pred_check_branch
          %560 = sbr.rel (%p558) target = $region64
        $region63: #{transformer_classifier_forward.1} parent=39 // pred_region
          %p561 = scmp.lt.s32.totalorder %s25, 1
          %s562 = scalar_select %p561, %s25, 1
          %s563 = smul.addr %s562, 2
          %s564 = scalar_lea.vmem %s7, %s563
        $region64: #{transformer_classifier_forward.1} parent=39 // pred_fallthru
          _
        // Predicated region
        $region65: #{transformer_classifier_forward.1} parent=39 // pred_check
          %p565 = pneg %p243
        $region66: #{transformer_classifier_forward.1} parent=39 // pred_check_branch
          %567 = sbr.rel (%p565) target = $region68
        $region67: #{transformer_classifier_forward.1} parent=39 // pred_region
          %p568 = scmp.lt.s32.totalorder %s25, 1
          %s569 = scalar_select %p568, %s25, 1
          %s570 = smul.addr %s569, 144
          %s571 = smul.addr %s570, 4
          %s572 = scalar_lea.vmem %s8, %s571
        $region68: #{transformer_classifier_forward.1} parent=39 // pred_fallthru
          _
        // Predicated region
        $region69: #{transformer_classifier_forward.1} parent=39 // pred_check
          %p573 = pneg %p269
        $region70: #{transformer_classifier_forward.1} parent=39 // pred_check_branch
          %575 = sbr.rel (%p573) target = $region72
        $region71: #{transformer_classifier_forward.1} parent=39 // pred_region
          %p576 = scmp.lt.s32.totalorder %s25, 1
          %s577 = scalar_select %p576, %s25, 1
          %s578 = smul.addr %s577, 6
          %s579 = scalar_lea.vmem %s9, %s578
        $region72: #{transformer_classifier_forward.1} parent=39 // pred_fallthru
          _
        // Predicated region
        $region73: #{transformer_classifier_forward.1} parent=39 // pred_check
          %p580 = pneg %p295
        $region74: #{transformer_classifier_forward.1} parent=39 // pred_check_branch
          %582 = sbr.rel (%p580) target = $region76
        $region75: #{transformer_classifier_forward.1} parent=39 // pred_region
          %p583 = scmp.lt.s32.totalorder %s25, 1
          %s584 = scalar_select %p583, %s25, 1
          %s585 = smul.addr %s584, 192
          %s586 = smul.addr %s585, 4
          %s587 = scalar_lea.vmem %s10, %s586
        $region76: #{transformer_classifier_forward.1} parent=39 // pred_fallthru
          _
        // Predicated region
        $region77: #{transformer_classifier_forward.1} parent=39 // pred_check
          %p588 = pneg %p321
        $region78: #{transformer_classifier_forward.1} parent=39 // pred_check_branch
          %590 = sbr.rel (%p588) target = $region80
        $region79: #{transformer_classifier_forward.1} parent=39 // pred_region
          %p591 = scmp.lt.s32.totalorder %s25, 1
          %s592 = scalar_select %p591, %s25, 1
          %s593 = smul.addr %s592, 2
          %s594 = scalar_lea.vmem %s11, %s593
        $region80: #{transformer_classifier_forward.1} parent=39 // pred_fallthru
          _
        // Predicated region
        $region81: #{transformer_classifier_forward.1} parent=39 // pred_check
          %p595 = pneg %p347
        $region82: #{transformer_classifier_forward.1} parent=39 // pred_check_branch
          %597 = sbr.rel (%p595) target = $region84
        $region83: #{transformer_classifier_forward.1} parent=39 // pred_region
          %p598 = scmp.lt.s32.totalorder %s25, 1
          %s599 = scalar_select %p598, %s25, 1
          %s600 = smul.addr %s599, 2
          %s601 = scalar_lea.vmem %s12, %s600
        $region84: #{transformer_classifier_forward.1} parent=39 // pred_fallthru
          _
        // Predicated region
        $region85: #{transformer_classifier_forward.1} parent=39 // pred_check
          %p602 = pneg %p373
        $region86: #{transformer_classifier_forward.1} parent=39 // pred_check_branch
          %604 = sbr.rel (%p602) target = $region88
        $region87: #{transformer_classifier_forward.1} parent=39 // pred_region
          %p605 = scmp.lt.s32.totalorder %s25, 1
          %s606 = scalar_select %p605, %s25, 1
          %s607 = smul.addr %s606, 2
          %s608 = scalar_lea.vmem %s13, %s607
        $region88: #{transformer_classifier_forward.1} parent=39 // pred_fallthru
          _
      $region40: #{transformer_classifier_forward.1} parent=5 // pred_fallthru
        _
      %p609 = scmp.le.s32.totalorder 1, %s25
      %p610 = scmp.lt.s32.totalorder %s25, 3
      %p611 = pnand %p609, %p610
      %p612 = pneg %p611
      // Predicated region
      $region89: #{transformer_classifier_forward.1} parent=5 // pred_check
        _
      $region90: #{transformer_classifier_forward.1} parent=5 // pred_check_branch
        %614 = sbr.rel (%p611) target = $region92
      $region91: #{transformer_classifier_forward.1} parent=5 // pred_region
        %s615 = ssub.s32 %s25, 1
        %p616 = pneg %p46
        %p617 = pneg %p43
        %p618 = pneg %p67
        %p619 = pneg %p64
        %p620 = scmp.lt.s32.totalorder %s30, 1
        %s621 = scalar_select %p620, %s30, 1
        %s622 = smul.addr %s621, 144
        %s623 = smul.addr %s622, 4
        %s624 = scalar_lea.vmem %s2, %s623
        %p625 = pneg %p93
        %p626 = pneg %p90
        %p627 = scmp.lt.s32.totalorder %s30, 1
        %s628 = scalar_select %p627, %s30, 1
        %s629 = smul.addr %s628, 6
        %s630 = scalar_lea.vmem %s3, %s629
        %p631 = pneg %p119
        %p632 = pneg %p116
        %p633 = scmp.lt.s32.totalorder %s30, 1
        %s634 = scalar_select %p633, %s30, 1
        %s635 = smul.addr %s634, 64
        %s636 = smul.addr %s635, 4
        %s637 = scalar_lea.vmem %s4, %s636
        %p638 = pneg %p145
        %p639 = pneg %p142
        %p640 = scmp.lt.s32.totalorder %s30, 1
        %s641 = scalar_select %p640, %s30, 1
        %s642 = smul.addr %s641, 2
        %s643 = scalar_lea.vmem %s5, %s642
        %p644 = pneg %p171
        %p645 = pneg %p168
        %p646 = scmp.lt.s32.totalorder %s30, 1
        %s647 = scalar_select %p646, %s30, 1
        %s648 = smul.addr %s647, 2
        %s649 = scalar_lea.vmem %s6, %s648
        %p650 = pneg %p197
        %p651 = pneg %p194
        %p652 = scmp.lt.s32.totalorder %s30, 1
        %s653 = scalar_select %p652, %s30, 1
        %s654 = smul.addr %s653, 2
        %s655 = scalar_lea.vmem %s7, %s654
        %p656 = pneg %p223
        %p657 = pneg %p220
        %p658 = scmp.lt.s32.totalorder %s30, 1
        %s659 = scalar_select %p658, %s30, 1
        %s660 = smul.addr %s659, 144
        %s661 = smul.addr %s660, 4
        %s662 = scalar_lea.vmem %s8, %s661
        %p663 = pneg %p249
        %p664 = pneg %p246
        %p665 = scmp.lt.s32.totalorder %s30, 1
        %s666 = scalar_select %p665, %s30, 1
        %s667 = smul.addr %s666, 6
        %s668 = scalar_lea.vmem %s9, %s667
        %p669 = pneg %p275
        %p670 = pneg %p272
        %p671 = scmp.lt.s32.totalorder %s30, 1
        %s672 = scalar_select %p671, %s30, 1
        %s673 = smul.addr %s672, 192
        %s674 = smul.addr %s673, 4
        %s675 = scalar_lea.vmem %s10, %s674
        %p676 = pneg %p301
        %p677 = pneg %p298
        %p678 = scmp.lt.s32.totalorder %s30, 1
        %s679 = scalar_select %p678, %s30, 1
        %s680 = smul.addr %s679, 2
        %s681 = scalar_lea.vmem %s11, %s680
        %p682 = pneg %p327
        %p683 = pneg %p324
        %p684 = scmp.lt.s32.totalorder %s30, 1
        %s685 = scalar_select %p684, %s30, 1
        %s686 = smul.addr %s685, 2
        %s687 = scalar_lea.vmem %s12, %s686
        %p688 = pneg %p353
        %p689 = pneg %p350
        %p690 = scmp.lt.s32.totalorder %s30, 1
        %s691 = scalar_select %p690, %s30, 1
        %s692 = smul.addr %s691, 2
        %s693 = scalar_lea.vmem %s13, %s692
        %p694 = pneg %p379
        %p695 = pneg %p376
        %p696 = pneg %p400
        %p697 = pneg %p397
        %p698 = pneg %p421
        %p699 = pneg %p418
        %p700 = pneg %p442
        %p701 = pneg %p439
        %p702 = pneg %p463
        %p703 = pneg %p460
        %p704 = pneg %p484
        %p705 = pneg %p481
        %p706 = scmp.lt.s32.totalorder %s30, 1
        %s707 = scalar_select %p706, %s30, 1
        %s708 = smul.addr %s707, 144
        %s709 = smul.addr %s708, 4
        %s710 = scalar_lea.vmem %s2, %s709
        %p711 = scmp.lt.s32.totalorder %s30, 1
        %s712 = scalar_select %p711, %s30, 1
        %s713 = smul.addr %s712, 6
        %s714 = scalar_lea.vmem %s3, %s713
        %p715 = scmp.lt.s32.totalorder %s30, 1
        %s716 = scalar_select %p715, %s30, 1
        %s717 = smul.addr %s716, 64
        %s718 = smul.addr %s717, 4
        %s719 = scalar_lea.vmem %s4, %s718
        %p720 = scmp.lt.s32.totalorder %s30, 1
        %s721 = scalar_select %p720, %s30, 1
        %s722 = smul.addr %s721, 2
        %s723 = scalar_lea.vmem %s5, %s722
        %p724 = scmp.lt.s32.totalorder %s30, 1
        %s725 = scalar_select %p724, %s30, 1
        %s726 = smul.addr %s725, 2
        %s727 = scalar_lea.vmem %s6, %s726
        %p728 = scmp.lt.s32.totalorder %s30, 1
        %s729 = scalar_select %p728, %s30, 1
        %s730 = smul.addr %s729, 2
        %s731 = scalar_lea.vmem %s7, %s730
        %p732 = scmp.lt.s32.totalorder %s30, 1
        %s733 = scalar_select %p732, %s30, 1
        %s734 = smul.addr %s733, 144
        %s735 = smul.addr %s734, 4
        %s736 = scalar_lea.vmem %s8, %s735
        %p737 = scmp.lt.s32.totalorder %s30, 1
        %s738 = scalar_select %p737, %s30, 1
        %s739 = smul.addr %s738, 6
        %s740 = scalar_lea.vmem %s9, %s739
        %p741 = scmp.lt.s32.totalorder %s30, 1
        %s742 = scalar_select %p741, %s30, 1
        %s743 = smul.addr %s742, 192
        %s744 = smul.addr %s743, 4
        %s745 = scalar_lea.vmem %s10, %s744
        %p746 = scmp.lt.s32.totalorder %s30, 1
        %s747 = scalar_select %p746, %s30, 1
        %s748 = smul.addr %s747, 2
        %s749 = scalar_lea.vmem %s11, %s748
        %p750 = scmp.lt.s32.totalorder %s30, 1
        %s751 = scalar_select %p750, %s30, 1
        %s752 = smul.addr %s751, 2
        %s753 = scalar_lea.vmem %s12, %s752
        %p754 = scmp.lt.s32.totalorder %s30, 1
        %s755 = scalar_select %p754, %s30, 1
        %s756 = smul.addr %s755, 2
        %s757 = scalar_lea.vmem %s13, %s756
        %p759 = scmp.eq.s32.totalorder %s30, 0
        // Predicated region
        $region93: #{transformer_classifier_forward.1} parent=91 // pred_check
          %p760 = pneg %p759
        $region94: #{transformer_classifier_forward.1} parent=91 // pred_check_branch
          %762 = sbr.rel (%p760) target = $region96
        $region95: #{transformer_classifier_forward.1} parent=91 // pred_region
          %v763 = vld [vmem:[%s1] sm:$0xff]
          %v764 = vld [vmem:[%s1 + $0x8] sm:$0xff]
          %v765 = vld [vmem:[%s1 + $0x10] sm:$0xff]
          %v766 = vld [vmem:[%s1 + $0x18] sm:$0xff]
          %v767 = vld [vmem:[%s0] sm:$0xff]
          %v768 = vld [vmem:[%s0 + $0x8] sm:$0xff]
          %v769 = vld [vmem:[%s0 + $0x10] sm:$0xff]
          %v770 = vld [vmem:[%s0 + $0x18] sm:$0xff]
          %v771 = vld [vmem:[%s0 + $0x20] sm:$0xff]
          %v772 = vld [vmem:[%s0 + $0x28] sm:$0xff]
          %v773 = vld [vmem:[%s0 + $0x30] sm:$0xff]
          %v774 = vld [vmem:[%s0 + $0x38] sm:$0xff]
          %v775 = vadd.f32 %v767, %v763
          %v776 = vadd.f32 %v768, %v764
          %v777 = vadd.f32 %v769, %v765
          %v778 = vadd.f32 %v770, %v766
          %v779 = vadd.f32 %v771, %v763
          %v780 = vadd.f32 %v772, %v764
          %v781 = vadd.f32 %v773, %v765
          %v782 = vadd.f32 %v774, %v766
          %783 = vst [vmem:[#allocation2] sm:$0xff] %v775
          %vm784 = vcmask 523264
          %785 = vst.msk [vmem:[#allocation2 + $0x8] sm:$0xff] %vm784, %v776
          %786 = vst [vmem:[#allocation2 + $0x10] sm:$0xff] %v777
          %787 = vst.msk [vmem:[#allocation2 + $0x18] sm:$0xff] %vm784, %v778
          %788 = vst [vmem:[#allocation2 + $0x20] sm:$0xff] %v779
          %789 = vst.msk [vmem:[#allocation2 + $0x28] sm:$0xff] %vm784, %v780
          %790 = vst [vmem:[#allocation2 + $0x30] sm:$0xff] %v781
          %791 = vst.msk [vmem:[#allocation2 + $0x38] sm:$0xff] %vm784, %v782
        $region96: #{transformer_classifier_forward.1} parent=91 // pred_fallthru
          _
        %v792 = vld [vmem:[#allocation2] sm:$0xff]
        %v793 = vld [vmem:[#allocation2 + $0x8] sm:$0xff]
        %v794 = vld [vmem:[#allocation2 + $0x10] sm:$0xff]
        %v795 = vld [vmem:[#allocation2 + $0x18] sm:$0xff]
        %v796 = vld [vmem:[#allocation2 + $0x20] sm:$0xff]
        %v797 = vld [vmem:[#allocation2 + $0x28] sm:$0xff]
        %v798 = vld [vmem:[#allocation2 + $0x30] sm:$0xff]
        %v799 = vld [vmem:[#allocation2 + $0x38] sm:$0xff]
        %v800 = vlaneseq
        %v801 = vshrl.u32 %v800, 7
        %v802 = vadd.s32 %v801, 8
        %v803 = vadd.s32 %v801, 16
        %v804 = vadd.s32 %v801, 24
        %v805 = vand.u32 %v801, 15
        %v806 = vand.u32 %v802, 15
        %v807 = vand.u32 %v803, 15
        %v808 = vand.u32 %v804, 15
        %v809 = vlaneseq
        %v810 = vand.u32 %v809, 127
        %v811 = vand.u32 %v810, 15
        %vm812 = vcmp.eq.s32.totalorder %v805, %v811
        %vm813 = vcmp.eq.s32.totalorder %v806, %v811
        %vm814 = vcmp.eq.s32.totalorder %v807, %v811
        %vm815 = vcmp.eq.s32.totalorder %v808, %v811
        %v816 = vpack.c.bf16 %v794, %v792
        %v817 = vpack.c.bf16 %v795, %v793
        %v818 = vpack.c.bf16 %v798, %v796
        %v819 = vpack.c.bf16 %v799, %v797
        %v820 = vld [vmem:[%s710] sm:$0xff]
        %v821 = vld [vmem:[%s710 + $0x8] sm:$0xff]
        %v822 = vld [vmem:[%s710 + $0x10] sm:$0xff]
        %v823 = vld [vmem:[%s710 + $0x18] sm:$0xff]
        %v824 = vld [vmem:[%s710 + $0x20] sm:$0xff]
        %v825 = vld [vmem:[%s710 + $0x28] sm:$0xff]
        %v826 = vld [vmem:[%s710 + $0x30] sm:$0xff]
        %v827 = vld [vmem:[%s710 + $0x38] sm:$0xff]
        %v828 = vld [vmem:[%s710 + $0x40] sm:$0xff]
        %v829 = vld [vmem:[%s710 + $0x48] sm:$0xff]
        %v830 = vld [vmem:[%s710 + $0x50] sm:$0xff]
        %v831 = vld [vmem:[%s710 + $0x58] sm:$0xff]
        %v832 = vld [vmem:[%s710 + $0x60] sm:$0xff]
        %v833 = vld [vmem:[%s710 + $0x68] sm:$0xff]
        %v834 = vld [vmem:[%s710 + $0x70] sm:$0xff]
        %v835 = vld [vmem:[%s710 + $0x78] sm:$0xff]
        %v836 = vld [vmem:[%s710 + $0x80] sm:$0xff]
        %v837 = vld [vmem:[%s710 + $0x88] sm:$0xff]
        %v838 = vld [vmem:[%s710 + $0x90] sm:$0xff]
        %v839 = vld [vmem:[%s710 + $0x98] sm:$0xff]
        %v840 = vld [vmem:[%s710 + $0xa0] sm:$0xff]
        %v841 = vld [vmem:[%s710 + $0xa8] sm:$0xff]
        %v842 = vld [vmem:[%s710 + $0xb0] sm:$0xff]
        %v843 = vld [vmem:[%s710 + $0xb8] sm:$0xff]
        %v844 = vld [vmem:[%s710 + $0xc0] sm:$0xff]
        %v845 = vld [vmem:[%s710 + $0xc8] sm:$0xff]
        %v846 = vld [vmem:[%s710 + $0xd0] sm:$0xff]
        %v847 = vld [vmem:[%s710 + $0xd8] sm:$0xff]
        %v848 = vld [vmem:[%s710 + $0xe0] sm:$0xff]
        %v849 = vld [vmem:[%s710 + $0xe8] sm:$0xff]
        %v850 = vld [vmem:[%s710 + $0xf0] sm:$0xff]
        %v851 = vld [vmem:[%s710 + $0xf8] sm:$0xff]
        %v852 = vld [vmem:[%s710 + $0x100] sm:$0xff]
        %v853 = vld [vmem:[%s710 + $0x108] sm:$0xff]
        %v854 = vld [vmem:[%s710 + $0x110] sm:$0xff]
        %v855 = vld [vmem:[%s710 + $0x118] sm:$0xff]
        %v856 = vld [vmem:[%s710 + $0x120] sm:$0xff]
        %v857 = vld [vmem:[%s710 + $0x128] sm:$0xff]
        %v858 = vld [vmem:[%s710 + $0x130] sm:$0xff]
        %v859 = vld [vmem:[%s710 + $0x138] sm:$0xff]
        %v860 = vld [vmem:[%s710 + $0x140] sm:$0xff]
        %v861 = vld [vmem:[%s710 + $0x148] sm:$0xff]
        %v862 = vld [vmem:[%s710 + $0x150] sm:$0xff]
        %v863 = vld [vmem:[%s710 + $0x158] sm:$0xff]
        %v864 = vld [vmem:[%s710 + $0x160] sm:$0xff]
        %v865 = vld [vmem:[%s710 + $0x168] sm:$0xff]
        %v866 = vld [vmem:[%s710 + $0x170] sm:$0xff]
        %v867 = vld [vmem:[%s710 + $0x178] sm:$0xff]
        %v868 = vld [vmem:[%s710 + $0x180] sm:$0xff]
        %v869 = vld [vmem:[%s710 + $0x188] sm:$0xff]
        %v870 = vld [vmem:[%s710 + $0x190] sm:$0xff]
        %v871 = vld [vmem:[%s710 + $0x198] sm:$0xff]
        %v872 = vld [vmem:[%s710 + $0x1a0] sm:$0xff]
        %v873 = vld [vmem:[%s710 + $0x1a8] sm:$0xff]
        %v874 = vld [vmem:[%s710 + $0x1b0] sm:$0xff]
        %v875 = vld [vmem:[%s710 + $0x1b8] sm:$0xff]
        %v876 = vld [vmem:[%s710 + $0x1c0] sm:$0xff]
        %v877 = vld [vmem:[%s710 + $0x1c8] sm:$0xff]
        %v878 = vld [vmem:[%s710 + $0x1d0] sm:$0xff]
        %v879 = vld [vmem:[%s710 + $0x1d8] sm:$0xff]
        %v880 = vld [vmem:[%s710 + $0x1e0] sm:$0xff]
        %v881 = vld [vmem:[%s710 + $0x1e8] sm:$0xff]
        %v882 = vld [vmem:[%s710 + $0x1f0] sm:$0xff]
        %v883 = vld [vmem:[%s710 + $0x1f8] sm:$0xff]
        %v884 = vld [vmem:[%s710 + $0x200] sm:$0xff]
        %v885 = vld [vmem:[%s710 + $0x208] sm:$0xff]
        %v886 = vld [vmem:[%s710 + $0x210] sm:$0xff]
        %v887 = vld [vmem:[%s710 + $0x218] sm:$0xff]
        %v888 = vld [vmem:[%s710 + $0x220] sm:$0xff]
        %v889 = vld [vmem:[%s710 + $0x228] sm:$0xff]
        %v890 = vld [vmem:[%s710 + $0x230] sm:$0xff]
        %v891 = vld [vmem:[%s710 + $0x238] sm:$0xff]
        %v892 = vld [vmem:[%s714] sm:$0x3f]
        %v894 = vlaneseq
        %v895 = vshrl.u32 %v894, 7
        %v896 = vsub.s32 0, %v895
        %v897 = vrot.slane %v892, %v896
        %v898 = vlaneseq
        %v899 = vshrl.u32 %v898, 7
        %v900 = vsub.s32 1, %v899
        %v901 = vrot.slane %v892, %v900
        %v902 = vlaneseq
        %v903 = vshrl.u32 %v902, 7
        %v904 = vsub.s32 2, %v903
        %v905 = vrot.slane %v892, %v904
        %v906 = vlaneseq
        %v907 = vshrl.u32 %v906, 7
        %v908 = vsub.s32 3, %v907
        %v909 = vrot.slane %v892, %v908
        %v910 = vlaneseq
        %v911 = vshrl.u32 %v910, 7
        %v912 = vsub.s32 4, %v911
        %v913 = vrot.slane %v892, %v912
        %v914 = vlaneseq
        %v915 = vshrl.u32 %v914, 7
        %v916 = vsub.s32 5, %v915
        %v917 = vrot.slane %v892, %v916
        %v996 = vunpack.c.l.b16 %v820
        %v997 = vunpack.c.h.b16 %v820
        %v998 = vunpack.c.l.b16 %v821
        %v999 = vunpack.c.h.b16 %v821
        %v1000 = vunpack.c.l.b16 %v822
        %v1001 = vunpack.c.h.b16 %v822
        %v1002 = vunpack.c.l.b16 %v823
        %v1003 = vunpack.c.h.b16 %v823
        %v1004 = vunpack.c.l.b16 %v824
        %v1005 = vunpack.c.h.b16 %v824
        %v1006 = vunpack.c.l.b16 %v825
        %v1007 = vunpack.c.h.b16 %v825
        %v1008 = vunpack.c.l.b16 %v826
        %v1009 = vunpack.c.h.b16 %v826
        %v1010 = vunpack.c.l.b16 %v827
        %v1011 = vunpack.c.h.b16 %v827
        %v1012 = vunpack.c.l.b16 %v828
        %v1013 = vunpack.c.h.b16 %v828
        %v1014 = vunpack.c.l.b16 %v829
        %v1015 = vunpack.c.h.b16 %v829
        %v1016 = vunpack.c.l.b16 %v830
        %v1017 = vunpack.c.h.b16 %v830
        %v1018 = vunpack.c.l.b16 %v831
        %v1019 = vunpack.c.h.b16 %v831
        %v1020 = vunpack.c.l.b16 %v832
        %v1021 = vunpack.c.h.b16 %v832
        %v1022 = vunpack.c.l.b16 %v833
        %v1023 = vunpack.c.h.b16 %v833
        %v1024 = vunpack.c.l.b16 %v834
        %v1025 = vunpack.c.h.b16 %v834
        %v1026 = vunpack.c.l.b16 %v835
        %v1027 = vunpack.c.h.b16 %v835
        %v1028 = vunpack.c.l.b16 %v836
        %v1029 = vunpack.c.h.b16 %v836
        %v1030 = vunpack.c.l.b16 %v837
        %v1031 = vunpack.c.h.b16 %v837
        %v1032 = vunpack.c.l.b16 %v838
        %v1033 = vunpack.c.h.b16 %v838
        %v1034 = vunpack.c.l.b16 %v839
        %v1035 = vunpack.c.h.b16 %v839
        %v1036 = vunpack.c.l.b16 %v840
        %v1037 = vunpack.c.h.b16 %v840
        %v1038 = vunpack.c.l.b16 %v841
        %v1039 = vunpack.c.h.b16 %v841
        %v1040 = vunpack.c.l.b16 %v842
        %v1041 = vunpack.c.h.b16 %v842
        %v1042 = vunpack.c.l.b16 %v843
        %v1043 = vunpack.c.h.b16 %v843
        %v1044 = vunpack.c.l.b16 %v844
        %v1045 = vunpack.c.h.b16 %v844
        %v1046 = vunpack.c.l.b16 %v845
        %v1047 = vunpack.c.h.b16 %v845
        %v1048 = vunpack.c.l.b16 %v846
        %v1049 = vunpack.c.h.b16 %v846
        %v1050 = vunpack.c.l.b16 %v847
        %v1051 = vunpack.c.h.b16 %v847
        %v1052 = vunpack.c.l.b16 %v848
        %v1053 = vunpack.c.h.b16 %v848
        %v1054 = vunpack.c.l.b16 %v849
        %v1055 = vunpack.c.h.b16 %v849
        %v1056 = vunpack.c.l.b16 %v850
        %v1057 = vunpack.c.h.b16 %v850
        %v1058 = vunpack.c.l.b16 %v851
        %v1059 = vunpack.c.h.b16 %v851
        %v1060 = vunpack.c.l.b16 %v852
        %v1061 = vunpack.c.h.b16 %v852
        %v1062 = vunpack.c.l.b16 %v853
        %v1063 = vunpack.c.h.b16 %v853
        %v1064 = vunpack.c.l.b16 %v854
        %v1065 = vunpack.c.h.b16 %v854
        %v1066 = vunpack.c.l.b16 %v855
        %v1067 = vunpack.c.h.b16 %v855
        %v1068 = vunpack.c.l.b16 %v856
        %v1069 = vunpack.c.h.b16 %v856
        %v1070 = vunpack.c.l.b16 %v857
        %v1071 = vunpack.c.h.b16 %v857
        %v1072 = vunpack.c.l.b16 %v858
        %v1073 = vunpack.c.h.b16 %v858
        %v1074 = vunpack.c.l.b16 %v859
        %v1075 = vunpack.c.h.b16 %v859
        %v1076 = vunpack.c.l.b16 %v860
        %v1077 = vunpack.c.h.b16 %v860
        %v1078 = vunpack.c.l.b16 %v861
        %v1079 = vunpack.c.h.b16 %v861
        %v1080 = vunpack.c.l.b16 %v862
        %v1081 = vunpack.c.h.b16 %v862
        %v1082 = vunpack.c.l.b16 %v863
        %v1083 = vunpack.c.h.b16 %v863
        %v1084 = vunpack.c.l.b16 %v864
        %v1085 = vunpack.c.h.b16 %v864
        %v1086 = vunpack.c.l.b16 %v865
        %v1087 = vunpack.c.h.b16 %v865
        %v1088 = vunpack.c.l.b16 %v866
        %v1089 = vunpack.c.h.b16 %v866
        %v1090 = vunpack.c.l.b16 %v867
        %v1091 = vunpack.c.h.b16 %v867
        %v1092 = vunpack.c.l.b16 %v868
        %v1093 = vunpack.c.h.b16 %v868
        %v1094 = vunpack.c.l.b16 %v869
        %v1095 = vunpack.c.h.b16 %v869
        %v1096 = vunpack.c.l.b16 %v870
        %v1097 = vunpack.c.h.b16 %v870
        %v1098 = vunpack.c.l.b16 %v871
        %v1099 = vunpack.c.h.b16 %v871
        %v1100 = vunpack.c.l.b16 %v872
        %v1101 = vunpack.c.h.b16 %v872
        %v1102 = vunpack.c.l.b16 %v873
        %v1103 = vunpack.c.h.b16 %v873
        %v1104 = vunpack.c.l.b16 %v874
        %v1105 = vunpack.c.h.b16 %v874
        %v1106 = vunpack.c.l.b16 %v875
        %v1107 = vunpack.c.h.b16 %v875
        %v1108 = vunpack.c.l.b16 %v876
        %v1109 = vunpack.c.h.b16 %v876
        %v1110 = vunpack.c.l.b16 %v877
        %v1111 = vunpack.c.h.b16 %v877
        %v1112 = vunpack.c.l.b16 %v878
        %v1113 = vunpack.c.h.b16 %v878
        %v1114 = vunpack.c.l.b16 %v879
        %v1115 = vunpack.c.h.b16 %v879
        %v1116 = vunpack.c.l.b16 %v880
        %v1117 = vunpack.c.h.b16 %v880
        %v1118 = vunpack.c.l.b16 %v881
        %v1119 = vunpack.c.h.b16 %v881
        %v1120 = vunpack.c.l.b16 %v882
        %v1121 = vunpack.c.h.b16 %v882
        %v1122 = vunpack.c.l.b16 %v883
        %v1123 = vunpack.c.h.b16 %v883
        %v1124 = vunpack.c.l.b16 %v884
        %v1125 = vunpack.c.h.b16 %v884
        %v1126 = vunpack.c.l.b16 %v885
        %v1127 = vunpack.c.h.b16 %v885
        %v1128 = vunpack.c.l.b16 %v886
        %v1129 = vunpack.c.h.b16 %v886
        %v1130 = vunpack.c.l.b16 %v887
        %v1131 = vunpack.c.h.b16 %v887
        %v1132 = vunpack.c.l.b16 %v888
        %v1133 = vunpack.c.h.b16 %v888
        %v1134 = vunpack.c.l.b16 %v889
        %v1135 = vunpack.c.h.b16 %v889
        %v1136 = vunpack.c.l.b16 %v890
        %v1137 = vunpack.c.h.b16 %v890
        %v1138 = vunpack.c.l.b16 %v891
        %v1139 = vunpack.c.h.b16 %v891
        %v1140 = vpack.c.b16 %v1002, %v996
        %v1141 = vpack.c.b16 %v1003, %v997
        %v1142 = vpack.c.b16 %v1004, %v998
        %v1143 = vpack.c.b16 %v1005, %v999
        %v1144 = vpack.c.b16 %v1006, %v1000
        %v1145 = vpack.c.b16 %v1007, %v1001
        %v1146 = vpack.c.b16 %v1014, %v1008
        %v1147 = vpack.c.b16 %v1015, %v1009
        %v1148 = vpack.c.b16 %v1016, %v1010
        %v1149 = vpack.c.b16 %v1017, %v1011
        %v1150 = vpack.c.b16 %v1018, %v1012
        %v1151 = vpack.c.b16 %v1019, %v1013
        %v1152 = vpack.c.b16 %v1026, %v1020
        %v1153 = vpack.c.b16 %v1027, %v1021
        %v1154 = vpack.c.b16 %v1028, %v1022
        %v1155 = vpack.c.b16 %v1029, %v1023
        %v1156 = vpack.c.b16 %v1030, %v1024
        %v1157 = vpack.c.b16 %v1031, %v1025
        %v1158 = vpack.c.b16 %v1038, %v1032
        %v1159 = vpack.c.b16 %v1039, %v1033
        %v1160 = vpack.c.b16 %v1040, %v1034
        %v1161 = vpack.c.b16 %v1041, %v1035
        %v1162 = vpack.c.b16 %v1042, %v1036
        %v1163 = vpack.c.b16 %v1043, %v1037
        %v1164 = vpack.c.b16 %v1050, %v1044
        %v1165 = vpack.c.b16 %v1051, %v1045
        %v1166 = vpack.c.b16 %v1052, %v1046
        %v1167 = vpack.c.b16 %v1053, %v1047
        %v1168 = vpack.c.b16 %v1054, %v1048
        %v1169 = vpack.c.b16 %v1055, %v1049
        %v1170 = vpack.c.b16 %v1062, %v1056
        %v1171 = vpack.c.b16 %v1063, %v1057
        %v1172 = vpack.c.b16 %v1064, %v1058
        %v1173 = vpack.c.b16 %v1065, %v1059
        %v1174 = vpack.c.b16 %v1066, %v1060
        %v1175 = vpack.c.b16 %v1067, %v1061
        %v1176 = vpack.c.b16 %v1074, %v1068
        %v1177 = vpack.c.b16 %v1075, %v1069
        %v1178 = vpack.c.b16 %v1076, %v1070
        %v1179 = vpack.c.b16 %v1077, %v1071
        %v1180 = vpack.c.b16 %v1078, %v1072
        %v1181 = vpack.c.b16 %v1079, %v1073
        %v1182 = vpack.c.b16 %v1086, %v1080
        %v1183 = vpack.c.b16 %v1087, %v1081
        %v1184 = vpack.c.b16 %v1088, %v1082
        %v1185 = vpack.c.b16 %v1089, %v1083
        %v1186 = vpack.c.b16 %v1090, %v1084
        %v1187 = vpack.c.b16 %v1091, %v1085
        %v1188 = vpack.c.b16 %v1098, %v1092
        %v1189 = vpack.c.b16 %v1099, %v1093
        %v1190 = vpack.c.b16 %v1100, %v1094
        %v1191 = vpack.c.b16 %v1101, %v1095
        %v1192 = vpack.c.b16 %v1102, %v1096
        %v1193 = vpack.c.b16 %v1103, %v1097
        %v1194 = vpack.c.b16 %v1110, %v1104
        %v1195 = vpack.c.b16 %v1111, %v1105
        %v1196 = vpack.c.b16 %v1112, %v1106
        %v1197 = vpack.c.b16 %v1113, %v1107
        %v1198 = vpack.c.b16 %v1114, %v1108
        %v1199 = vpack.c.b16 %v1115, %v1109
        %v1200 = vpack.c.b16 %v1122, %v1116
        %v1201 = vpack.c.b16 %v1123, %v1117
        %v1202 = vpack.c.b16 %v1124, %v1118
        %v1203 = vpack.c.b16 %v1125, %v1119
        %v1204 = vpack.c.b16 %v1126, %v1120
        %v1205 = vpack.c.b16 %v1127, %v1121
        %v1206 = vpack.c.b16 %v1134, %v1128
        %v1207 = vpack.c.b16 %v1135, %v1129
        %v1208 = vpack.c.b16 %v1136, %v1130
        %v1209 = vpack.c.b16 %v1137, %v1131
        %v1210 = vpack.c.b16 %v1138, %v1132
        %v1211 = vpack.c.b16 %v1139, %v1133
        %vm1284 = vcmask 523264
        %v1286 = vsel %vm1284, %v817, 0
        %v1289 = vsel %vm1284, %v819, 0
        %1291 = vmatprep.subr.bf16.mxu0 %v1141
        %1292 = vmatpush1.bf16.msra.mxu0 %v1140
        %1293 = vmatprep.subr.bf16.mxu0 %v1147
        %1294 = vmatpush1.bf16.msra.mxu0 %v1146
        %1295 = vmatprep.subr.bf16.mxu0 %v1153
        %1296 = vmatpush1.bf16.msra.mxu0 %v1152
        %1297 = vmatprep.subr.bf16.mxu0 %v1159
        %1298 = vmatpush1.bf16.msra.mxu0 %v1158
        %1299 = vmatprep.subr.bf16.mxu0 %v1165
        %1300 = vmatpush1.bf16.msra.mxu0 %v1164
        %1301 = vmatprep.subr.bf16.mxu0 %v1171
        %1302 = vmatpush1.bf16.msra.mxu0 %v1170
        %1303 = vmatprep.subr.bf16.mxu0 %v1177
        %1304 = vmatpush1.bf16.msra.mxu0 %v1176
        %1305 = vmatprep.subr.bf16.mxu0 %v1183
        %1306 = vmatpush1.bf16.msra.mxu0 %v1182
        %1307 = vmatprep.subr.bf16.mxu0 %v1189
        %1308 = vmatpush1.bf16.msra.mxu0 %v1188
        %1309 = vmatprep.subr.bf16.mxu0 %v1195
        %1310 = vmatpush1.bf16.msra.mxu0 %v1194
        %1311 = vmatprep.subr.bf16.mxu0 %v1201
        %1312 = vmatpush1.bf16.msra.mxu0 %v1200
        %1313 = vmatprep.subr.bf16.mxu0 %v1207
        %1314 = vmatpush1.bf16.msra.mxu0 %v1206
        %1315 = vmatprep.subr.bf16.mxu0 0
        %1316 = vmatpush1.bf16.msra.mxu0 0
        %1317 = vmatprep.subr.bf16.mxu0 0
        %1318 = vmatpush1.bf16.msra.mxu0 0
        %1319 = vmatprep.subr.bf16.mxu0 0
        %1320 = vmatpush1.bf16.msra.mxu0 0
        %1321 = vmatprep.subr.bf16.mxu0 0
        %1322 = vmatpush1.bf16.msra.mxu0 0
        %1323 = vmatprep.mubr.bf16.mxu0 %v1286
        %1324 = vmatmul.mubr.bf16.gmra.mrb[0].mxu0 %v816
        %v1325 = vpop.f32.mrb[0].mxu0
        %v1326 = vadd.f32 %v897, %v1325
        %v1327 = vpop.f32.mrb[0].mxu0
        %v1328 = vadd.f32 %v901, %v1327
        %v1329 = vpop.f32.mrb[0].mxu0
        %v1330 = vadd.f32 %v897, %v1329
        %v1331 = vpop.f32.mrb[0].mxu0
        %v1332 = vadd.f32 %v901, %v1331
        %1333 = vmatprep.mubr.bf16.mxu0 %v1289
        %1334 = vmatmul.mubr.bf16.gmra.mrb[0].mxu0 %v818
        %v1335 = vpop.f32.mrb[0].mxu0
        %v1336 = vadd.f32 %v897, %v1335
        %v1337 = vpop.f32.mrb[0].mxu0
        %v1338 = vadd.f32 %v901, %v1337
        %v1339 = vpop.f32.mrb[0].mxu0
        %v1340 = vadd.f32 %v897, %v1339
        %v1341 = vpop.f32.mrb[0].mxu0
        %v1342 = vadd.f32 %v901, %v1341
        %1343 = vdwg.mxu0
        %1344 = vmatprep.subr.bf16.mxu0 %v1143
        %1345 = vmatpush1.bf16.msra.mxu0 %v1142
        %1346 = vmatprep.subr.bf16.mxu0 %v1149
        %1347 = vmatpush1.bf16.msra.mxu0 %v1148
        %1348 = vmatprep.subr.bf16.mxu0 %v1155
        %1349 = vmatpush1.bf16.msra.mxu0 %v1154
        %1350 = vmatprep.subr.bf16.mxu0 %v1161
        %1351 = vmatpush1.bf16.msra.mxu0 %v1160
        %1352 = vmatprep.subr.bf16.mxu0 %v1167
        %1353 = vmatpush1.bf16.msra.mxu0 %v1166
        %1354 = vmatprep.subr.bf16.mxu0 %v1173
        %1355 = vmatpush1.bf16.msra.mxu0 %v1172
        %1356 = vmatprep.subr.bf16.mxu0 %v1179
        %1357 = vmatpush1.bf16.msra.mxu0 %v1178
        %1358 = vmatprep.subr.bf16.mxu0 %v1185
        %1359 = vmatpush1.bf16.msra.mxu0 %v1184
        %1360 = vmatprep.subr.bf16.mxu0 %v1191
        %1361 = vmatpush1.bf16.msra.mxu0 %v1190
        %1362 = vmatprep.subr.bf16.mxu0 %v1197
        %1363 = vmatpush1.bf16.msra.mxu0 %v1196
        %1364 = vmatprep.subr.bf16.mxu0 %v1203
        %1365 = vmatpush1.bf16.msra.mxu0 %v1202
        %1366 = vmatprep.subr.bf16.mxu0 %v1209
        %1367 = vmatpush1.bf16.msra.mxu0 %v1208
        %1368 = vmatprep.subr.bf16.mxu0 0
        %1369 = vmatpush1.bf16.msra.mxu0 0
        %1370 = vmatprep.subr.bf16.mxu0 0
        %1371 = vmatpush1.bf16.msra.mxu0 0
        %1372 = vmatprep.subr.bf16.mxu0 0
        %1373 = vmatpush1.bf16.msra.mxu0 0
        %1374 = vmatprep.subr.bf16.mxu0 0
        %1375 = vmatpush1.bf16.msra.mxu0 0
        %1376 = vmatprep.mubr.bf16.mxu0 %v1286
        %1377 = vmatmul.mubr.bf16.gmra.mrb[0].mxu0 %v816
        %v1378 = vpop.f32.mrb[0].mxu0
        %v1379 = vadd.f32 %v905, %v1378
        %v1380 = vpop.f32.mrb[0].mxu0
        %v1381 = vadd.f32 %v909, %v1380
        %v1382 = vpop.f32.mrb[0].mxu0
        %v1383 = vadd.f32 %v905, %v1382
        %v1384 = vpop.f32.mrb[0].mxu0
        %v1385 = vadd.f32 %v909, %v1384
        %1386 = vmatprep.mubr.bf16.mxu0 %v1289
        %1387 = vmatmul.mubr.bf16.gmra.mrb[0].mxu0 %v818
        %v1388 = vpop.f32.mrb[0].mxu0
        %v1389 = vadd.f32 %v905, %v1388
        %v1390 = vpop.f32.mrb[0].mxu0
        %v1391 = vadd.f32 %v909, %v1390
        %v1392 = vpop.f32.mrb[0].mxu0
        %v1393 = vadd.f32 %v905, %v1392
        %v1394 = vpop.f32.mrb[0].mxu0
        %v1395 = vadd.f32 %v909, %v1394
        %1396 = vdwg.mxu0
        %1397 = vmatprep.subr.bf16.mxu0 %v1145
        %1398 = vmatpush1.bf16.msra.mxu0 %v1144
        %1399 = vmatprep.subr.bf16.mxu0 %v1151
        %1400 = vmatpush1.bf16.msra.mxu0 %v1150
        %1401 = vmatprep.subr.bf16.mxu0 %v1157
        %1402 = vmatpush1.bf16.msra.mxu0 %v1156
        %1403 = vmatprep.subr.bf16.mxu0 %v1163
        %1404 = vmatpush1.bf16.msra.mxu0 %v1162
        %1405 = vmatprep.subr.bf16.mxu0 %v1169
        %1406 = vmatpush1.bf16.msra.mxu0 %v1168
        %1407 = vmatprep.subr.bf16.mxu0 %v1175
        %1408 = vmatpush1.bf16.msra.mxu0 %v1174
        %1409 = vmatprep.subr.bf16.mxu0 %v1181
        %1410 = vmatpush1.bf16.msra.mxu0 %v1180
        %1411 = vmatprep.subr.bf16.mxu0 %v1187
        %1412 = vmatpush1.bf16.msra.mxu0 %v1186
        %1413 = vmatprep.subr.bf16.mxu0 %v1193
        %1414 = vmatpush1.bf16.msra.mxu0 %v1192
        %1415 = vmatprep.subr.bf16.mxu0 %v1199
        %1416 = vmatpush1.bf16.msra.mxu0 %v1198
        %1417 = vmatprep.subr.bf16.mxu0 %v1205
        %1418 = vmatpush1.bf16.msra.mxu0 %v1204
        %1419 = vmatprep.subr.bf16.mxu0 %v1211
        %1420 = vmatpush1.bf16.msra.mxu0 %v1210
        %1421 = vmatprep.subr.bf16.mxu0 0
        %1422 = vmatpush1.bf16.msra.mxu0 0
        %1423 = vmatprep.subr.bf16.mxu0 0
        %1424 = vmatpush1.bf16.msra.mxu0 0
        %1425 = vmatprep.subr.bf16.mxu0 0
        %1426 = vmatpush1.bf16.msra.mxu0 0
        %1427 = vmatprep.subr.bf16.mxu0 0
        %1428 = vmatpush1.bf16.msra.mxu0 0
        %1429 = vmatprep.mubr.bf16.mxu0 %v1286
        %1430 = vmatmul.mubr.bf16.gmra.mrb[0].mxu0 %v816
        %v1431 = vpop.f32.mrb[0].mxu0
        %v1432 = vadd.f32 %v913, %v1431
        %v1433 = vpop.f32.mrb[0].mxu0
        %v1434 = vadd.f32 %v917, %v1433
        %v1435 = vpop.f32.mrb[0].mxu0
        %v1436 = vadd.f32 %v913, %v1435
        %v1437 = vpop.f32.mrb[0].mxu0
        %v1438 = vadd.f32 %v917, %v1437
        %1439 = vmatprep.mubr.bf16.mxu0 %v1289
        %1440 = vmatmul.mubr.bf16.gmra.mrb[0].mxu0 %v818
        %v1441 = vpop.f32.mrb[0].mxu0
        %v1442 = vadd.f32 %v913, %v1441
        %v1443 = vpop.f32.mrb[0].mxu0
        %v1444 = vadd.f32 %v917, %v1443
        %v1445 = vpop.f32.mrb[0].mxu0
        %v1446 = vadd.f32 %v913, %v1445
        %v1447 = vpop.f32.mrb[0].mxu0
        %v1448 = vadd.f32 %v917, %v1447
        %1449 = vdwg.mxu0
        %v1450 = vpack.c.bf16 %v1330, %v1326
        %v1451 = vpack.c.bf16 %v1340, %v1336
        %v1452 = vpack.c.bf16 %v1383, %v1379
        %v1453 = vpack.c.bf16 %v1393, %v1389
        %v1454 = vpack.c.bf16 %v1436, %v1432
        %v1455 = vpack.c.bf16 %v1446, %v1442
        %1456 = vmatprep.subr.bf16.mxu0 0
        %1457 = vmatpush1.bf16.xpose.msra.mxu0 %v1452
        %1458 = vmatprep.subr.bf16.mxu0 0
        %1459 = vmatpush1.bf16.xpose.msra.mxu0 %v1453
        %1460 = vmatprep.subr.bf16.mxu0 0
        %1461 = vmatpush1.bf16.xpose.msra.mxu0 0
        %1462 = vmatprep.subr.bf16.mxu0 0
        %1463 = vmatpush1.bf16.xpose.msra.mxu0 0
        %1464 = vmatprep.subr.bf16.mxu0 0
        %1465 = vmatpush1.bf16.xpose.msra.mxu0 0
        %1466 = vmatprep.subr.bf16.mxu0 0
        %1467 = vmatpush1.bf16.xpose.msra.mxu0 0
        %1468 = vmatprep.subr.bf16.mxu0 0
        %1469 = vmatpush1.bf16.xpose.msra.mxu0 0
        %1470 = vmatprep.subr.bf16.mxu0 0
        %1471 = vmatpush1.bf16.xpose.msra.mxu0 0
        %1472 = vmatprep.subr.bf16.mxu0 0
        %1473 = vmatpush1.bf16.xpose.msra.mxu0 0
        %1474 = vmatprep.subr.bf16.mxu0 0
        %1475 = vmatpush1.bf16.xpose.msra.mxu0 0
        %1476 = vmatprep.subr.bf16.mxu0 0
        %1477 = vmatpush1.bf16.xpose.msra.mxu0 0
        %1478 = vmatprep.subr.bf16.mxu0 0
        %1479 = vmatpush1.bf16.xpose.msra.mxu0 0
        %1480 = vmatprep.subr.bf16.mxu0 0
        %1481 = vmatpush1.bf16.xpose.msra.mxu0 0
        %1482 = vmatprep.subr.bf16.mxu0 0
        %1483 = vmatpush1.bf16.xpose.msra.mxu0 0
        %1484 = vmatprep.subr.bf16.mxu0 0
        %1485 = vmatpush1.bf16.xpose.msra.mxu0 0
        %1486 = vmatprep.subr.bf16.mxu0 0
        %1487 = vmatpush1.bf16.xpose.msra.mxu0 0
        %1488 = vmatprep.mubr.bf16.mxu0 0
        %1489 = vmatmul.mubr.bf16.gmra.mrb[0].mxu0 %v1450
        %v1490 = vpop.f32.mrb[0].mxu0
        %v1491 = vadd.f32 0.0, %v1490
        %v1492 = vpop.f32.mrb[0].mxu0
        %v1493 = vpop.f32.mrb[0].mxu0
        %v1494 = vadd.f32 0.0, %v1493
        %v1495 = vpop.f32.mrb[0].mxu0
        %1496 = vmatprep.mubr.bf16.mxu0 0
        %1497 = vmatmul.mubr.bf16.gmra.mrb[0].mxu0 %v1451
        %v1498 = vpop.f32.mrb[0].mxu0
        %v1499 = vadd.f32 0.0, %v1498
        %v1500 = vpop.f32.mrb[0].mxu0
        %v1501 = vpop.f32.mrb[0].mxu0
        %v1502 = vadd.f32 0.0, %v1501
        %v1503 = vpop.f32.mrb[0].mxu0
        %1504 = vdwg.mxu0
        %v1505 = vmul.f32 %v1491, 0.10206208
        %v1506 = vmul.f32 %v1494, 0.10206208
        %v1507 = vmul.f32 %v1499, 0.10206208
        %v1508 = vmul.f32 %v1502, 0.10206208
        %v1509 = vsel %vm812, %v1505, -1e+30
        %v1510 = vsel %vm813, %v1506, -1e+30
        %v1511 = vsel %vm814, %v1507, -1e+30
        %v1512 = vsel %vm815, %v1508, -1e+30
        %vm1513 = vcmask 261120
        %v1514 = vsel %vm1513, %v1509, -inf
        %1515 = vmax.xlane.f32.xlu0 %v1514
        %v1516 = vpop.xlane.xlu0 %1515
        %v1517 = vsel %vm1513, %v1510, -inf
        %1518 = vmax.xlane.f32.xlu0 %v1517
        %v1519 = vpop.xlane.xlu0 %1518
        %v1520 = vsel %vm1513, %v1511, -inf
        %1521 = vmax.xlane.f32.xlu0 %v1520
        %v1522 = vpop.xlane.xlu0 %1521
        %v1523 = vsel %vm1513, %v1512, -inf
        %1524 = vmax.xlane.f32.xlu0 %v1523
        %v1525 = vpop.xlane.xlu0 %1524
        %v1526 = vsub.f32 %v1509, %v1516
        %v1527 = vsub.f32 %v1510, %v1519
        %v1528 = vsub.f32 %v1511, %v1522
        %v1529 = vsub.f32 %v1512, %v1525
        %v1530 = vmul.f32 %v1526, 1.442695
        %v1531 = vpow.pop %v1530
        %v1532 = vmul.f32 %v1527, 1.442695
        %v1533 = vpow.pop %v1532
        %v1534 = vmul.f32 %v1528, 1.442695
        %v1535 = vpow.pop %v1534
        %v1536 = vmul.f32 %v1529, 1.442695
        %v1537 = vpow.pop %v1536
        %v1538 = vsel %vm1513, %v1531, 0.0
        %1539 = vadd.xlane.f32.xlu0 %v1538
        %v1540 = vpop.xlane.xlu0 %1539
        %v1541 = vsel %vm1513, %v1533, 0.0
        %1542 = vadd.xlane.f32.xlu0 %v1541
        %v1543 = vpop.xlane.xlu0 %1542
        %v1544 = vsel %vm1513, %v1535, 0.0
        %1545 = vadd.xlane.f32.xlu0 %v1544
        %v1546 = vpop.xlane.xlu0 %1545
        %v1547 = vsel %vm1513, %v1537, 0.0
        %1548 = vadd.xlane.f32.xlu0 %v1547
        %v1549 = vpop.xlane.xlu0 %1548
        %v1550 = vrcp.pop %v1540
        %v1551 = vrcp.pop %v1543
        %v1552 = vrcp.pop %v1546
        %v1553 = vrcp.pop %v1549
        %v1554 = vmul.f32 %v1531, %v1550
        %v1555 = vmul.f32 %v1533, %v1551
        %v1556 = vmul.f32 %v1535, %v1552
        %v1557 = vmul.f32 %v1537, %v1553
        %v1558 = vpack.c.bf16 %v1555, %v1554
        %v1559 = vpack.c.bf16 %v1557, %v1556
        %v1561 = vsel %vm1513, %v1558, 0
        %v1564 = vsel %vm1513, %v1559, 0
        %1566 = vmatprep.subr.bf16.mxu0 0
        %1567 = vmatpush1.bf16.msra.mxu0 %v1454
        %1568 = vmatprep.subr.bf16.mxu0 0
        %1569 = vmatpush1.bf16.msra.mxu0 %v1455
        %1570 = vmatprep.subr.bf16.mxu0 0
        %1571 = vmatpush1.bf16.msra.mxu0 0
        %1572 = vmatprep.subr.bf16.mxu0 0
        %1573 = vmatpush1.bf16.msra.mxu0 0
        %1574 = vmatprep.subr.bf16.mxu0 0
        %1575 = vmatpush1.bf16.msra.mxu0 0
        %1576 = vmatprep.subr.bf16.mxu0 0
        %1577 = vmatpush1.bf16.msra.mxu0 0
        %1578 = vmatprep.subr.bf16.mxu0 0
        %1579 = vmatpush1.bf16.msra.mxu0 0
        %1580 = vmatprep.subr.bf16.mxu0 0
        %1581 = vmatpush1.bf16.msra.mxu0 0
        %1582 = vmatprep.subr.bf16.mxu0 0
        %1583 = vmatpush1.bf16.msra.mxu0 0
        %1584 = vmatprep.subr.bf16.mxu0 0
        %1585 = vmatpush1.bf16.msra.mxu0 0
        %1586 = vmatprep.subr.bf16.mxu0 0
        %1587 = vmatpush1.bf16.msra.mxu0 0
        %1588 = vmatprep.subr.bf16.mxu0 0
        %1589 = vmatpush1.bf16.msra.mxu0 0
        %1590 = vmatprep.subr.bf16.mxu0 0
        %1591 = vmatpush1.bf16.msra.mxu0 0
        %1592 = vmatprep.subr.bf16.mxu0 0
        %1593 = vmatpush1.bf16.msra.mxu0 0
        %1594 = vmatprep.subr.bf16.mxu0 0
        %1595 = vmatpush1.bf16.msra.mxu0 0
        %1596 = vmatprep.subr.bf16.mxu0 0
        %1597 = vmatpush1.bf16.msra.mxu0 0
        %1598 = vmatprep.mubr.bf16.mxu0 0
        %1599 = vmatmul.mubr.bf16.gmra.mrb[0].mxu0 %v1561
        %v1600 = vpop.f32.mrb[0].mxu0
        %v1601 = vadd.f32 0.0, %v1600
        %v1602 = vpop.f32.mrb[0].mxu0
        %v1603 = vpop.f32.mrb[0].mxu0
        %v1604 = vadd.f32 0.0, %v1603
        %v1605 = vpop.f32.mrb[0].mxu0
        %1606 = vmatprep.mubr.bf16.mxu0 0
        %1607 = vmatmul.mubr.bf16.gmra.mrb[0].mxu0 %v1564
        %v1608 = vpop.f32.mrb[0].mxu0
        %v1609 = vadd.f32 0.0, %v1608
        %v1610 = vpop.f32.mrb[0].mxu0
        %v1611 = vpop.f32.mrb[0].mxu0
        %v1612 = vadd.f32 0.0, %v1611
        %v1613 = vpop.f32.mrb[0].mxu0
        %1614 = vdwg.mxu0
        %v1615 = vpack.c.bf16 %v1332, %v1328
        %v1616 = vpack.c.bf16 %v1342, %v1338
        %v1617 = vpack.c.bf16 %v1385, %v1381
        %v1618 = vpack.c.bf16 %v1395, %v1391
        %v1619 = vpack.c.bf16 %v1438, %v1434
        %v1620 = vpack.c.bf16 %v1448, %v1444
        %1621 = vmatprep.subr.bf16.mxu0 0
        %1622 = vmatpush1.bf16.xpose.msra.mxu0 %v1617
        %1623 = vmatprep.subr.bf16.mxu0 0
        %1624 = vmatpush1.bf16.xpose.msra.mxu0 %v1618
        %1625 = vmatprep.subr.bf16.mxu0 0
        %1626 = vmatpush1.bf16.xpose.msra.mxu0 0
        %1627 = vmatprep.subr.bf16.mxu0 0
        %1628 = vmatpush1.bf16.xpose.msra.mxu0 0
        %1629 = vmatprep.subr.bf16.mxu0 0
        %1630 = vmatpush1.bf16.xpose.msra.mxu0 0
        %1631 = vmatprep.subr.bf16.mxu0 0
        %1632 = vmatpush1.bf16.xpose.msra.mxu0 0
        %1633 = vmatprep.subr.bf16.mxu0 0
        %1634 = vmatpush1.bf16.xpose.msra.mxu0 0
        %1635 = vmatprep.subr.bf16.mxu0 0
        %1636 = vmatpush1.bf16.xpose.msra.mxu0 0
        %1637 = vmatprep.subr.bf16.mxu0 0
        %1638 = vmatpush1.bf16.xpose.msra.mxu0 0
        %1639 = vmatprep.subr.bf16.mxu0 0
        %1640 = vmatpush1.bf16.xpose.msra.mxu0 0
        %1641 = vmatprep.subr.bf16.mxu0 0
        %1642 = vmatpush1.bf16.xpose.msra.mxu0 0
        %1643 = vmatprep.subr.bf16.mxu0 0
        %1644 = vmatpush1.bf16.xpose.msra.mxu0 0
        %1645 = vmatprep.subr.bf16.mxu0 0
        %1646 = vmatpush1.bf16.xpose.msra.mxu0 0
        %1647 = vmatprep.subr.bf16.mxu0 0
        %1648 = vmatpush1.bf16.xpose.msra.mxu0 0
        %1649 = vmatprep.subr.bf16.mxu0 0
        %1650 = vmatpush1.bf16.xpose.msra.mxu0 0
        %1651 = vmatprep.subr.bf16.mxu0 0
        %1652 = vmatpush1.bf16.xpose.msra.mxu0 0
        %1653 = vmatprep.mubr.bf16.mxu0 0
        %1654 = vmatmul.mubr.bf16.gmra.mrb[0].mxu0 %v1615
        %v1655 = vpop.f32.mrb[0].mxu0
        %v1656 = vadd.f32 0.0, %v1655
        %v1657 = vpop.f32.mrb[0].mxu0
        %v1658 = vpop.f32.mrb[0].mxu0
        %v1659 = vadd.f32 0.0, %v1658
        %v1660 = vpop.f32.mrb[0].mxu0
        %1661 = vmatprep.mubr.bf16.mxu0 0
        %1662 = vmatmul.mubr.bf16.gmra.mrb[0].mxu0 %v1616
        %v1663 = vpop.f32.mrb[0].mxu0
        %v1664 = vadd.f32 0.0, %v1663
        %v1665 = vpop.f32.mrb[0].mxu0
        %v1666 = vpop.f32.mrb[0].mxu0
        %v1667 = vadd.f32 0.0, %v1666
        %v1668 = vpop.f32.mrb[0].mxu0
        %1669 = vdwg.mxu0
        %v1670 = vmul.f32 %v1656, 0.10206208
        %v1671 = vmul.f32 %v1659, 0.10206208
        %v1672 = vmul.f32 %v1664, 0.10206208
        %v1673 = vmul.f32 %v1667, 0.10206208
        %v1674 = vsel %vm812, %v1670, -1e+30
        %v1675 = vsel %vm813, %v1671, -1e+30
        %v1676 = vsel %vm814, %v1672, -1e+30
        %v1677 = vsel %vm815, %v1673, -1e+30
        %v1678 = vsel %vm1513, %v1674, -inf
        %1679 = vmax.xlane.f32.xlu0 %v1678
        %v1680 = vpop.xlane.xlu0 %1679
        %v1681 = vsel %vm1513, %v1675, -inf
        %1682 = vmax.xlane.f32.xlu0 %v1681
        %v1683 = vpop.xlane.xlu0 %1682
        %v1684 = vsel %vm1513, %v1676, -inf
        %1685 = vmax.xlane.f32.xlu0 %v1684
        %v1686 = vpop.xlane.xlu0 %1685
        %v1687 = vsel %vm1513, %v1677, -inf
        %1688 = vmax.xlane.f32.xlu0 %v1687
        %v1689 = vpop.xlane.xlu0 %1688
        %v1690 = vsub.f32 %v1674, %v1680
        %v1691 = vsub.f32 %v1675, %v1683
        %v1692 = vsub.f32 %v1676, %v1686
        %v1693 = vsub.f32 %v1677, %v1689
        %v1694 = vmul.f32 %v1690, 1.442695
        %v1695 = vpow.pop %v1694
        %v1696 = vmul.f32 %v1691, 1.442695
        %v1697 = vpow.pop %v1696
        %v1698 = vmul.f32 %v1692, 1.442695
        %v1699 = vpow.pop %v1698
        %v1700 = vmul.f32 %v1693, 1.442695
        %v1701 = vpow.pop %v1700
        %v1702 = vsel %vm1513, %v1695, 0.0
        %1703 = vadd.xlane.f32.xlu0 %v1702
        %v1704 = vpop.xlane.xlu0 %1703
        %v1705 = vsel %vm1513, %v1697, 0.0
        %1706 = vadd.xlane.f32.xlu0 %v1705
        %v1707 = vpop.xlane.xlu0 %1706
        %v1708 = vsel %vm1513, %v1699, 0.0
        %1709 = vadd.xlane.f32.xlu0 %v1708
        %v1710 = vpop.xlane.xlu0 %1709
        %v1711 = vsel %vm1513, %v1701, 0.0
        %1712 = vadd.xlane.f32.xlu0 %v1711
        %v1713 = vpop.xlane.xlu0 %1712
        %v1714 = vrcp.pop %v1704
        %v1715 = vrcp.pop %v1707
        %v1716 = vrcp.pop %v1710
        %v1717 = vrcp.pop %v1713
        %v1718 = vmul.f32 %v1695, %v1714
        %v1719 = vmul.f32 %v1697, %v1715
        %v1720 = vmul.f32 %v1699, %v1716
        %v1721 = vmul.f32 %v1701, %v1717
        %v1722 = vpack.c.bf16 %v1719, %v1718
        %v1723 = vpack.c.bf16 %v1721, %v1720
        %v1725 = vsel %vm1513, %v1722, 0
        %v1728 = vsel %vm1513, %v1723, 0
        %1730 = vmatprep.subr.bf16.mxu0 0
        %1731 = vmatpush1.bf16.msra.mxu0 %v1619
        %1732 = vmatprep.subr.bf16.mxu0 0
        %1733 = vmatpush1.bf16.msra.mxu0 %v1620
        %1734 = vmatprep.subr.bf16.mxu0 0
        %1735 = vmatpush1.bf16.msra.mxu0 0
        %1736 = vmatprep.subr.bf16.mxu0 0
        %1737 = vmatpush1.bf16.msra.mxu0 0
        %1738 = vmatprep.subr.bf16.mxu0 0
        %1739 = vmatpush1.bf16.msra.mxu0 0
        %1740 = vmatprep.subr.bf16.mxu0 0
        %1741 = vmatpush1.bf16.msra.mxu0 0
        %1742 = vmatprep.subr.bf16.mxu0 0
        %1743 = vmatpush1.bf16.msra.mxu0 0
        %1744 = vmatprep.subr.bf16.mxu0 0
        %1745 = vmatpush1.bf16.msra.mxu0 0
        %1746 = vmatprep.subr.bf16.mxu0 0
        %1747 = vmatpush1.bf16.msra.mxu0 0
        %1748 = vmatprep.subr.bf16.mxu0 0
        %1749 = vmatpush1.bf16.msra.mxu0 0
        %1750 = vmatprep.subr.bf16.mxu0 0
        %1751 = vmatpush1.bf16.msra.mxu0 0
        %1752 = vmatprep.subr.bf16.mxu0 0
        %1753 = vmatpush1.bf16.msra.mxu0 0
        %1754 = vmatprep.subr.bf16.mxu0 0
        %1755 = vmatpush1.bf16.msra.mxu0 0
        %1756 = vmatprep.subr.bf16.mxu0 0
        %1757 = vmatpush1.bf16.msra.mxu0 0
        %1758 = vmatprep.subr.bf16.mxu0 0
        %1759 = vmatpush1.bf16.msra.mxu0 0
        %1760 = vmatprep.subr.bf16.mxu0 0
        %1761 = vmatpush1.bf16.msra.mxu0 0
        %1762 = vmatprep.mubr.bf16.mxu0 0
        %1763 = vmatmul.mubr.bf16.gmra.mrb[0].mxu0 %v1725
        %v1764 = vpop.f32.mrb[0].mxu0
        %v1765 = vadd.f32 0.0, %v1764
        %v1766 = vpop.f32.mrb[0].mxu0
        %v1767 = vpop.f32.mrb[0].mxu0
        %v1768 = vadd.f32 0.0, %v1767
        %v1769 = vpop.f32.mrb[0].mxu0
        %1770 = vmatprep.mubr.bf16.mxu0 0
        %1771 = vmatmul.mubr.bf16.gmra.mrb[0].mxu0 %v1728
        %v1772 = vpop.f32.mrb[0].mxu0
        %v1773 = vadd.f32 0.0, %v1772
        %v1774 = vpop.f32.mrb[0].mxu0
        %v1775 = vpop.f32.mrb[0].mxu0
        %v1776 = vadd.f32 0.0, %v1775
        %v1777 = vpop.f32.mrb[0].mxu0
        %1778 = vdwg.mxu0
        %v1779 = vpack.c.bf16 %v1604, %v1601
        %v1780 = vpack.c.bf16 %v1768, %v1765
        %v1781 = vpack.c.bf16 %v1612, %v1609
        %v1782 = vpack.c.bf16 %v1776, %v1773
        %v1783 = vld [vmem:[%s719] sm:$0xff]
        %v1784 = vld [vmem:[%s719 + $0x8] sm:$0xff]
        %v1785 = vld [vmem:[%s719 + $0x10] sm:$0xff]
        %v1786 = vld [vmem:[%s719 + $0x18] sm:$0xff]
        %v1787 = vld [vmem:[%s719 + $0x20] sm:$0xff]
        %v1788 = vld [vmem:[%s719 + $0x28] sm:$0xff]
        %v1789 = vld [vmem:[%s719 + $0x30] sm:$0xff]
        %v1790 = vld [vmem:[%s719 + $0x38] sm:$0xff]
        %v1791 = vld [vmem:[%s719 + $0x40] sm:$0xff]
        %v1792 = vld [vmem:[%s719 + $0x48] sm:$0xff]
        %v1793 = vld [vmem:[%s719 + $0x50] sm:$0xff]
        %v1794 = vld [vmem:[%s719 + $0x58] sm:$0xff]
        %v1795 = vld [vmem:[%s719 + $0x60] sm:$0xff]
        %v1796 = vld [vmem:[%s719 + $0x68] sm:$0xff]
        %v1797 = vld [vmem:[%s719 + $0x70] sm:$0xff]
        %v1798 = vld [vmem:[%s719 + $0x78] sm:$0xff]
        %v1799 = vld [vmem:[%s719 + $0x80] sm:$0xff]
        %v1800 = vld [vmem:[%s719 + $0x88] sm:$0xff]
        %v1801 = vld [vmem:[%s719 + $0x90] sm:$0xff]
        %v1802 = vld [vmem:[%s719 + $0x98] sm:$0xff]
        %v1803 = vld [vmem:[%s719 + $0xa0] sm:$0xff]
        %v1804 = vld [vmem:[%s719 + $0xa8] sm:$0xff]
        %v1805 = vld [vmem:[%s719 + $0xb0] sm:$0xff]
        %v1806 = vld [vmem:[%s719 + $0xb8] sm:$0xff]
        %v1807 = vld [vmem:[%s719 + $0xc0] sm:$0xff]
        %v1808 = vld [vmem:[%s719 + $0xc8] sm:$0xff]
        %v1809 = vld [vmem:[%s719 + $0xd0] sm:$0xff]
        %v1810 = vld [vmem:[%s719 + $0xd8] sm:$0xff]
        %v1811 = vld [vmem:[%s719 + $0xe0] sm:$0xff]
        %v1812 = vld [vmem:[%s719 + $0xe8] sm:$0xff]
        %v1813 = vld [vmem:[%s719 + $0xf0] sm:$0xff]
        %v1814 = vld [vmem:[%s719 + $0xf8] sm:$0xff]
        %v1815 = vld [vmem:[%s723] sm:$0x3]
        %v1817 = vlaneseq
        %v1818 = vshrl.u32 %v1817, 7
        %v1819 = vsub.s32 0, %v1818
        %v1820 = vrot.slane %v1815, %v1819
        %v1821 = vlaneseq
        %v1822 = vshrl.u32 %v1821, 7
        %v1823 = vsub.s32 1, %v1822
        %v1824 = vrot.slane %v1815, %v1823
        %v1859 = vunpack.c.l.b16 %v1783
        %v1860 = vunpack.c.h.b16 %v1783
        %v1861 = vunpack.c.l.b16 %v1784
        %v1862 = vunpack.c.h.b16 %v1784
        %v1863 = vunpack.c.l.b16 %v1785
        %v1864 = vunpack.c.h.b16 %v1785
        %v1865 = vunpack.c.l.b16 %v1786
        %v1866 = vunpack.c.h.b16 %v1786
        %v1867 = vunpack.c.l.b16 %v1787
        %v1868 = vunpack.c.h.b16 %v1787
        %v1869 = vunpack.c.l.b16 %v1788
        %v1870 = vunpack.c.h.b16 %v1788
        %v1871 = vunpack.c.l.b16 %v1789
        %v1872 = vunpack.c.h.b16 %v1789
        %v1873 = vunpack.c.l.b16 %v1790
        %v1874 = vunpack.c.h.b16 %v1790
        %v1875 = vunpack.c.l.b16 %v1791
        %v1876 = vunpack.c.h.b16 %v1791
        %v1877 = vunpack.c.l.b16 %v1792
        %v1878 = vunpack.c.h.b16 %v1792
        %v1879 = vunpack.c.l.b16 %v1793
        %v1880 = vunpack.c.h.b16 %v1793
        %v1881 = vunpack.c.l.b16 %v1794
        %v1882 = vunpack.c.h.b16 %v1794
        %v1883 = vunpack.c.l.b16 %v1795
        %v1884 = vunpack.c.h.b16 %v1795
        %v1885 = vunpack.c.l.b16 %v1796
        %v1886 = vunpack.c.h.b16 %v1796
        %v1887 = vunpack.c.l.b16 %v1797
        %v1888 = vunpack.c.h.b16 %v1797
        %v1889 = vunpack.c.l.b16 %v1798
        %v1890 = vunpack.c.h.b16 %v1798
        %v1891 = vunpack.c.l.b16 %v1799
        %v1892 = vunpack.c.h.b16 %v1799
        %v1893 = vunpack.c.l.b16 %v1800
        %v1894 = vunpack.c.h.b16 %v1800
        %v1895 = vunpack.c.l.b16 %v1801
        %v1896 = vunpack.c.h.b16 %v1801
        %v1897 = vunpack.c.l.b16 %v1802
        %v1898 = vunpack.c.h.b16 %v1802
        %v1899 = vunpack.c.l.b16 %v1803
        %v1900 = vunpack.c.h.b16 %v1803
        %v1901 = vunpack.c.l.b16 %v1804
        %v1902 = vunpack.c.h.b16 %v1804
        %v1903 = vunpack.c.l.b16 %v1805
        %v1904 = vunpack.c.h.b16 %v1805
        %v1905 = vunpack.c.l.b16 %v1806
        %v1906 = vunpack.c.h.b16 %v1806
        %v1907 = vunpack.c.l.b16 %v1807
        %v1908 = vunpack.c.h.b16 %v1807
        %v1909 = vunpack.c.l.b16 %v1808
        %v1910 = vunpack.c.h.b16 %v1808
        %v1911 = vunpack.c.l.b16 %v1809
        %v1912 = vunpack.c.h.b16 %v1809
        %v1913 = vunpack.c.l.b16 %v1810
        %v1914 = vunpack.c.h.b16 %v1810
        %v1915 = vunpack.c.l.b16 %v1811
        %v1916 = vunpack.c.h.b16 %v1811
        %v1917 = vunpack.c.l.b16 %v1812
        %v1918 = vunpack.c.h.b16 %v1812
        %v1919 = vunpack.c.l.b16 %v1813
        %v1920 = vunpack.c.h.b16 %v1813
        %v1921 = vunpack.c.l.b16 %v1814
        %v1922 = vunpack.c.h.b16 %v1814
        %v1923 = vpack.c.b16 %v1861, %v1859
        %v1924 = vpack.c.b16 %v1862, %v1860
        %v1925 = vpack.c.b16 %v1865, %v1863
        %v1926 = vpack.c.b16 %v1866, %v1864
        %v1927 = vpack.c.b16 %v1869, %v1867
        %v1928 = vpack.c.b16 %v1870, %v1868
        %v1929 = vpack.c.b16 %v1873, %v1871
        %v1930 = vpack.c.b16 %v1874, %v1872
        %v1931 = vpack.c.b16 %v1877, %v1875
        %v1932 = vpack.c.b16 %v1878, %v1876
        %v1933 = vpack.c.b16 %v1881, %v1879
        %v1934 = vpack.c.b16 %v1882, %v1880
        %v1935 = vpack.c.b16 %v1885, %v1883
        %v1936 = vpack.c.b16 %v1886, %v1884
        %v1937 = vpack.c.b16 %v1889, %v1887
        %v1938 = vpack.c.b16 %v1890, %v1888
        %v1939 = vpack.c.b16 %v1893, %v1891
        %v1940 = vpack.c.b16 %v1894, %v1892
        %v1941 = vpack.c.b16 %v1897, %v1895
        %v1942 = vpack.c.b16 %v1898, %v1896
        %v1943 = vpack.c.b16 %v1901, %v1899
        %v1944 = vpack.c.b16 %v1902, %v1900
        %v1945 = vpack.c.b16 %v1905, %v1903
        %v1946 = vpack.c.b16 %v1906, %v1904
        %v1947 = vpack.c.b16 %v1909, %v1907
        %v1948 = vpack.c.b16 %v1910, %v1908
        %v1949 = vpack.c.b16 %v1913, %v1911
        %v1950 = vpack.c.b16 %v1914, %v1912
        %v1951 = vpack.c.b16 %v1917, %v1915
        %v1952 = vpack.c.b16 %v1918, %v1916
        %v1953 = vpack.c.b16 %v1921, %v1919
        %v1954 = vpack.c.b16 %v1922, %v1920
        %1987 = vmatprep.subr.bf16.mxu0 %v1924
        %1988 = vmatpush1.bf16.msra.mxu0 %v1923
        %1989 = vmatprep.subr.bf16.mxu0 %v1926
        %1990 = vmatpush1.bf16.msra.mxu0 %v1925
        %1991 = vmatprep.subr.bf16.mxu0 %v1928
        %1992 = vmatpush1.bf16.msra.mxu0 %v1927
        %1993 = vmatprep.subr.bf16.mxu0 %v1930
        %1994 = vmatpush1.bf16.msra.mxu0 %v1929
        %1995 = vmatprep.subr.bf16.mxu0 %v1932
        %1996 = vmatpush1.bf16.msra.mxu0 %v1931
        %1997 = vmatprep.subr.bf16.mxu0 %v1934
        %1998 = vmatpush1.bf16.msra.mxu0 %v1933
        %1999 = vmatprep.subr.bf16.mxu0 %v1936
        %2000 = vmatpush1.bf16.msra.mxu0 %v1935
        %2001 = vmatprep.subr.bf16.mxu0 %v1938
        %2002 = vmatpush1.bf16.msra.mxu0 %v1937
        %2003 = vmatprep.subr.bf16.mxu0 %v1940
        %2004 = vmatpush1.bf16.msra.mxu0 %v1939
        %2005 = vmatprep.subr.bf16.mxu0 %v1942
        %2006 = vmatpush1.bf16.msra.mxu0 %v1941
        %2007 = vmatprep.subr.bf16.mxu0 %v1944
        %2008 = vmatpush1.bf16.msra.mxu0 %v1943
        %2009 = vmatprep.subr.bf16.mxu0 %v1946
        %2010 = vmatpush1.bf16.msra.mxu0 %v1945
        %2011 = vmatprep.subr.bf16.mxu0 %v1948
        %2012 = vmatpush1.bf16.msra.mxu0 %v1947
        %2013 = vmatprep.subr.bf16.mxu0 %v1950
        %2014 = vmatpush1.bf16.msra.mxu0 %v1949
        %2015 = vmatprep.subr.bf16.mxu0 %v1952
        %2016 = vmatpush1.bf16.msra.mxu0 %v1951
        %2017 = vmatprep.subr.bf16.mxu0 %v1954
        %2018 = vmatpush1.bf16.msra.mxu0 %v1953
        %2019 = vmatprep.mubr.bf16.mxu0 %v1780
        %2020 = vmatmul.mubr.bf16.gmra.mrb[0].mxu0 %v1779
        %v2021 = vpop.f32.mrb[0].mxu0
        %v2022 = vadd.f32 %v1820, %v2021
        %v2023 = vpop.f32.mrb[0].mxu0
        %v2024 = vadd.f32 %v1824, %v2023
        %v2025 = vpop.f32.mrb[0].mxu0
        %v2026 = vadd.f32 %v1820, %v2025
        %v2027 = vpop.f32.mrb[0].mxu0
        %v2028 = vadd.f32 %v1824, %v2027
        %2029 = vmatprep.mubr.bf16.mxu0 %v1782
        %2030 = vmatmul.mubr.bf16.gmra.mrb[0].mxu0 %v1781
        %v2031 = vpop.f32.mrb[0].mxu0
        %v2032 = vadd.f32 %v1820, %v2031
        %v2033 = vpop.f32.mrb[0].mxu0
        %v2034 = vadd.f32 %v1824, %v2033
        %v2035 = vpop.f32.mrb[0].mxu0
        %v2036 = vadd.f32 %v1820, %v2035
        %v2037 = vpop.f32.mrb[0].mxu0
        %v2038 = vadd.f32 %v1824, %v2037
        %2039 = vdwg.mxu0
        %v2040 = vadd.f32 %v792, %v2022
        %v2041 = vadd.f32 %v793, %v2024
        %v2042 = vadd.f32 %v794, %v2026
        %v2043 = vadd.f32 %v795, %v2028
        %v2044 = vadd.f32 %v796, %v2032
        %v2045 = vadd.f32 %v797, %v2034
        %v2046 = vadd.f32 %v798, %v2036
        %v2047 = vadd.f32 %v799, %v2038
        %v2048 = vld [vmem:[%s727] sm:$0x3]
        %v2049 = vld [vmem:[%s731] sm:$0x3]
        %v2050 = vsel %vm1284, %v2041, 0.0
        %v2051 = vadd.f32 %v2040, %v2050
        %2052 = vadd.xlane.f32.xlu0 %v2051
        %v2053 = vpop.xlane.xlu0 %2052
        %v2054 = vsel %vm1284, %v2043, 0.0
        %v2055 = vadd.f32 %v2042, %v2054
        %2056 = vadd.xlane.f32.xlu0 %v2055
        %v2057 = vpop.xlane.xlu0 %2056
        %v2058 = vsel %vm1284, %v2045, 0.0
        %v2059 = vadd.f32 %v2044, %v2058
        %2060 = vadd.xlane.f32.xlu0 %v2059
        %v2061 = vpop.xlane.xlu0 %2060
        %v2062 = vsel %vm1284, %v2047, 0.0
        %v2063 = vadd.f32 %v2046, %v2062
        %2064 = vadd.xlane.f32.xlu0 %v2063
        %v2065 = vpop.xlane.xlu0 %2064
        %v2066 = vrcp.pop 192.0
        %v2067 = vmul.f32 %v2053, %v2066
        %v2068 = vmul.f32 %v2057, %v2066
        %v2069 = vmul.f32 %v2061, %v2066
        %v2070 = vmul.f32 %v2065, %v2066
        %v2071 = vsub.f32 %v2040, %v2067
        %v2072 = vsub.f32 %v2041, %v2067
        %v2073 = vsub.f32 %v2042, %v2068
        %v2074 = vsub.f32 %v2043, %v2068
        %v2075 = vsub.f32 %v2044, %v2069
        %v2076 = vsub.f32 %v2045, %v2069
        %v2077 = vsub.f32 %v2046, %v2070
        %v2078 = vsub.f32 %v2047, %v2070
        %v2079 = vmul.f32 %v2071, %v2071
        %v2080 = vmul.f32 %v2072, %v2072
        %v2081 = vmul.f32 %v2073, %v2073
        %v2082 = vmul.f32 %v2074, %v2074
        %v2083 = vmul.f32 %v2075, %v2075
        %v2084 = vmul.f32 %v2076, %v2076
        %v2085 = vmul.f32 %v2077, %v2077
        %v2086 = vmul.f32 %v2078, %v2078
        %v2087 = vsel %vm1284, %v2080, 0.0
        %v2088 = vadd.f32 %v2079, %v2087
        %2089 = vadd.xlane.f32.xlu0 %v2088
        %v2090 = vpop.xlane.xlu0 %2089
        %v2091 = vsel %vm1284, %v2082, 0.0
        %v2092 = vadd.f32 %v2081, %v2091
        %2093 = vadd.xlane.f32.xlu0 %v2092
        %v2094 = vpop.xlane.xlu0 %2093
        %v2095 = vsel %vm1284, %v2084, 0.0
        %v2096 = vadd.f32 %v2083, %v2095
        %2097 = vadd.xlane.f32.xlu0 %v2096
        %v2098 = vpop.xlane.xlu0 %2097
        %v2099 = vsel %vm1284, %v2086, 0.0
        %v2100 = vadd.f32 %v2085, %v2099
        %2101 = vadd.xlane.f32.xlu0 %v2100
        %v2102 = vpop.xlane.xlu0 %2101
        %v2103 = vmul.f32 %v2090, %v2066
        %v2104 = vmul.f32 %v2094, %v2066
        %v2105 = vmul.f32 %v2098, %v2066
        %v2106 = vmul.f32 %v2102, %v2066
        %v2107 = vadd.f32 %v2103, 1e-05
        %v2108 = vadd.f32 %v2104, 1e-05
        %v2109 = vadd.f32 %v2105, 1e-05
        %v2110 = vadd.f32 %v2106, 1e-05
        %v2111 = vrsqrt.pop %v2107
        %v2112 = vrsqrt.pop %v2108
        %v2113 = vrsqrt.pop %v2109
        %v2114 = vrsqrt.pop %v2110
        %v2115 = vmul.f32 %v2071, %v2111
        %v2116 = vmul.f32 %v2072, %v2111
        %v2117 = vmul.f32 %v2073, %v2112
        %v2118 = vmul.f32 %v2074, %v2112
        %v2119 = vmul.f32 %v2075, %v2113
        %v2120 = vmul.f32 %v2076, %v2113
        %v2121 = vmul.f32 %v2077, %v2114
        %v2122 = vmul.f32 %v2078, %v2114
        %v2124 = vlaneseq
        %v2125 = vshrl.u32 %v2124, 7
        %v2126 = vsub.s32 0, %v2125
        %v2127 = vrot.slane %v2048, %v2126
        %v2128 = vlaneseq
        %v2129 = vshrl.u32 %v2128, 7
        %v2130 = vsub.s32 1, %v2129
        %v2131 = vrot.slane %v2048, %v2130
        %v2134 = vmul.f32 %v2115, %v2127
        %v2135 = vmul.f32 %v2116, %v2131
        %v2136 = vmul.f32 %v2117, %v2127
        %v2137 = vmul.f32 %v2118, %v2131
        %v2138 = vmul.f32 %v2119, %v2127
        %v2139 = vmul.f32 %v2120, %v2131
        %v2140 = vmul.f32 %v2121, %v2127
        %v2141 = vmul.f32 %v2122, %v2131
        %v2143 = vlaneseq
        %v2144 = vshrl.u32 %v2143, 7
        %v2145 = vsub.s32 0, %v2144
        %v2146 = vrot.slane %v2049, %v2145
        %v2147 = vlaneseq
        %v2148 = vshrl.u32 %v2147, 7
        %v2149 = vsub.s32 1, %v2148
        %v2150 = vrot.slane %v2049, %v2149
        %v2153 = vadd.f32 %v2134, %v2146
        %v2154 = vadd.f32 %v2135, %v2150
        %v2155 = vadd.f32 %v2136, %v2146
        %v2156 = vadd.f32 %v2137, %v2150
        %v2157 = vadd.f32 %v2138, %v2146
        %v2158 = vadd.f32 %v2139, %v2150
        %v2159 = vadd.f32 %v2140, %v2146
        %v2160 = vadd.f32 %v2141, %v2150
        %v2161 = vpack.c.bf16 %v2155, %v2153
        %v2162 = vpack.c.bf16 %v2156, %v2154
        %v2163 = vpack.c.bf16 %v2159, %v2157
        %v2164 = vpack.c.bf16 %v2160, %v2158
        %v2165 = vld [vmem:[%s736] sm:$0xff]
        %v2166 = vld [vmem:[%s736 + $0x8] sm:$0xff]
        %v2167 = vld [vmem:[%s736 + $0x10] sm:$0xff]
        %v2168 = vld [vmem:[%s736 + $0x18] sm:$0xff]
        %v2169 = vld [vmem:[%s736 + $0x20] sm:$0xff]
        %v2170 = vld [vmem:[%s736 + $0x28] sm:$0xff]
        %v2171 = vld [vmem:[%s736 + $0x30] sm:$0xff]
        %v2172 = vld [vmem:[%s736 + $0x38] sm:$0xff]
        %v2173 = vld [vmem:[%s736 + $0x40] sm:$0xff]
        %v2174 = vld [vmem:[%s736 + $0x48] sm:$0xff]
        %v2175 = vld [vmem:[%s736 + $0x50] sm:$0xff]
        %v2176 = vld [vmem:[%s736 + $0x58] sm:$0xff]
        %v2177 = vld [vmem:[%s736 + $0x60] sm:$0xff]
        %v2178 = vld [vmem:[%s736 + $0x68] sm:$0xff]
        %v2179 = vld [vmem:[%s736 + $0x70] sm:$0xff]
        %v2180 = vld [vmem:[%s736 + $0x78] sm:$0xff]
        %v2181 = vld [vmem:[%s736 + $0x80] sm:$0xff]
        %v2182 = vld [vmem:[%s736 + $0x88] sm:$0xff]
        %v2183 = vld [vmem:[%s736 + $0x90] sm:$0xff]
        %v2184 = vld [vmem:[%s736 + $0x98] sm:$0xff]
        %v2185 = vld [vmem:[%s736 + $0xa0] sm:$0xff]
        %v2186 = vld [vmem:[%s736 + $0xa8] sm:$0xff]
        %v2187 = vld [vmem:[%s736 + $0xb0] sm:$0xff]
        %v2188 = vld [vmem:[%s736 + $0xb8] sm:$0xff]
        %v2189 = vld [vmem:[%s736 + $0xc0] sm:$0xff]
        %v2190 = vld [vmem:[%s736 + $0xc8] sm:$0xff]
        %v2191 = vld [vmem:[%s736 + $0xd0] sm:$0xff]
        %v2192 = vld [vmem:[%s736 + $0xd8] sm:$0xff]
        %v2193 = vld [vmem:[%s736 + $0xe0] sm:$0xff]
        %v2194 = vld [vmem:[%s736 + $0xe8] sm:$0xff]
        %v2195 = vld [vmem:[%s736 + $0xf0] sm:$0xff]
        %v2196 = vld [vmem:[%s736 + $0xf8] sm:$0xff]
        %v2197 = vld [vmem:[%s736 + $0x100] sm:$0xff]
        %v2198 = vld [vmem:[%s736 + $0x108] sm:$0xff]
        %v2199 = vld [vmem:[%s736 + $0x110] sm:$0xff]
        %v2200 = vld [vmem:[%s736 + $0x118] sm:$0xff]
        %v2201 = vld [vmem:[%s736 + $0x120] sm:$0xff]
        %v2202 = vld [vmem:[%s736 + $0x128] sm:$0xff]
        %v2203 = vld [vmem:[%s736 + $0x130] sm:$0xff]
        %v2204 = vld [vmem:[%s736 + $0x138] sm:$0xff]
        %v2205 = vld [vmem:[%s736 + $0x140] sm:$0xff]
        %v2206 = vld [vmem:[%s736 + $0x148] sm:$0xff]
        %v2207 = vld [vmem:[%s736 + $0x150] sm:$0xff]
        %v2208 = vld [vmem:[%s736 + $0x158] sm:$0xff]
        %v2209 = vld [vmem:[%s736 + $0x160] sm:$0xff]
        %v2210 = vld [vmem:[%s736 + $0x168] sm:$0xff]
        %v2211 = vld [vmem:[%s736 + $0x170] sm:$0xff]
        %v2212 = vld [vmem:[%s736 + $0x178] sm:$0xff]
        %v2213 = vld [vmem:[%s736 + $0x180] sm:$0xff]
        %v2214 = vld [vmem:[%s736 + $0x188] sm:$0xff]
        %v2215 = vld [vmem:[%s736 + $0x190] sm:$0xff]
        %v2216 = vld [vmem:[%s736 + $0x198] sm:$0xff]
        %v2217 = vld [vmem:[%s736 + $0x1a0] sm:$0xff]
        %v2218 = vld [vmem:[%s736 + $0x1a8] sm:$0xff]
        %v2219 = vld [vmem:[%s736 + $0x1b0] sm:$0xff]
        %v2220 = vld [vmem:[%s736 + $0x1b8] sm:$0xff]
        %v2221 = vld [vmem:[%s736 + $0x1c0] sm:$0xff]
        %v2222 = vld [vmem:[%s736 + $0x1c8] sm:$0xff]
        %v2223 = vld [vmem:[%s736 + $0x1d0] sm:$0xff]
        %v2224 = vld [vmem:[%s736 + $0x1d8] sm:$0xff]
        %v2225 = vld [vmem:[%s736 + $0x1e0] sm:$0xff]
        %v2226 = vld [vmem:[%s736 + $0x1e8] sm:$0xff]
        %v2227 = vld [vmem:[%s736 + $0x1f0] sm:$0xff]
        %v2228 = vld [vmem:[%s736 + $0x1f8] sm:$0xff]
        %v2229 = vld [vmem:[%s736 + $0x200] sm:$0xff]
        %v2230 = vld [vmem:[%s736 + $0x208] sm:$0xff]
        %v2231 = vld [vmem:[%s736 + $0x210] sm:$0xff]
        %v2232 = vld [vmem:[%s736 + $0x218] sm:$0xff]
        %v2233 = vld [vmem:[%s736 + $0x220] sm:$0xff]
        %v2234 = vld [vmem:[%s736 + $0x228] sm:$0xff]
        %v2235 = vld [vmem:[%s736 + $0x230] sm:$0xff]
        %v2236 = vld [vmem:[%s736 + $0x238] sm:$0xff]
        %v2237 = vld [vmem:[%s740] sm:$0x3f]
        %v2239 = vlaneseq
        %v2240 = vshrl.u32 %v2239, 7
        %v2241 = vsub.s32 0, %v2240
        %v2242 = vrot.slane %v2237, %v2241
        %v2243 = vlaneseq
        %v2244 = vshrl.u32 %v2243, 7
        %v2245 = vsub.s32 1, %v2244
        %v2246 = vrot.slane %v2237, %v2245
        %v2247 = vlaneseq
        %v2248 = vshrl.u32 %v2247, 7
        %v2249 = vsub.s32 2, %v2248
        %v2250 = vrot.slane %v2237, %v2249
        %v2251 = vlaneseq
        %v2252 = vshrl.u32 %v2251, 7
        %v2253 = vsub.s32 3, %v2252
        %v2254 = vrot.slane %v2237, %v2253
        %v2255 = vlaneseq
        %v2256 = vshrl.u32 %v2255, 7
        %v2257 = vsub.s32 4, %v2256
        %v2258 = vrot.slane %v2237, %v2257
        %v2259 = vlaneseq
        %v2260 = vshrl.u32 %v2259, 7
        %v2261 = vsub.s32 5, %v2260
        %v2262 = vrot.slane %v2237, %v2261
        %v2341 = vunpack.c.l.b16 %v2165
        %v2342 = vunpack.c.h.b16 %v2165
        %v2343 = vunpack.c.l.b16 %v2166
        %v2344 = vunpack.c.h.b16 %v2166
        %v2345 = vunpack.c.l.b16 %v2167
        %v2346 = vunpack.c.h.b16 %v2167
        %v2347 = vunpack.c.l.b16 %v2168
        %v2348 = vunpack.c.h.b16 %v2168
        %v2349 = vunpack.c.l.b16 %v2169
        %v2350 = vunpack.c.h.b16 %v2169
        %v2351 = vunpack.c.l.b16 %v2170
        %v2352 = vunpack.c.h.b16 %v2170
        %v2353 = vunpack.c.l.b16 %v2171
        %v2354 = vunpack.c.h.b16 %v2171
        %v2355 = vunpack.c.l.b16 %v2172
        %v2356 = vunpack.c.h.b16 %v2172
        %v2357 = vunpack.c.l.b16 %v2173
        %v2358 = vunpack.c.h.b16 %v2173
        %v2359 = vunpack.c.l.b16 %v2174
        %v2360 = vunpack.c.h.b16 %v2174
        %v2361 = vunpack.c.l.b16 %v2175
        %v2362 = vunpack.c.h.b16 %v2175
        %v2363 = vunpack.c.l.b16 %v2176
        %v2364 = vunpack.c.h.b16 %v2176
        %v2365 = vunpack.c.l.b16 %v2177
        %v2366 = vunpack.c.h.b16 %v2177
        %v2367 = vunpack.c.l.b16 %v2178
        %v2368 = vunpack.c.h.b16 %v2178
        %v2369 = vunpack.c.l.b16 %v2179
        %v2370 = vunpack.c.h.b16 %v2179
        %v2371 = vunpack.c.l.b16 %v2180
        %v2372 = vunpack.c.h.b16 %v2180
        %v2373 = vunpack.c.l.b16 %v2181
        %v2374 = vunpack.c.h.b16 %v2181
        %v2375 = vunpack.c.l.b16 %v2182
        %v2376 = vunpack.c.h.b16 %v2182
        %v2377 = vunpack.c.l.b16 %v2183
        %v2378 = vunpack.c.h.b16 %v2183
        %v2379 = vunpack.c.l.b16 %v2184
        %v2380 = vunpack.c.h.b16 %v2184
        %v2381 = vunpack.c.l.b16 %v2185
        %v2382 = vunpack.c.h.b16 %v2185
        %v2383 = vunpack.c.l.b16 %v2186
        %v2384 = vunpack.c.h.b16 %v2186
        %v2385 = vunpack.c.l.b16 %v2187
        %v2386 = vunpack.c.h.b16 %v2187
        %v2387 = vunpack.c.l.b16 %v2188
        %v2388 = vunpack.c.h.b16 %v2188
        %v2389 = vunpack.c.l.b16 %v2189
        %v2390 = vunpack.c.h.b16 %v2189
        %v2391 = vunpack.c.l.b16 %v2190
        %v2392 = vunpack.c.h.b16 %v2190
        %v2393 = vunpack.c.l.b16 %v2191
        %v2394 = vunpack.c.h.b16 %v2191
        %v2395 = vunpack.c.l.b16 %v2192
        %v2396 = vunpack.c.h.b16 %v2192
        %v2397 = vunpack.c.l.b16 %v2193
        %v2398 = vunpack.c.h.b16 %v2193
        %v2399 = vunpack.c.l.b16 %v2194
        %v2400 = vunpack.c.h.b16 %v2194
        %v2401 = vunpack.c.l.b16 %v2195
        %v2402 = vunpack.c.h.b16 %v2195
        %v2403 = vunpack.c.l.b16 %v2196
        %v2404 = vunpack.c.h.b16 %v2196
        %v2405 = vunpack.c.l.b16 %v2197
        %v2406 = vunpack.c.h.b16 %v2197
        %v2407 = vunpack.c.l.b16 %v2198
        %v2408 = vunpack.c.h.b16 %v2198
        %v2409 = vunpack.c.l.b16 %v2199
        %v2410 = vunpack.c.h.b16 %v2199
        %v2411 = vunpack.c.l.b16 %v2200
        %v2412 = vunpack.c.h.b16 %v2200
        %v2413 = vunpack.c.l.b16 %v2201
        %v2414 = vunpack.c.h.b16 %v2201
        %v2415 = vunpack.c.l.b16 %v2202
        %v2416 = vunpack.c.h.b16 %v2202
        %v2417 = vunpack.c.l.b16 %v2203
        %v2418 = vunpack.c.h.b16 %v2203
        %v2419 = vunpack.c.l.b16 %v2204
        %v2420 = vunpack.c.h.b16 %v2204
        %v2421 = vunpack.c.l.b16 %v2205
        %v2422 = vunpack.c.h.b16 %v2205
        %v2423 = vunpack.c.l.b16 %v2206
        %v2424 = vunpack.c.h.b16 %v2206
        %v2425 = vunpack.c.l.b16 %v2207
        %v2426 = vunpack.c.h.b16 %v2207
        %v2427 = vunpack.c.l.b16 %v2208
        %v2428 = vunpack.c.h.b16 %v2208
        %v2429 = vunpack.c.l.b16 %v2209
        %v2430 = vunpack.c.h.b16 %v2209
        %v2431 = vunpack.c.l.b16 %v2210
        %v2432 = vunpack.c.h.b16 %v2210
        %v2433 = vunpack.c.l.b16 %v2211
        %v2434 = vunpack.c.h.b16 %v2211
        %v2435 = vunpack.c.l.b16 %v2212
        %v2436 = vunpack.c.h.b16 %v2212
        %v2437 = vunpack.c.l.b16 %v2213
        %v2438 = vunpack.c.h.b16 %v2213
        %v2439 = vunpack.c.l.b16 %v2214
        %v2440 = vunpack.c.h.b16 %v2214
        %v2441 = vunpack.c.l.b16 %v2215
        %v2442 = vunpack.c.h.b16 %v2215
        %v2443 = vunpack.c.l.b16 %v2216
        %v2444 = vunpack.c.h.b16 %v2216
        %v2445 = vunpack.c.l.b16 %v2217
        %v2446 = vunpack.c.h.b16 %v2217
        %v2447 = vunpack.c.l.b16 %v2218
        %v2448 = vunpack.c.h.b16 %v2218
        %v2449 = vunpack.c.l.b16 %v2219
        %v2450 = vunpack.c.h.b16 %v2219
        %v2451 = vunpack.c.l.b16 %v2220
        %v2452 = vunpack.c.h.b16 %v2220
        %v2453 = vunpack.c.l.b16 %v2221
        %v2454 = vunpack.c.h.b16 %v2221
        %v2455 = vunpack.c.l.b16 %v2222
        %v2456 = vunpack.c.h.b16 %v2222
        %v2457 = vunpack.c.l.b16 %v2223
        %v2458 = vunpack.c.h.b16 %v2223
        %v2459 = vunpack.c.l.b16 %v2224
        %v2460 = vunpack.c.h.b16 %v2224
        %v2461 = vunpack.c.l.b16 %v2225
        %v2462 = vunpack.c.h.b16 %v2225
        %v2463 = vunpack.c.l.b16 %v2226
        %v2464 = vunpack.c.h.b16 %v2226
        %v2465 = vunpack.c.l.b16 %v2227
        %v2466 = vunpack.c.h.b16 %v2227
        %v2467 = vunpack.c.l.b16 %v2228
        %v2468 = vunpack.c.h.b16 %v2228
        %v2469 = vunpack.c.l.b16 %v2229
        %v2470 = vunpack.c.h.b16 %v2229
        %v2471 = vunpack.c.l.b16 %v2230
        %v2472 = vunpack.c.h.b16 %v2230
        %v2473 = vunpack.c.l.b16 %v2231
        %v2474 = vunpack.c.h.b16 %v2231
        %v2475 = vunpack.c.l.b16 %v2232
        %v2476 = vunpack.c.h.b16 %v2232
        %v2477 = vunpack.c.l.b16 %v2233
        %v2478 = vunpack.c.h.b16 %v2233
        %v2479 = vunpack.c.l.b16 %v2234
        %v2480 = vunpack.c.h.b16 %v2234
        %v2481 = vunpack.c.l.b16 %v2235
        %v2482 = vunpack.c.h.b16 %v2235
        %v2483 = vunpack.c.l.b16 %v2236
        %v2484 = vunpack.c.h.b16 %v2236
        %v2485 = vpack.c.b16 %v2347, %v2341
        %v2486 = vpack.c.b16 %v2348, %v2342
        %v2487 = vpack.c.b16 %v2349, %v2343
        %v2488 = vpack.c.b16 %v2350, %v2344
        %v2489 = vpack.c.b16 %v2351, %v2345
        %v2490 = vpack.c.b16 %v2352, %v2346
        %v2491 = vpack.c.b16 %v2359, %v2353
        %v2492 = vpack.c.b16 %v2360, %v2354
        %v2493 = vpack.c.b16 %v2361, %v2355
        %v2494 = vpack.c.b16 %v2362, %v2356
        %v2495 = vpack.c.b16 %v2363, %v2357
        %v2496 = vpack.c.b16 %v2364, %v2358
        %v2497 = vpack.c.b16 %v2371, %v2365
        %v2498 = vpack.c.b16 %v2372, %v2366
        %v2499 = vpack.c.b16 %v2373, %v2367
        %v2500 = vpack.c.b16 %v2374, %v2368
        %v2501 = vpack.c.b16 %v2375, %v2369
        %v2502 = vpack.c.b16 %v2376, %v2370
        %v2503 = vpack.c.b16 %v2383, %v2377
        %v2504 = vpack.c.b16 %v2384, %v2378
        %v2505 = vpack.c.b16 %v2385, %v2379
        %v2506 = vpack.c.b16 %v2386, %v2380
        %v2507 = vpack.c.b16 %v2387, %v2381
        %v2508 = vpack.c.b16 %v2388, %v2382
        %v2509 = vpack.c.b16 %v2395, %v2389
        %v2510 = vpack.c.b16 %v2396, %v2390
        %v2511 = vpack.c.b16 %v2397, %v2391
        %v2512 = vpack.c.b16 %v2398, %v2392
        %v2513 = vpack.c.b16 %v2399, %v2393
        %v2514 = vpack.c.b16 %v2400, %v2394
        %v2515 = vpack.c.b16 %v2407, %v2401
        %v2516 = vpack.c.b16 %v2408, %v2402
        %v2517 = vpack.c.b16 %v2409, %v2403
        %v2518 = vpack.c.b16 %v2410, %v2404
        %v2519 = vpack.c.b16 %v2411, %v2405
        %v2520 = vpack.c.b16 %v2412, %v2406
        %v2521 = vpack.c.b16 %v2419, %v2413
        %v2522 = vpack.c.b16 %v2420, %v2414
        %v2523 = vpack.c.b16 %v2421, %v2415
        %v2524 = vpack.c.b16 %v2422, %v2416
        %v2525 = vpack.c.b16 %v2423, %v2417
        %v2526 = vpack.c.b16 %v2424, %v2418
        %v2527 = vpack.c.b16 %v2431, %v2425
        %v2528 = vpack.c.b16 %v2432, %v2426
        %v2529 = vpack.c.b16 %v2433, %v2427
        %v2530 = vpack.c.b16 %v2434, %v2428
        %v2531 = vpack.c.b16 %v2435, %v2429
        %v2532 = vpack.c.b16 %v2436, %v2430
        %v2533 = vpack.c.b16 %v2443, %v2437
        %v2534 = vpack.c.b16 %v2444, %v2438
        %v2535 = vpack.c.b16 %v2445, %v2439
        %v2536 = vpack.c.b16 %v2446, %v2440
        %v2537 = vpack.c.b16 %v2447, %v2441
        %v2538 = vpack.c.b16 %v2448, %v2442
        %v2539 = vpack.c.b16 %v2455, %v2449
        %v2540 = vpack.c.b16 %v2456, %v2450
        %v2541 = vpack.c.b16 %v2457, %v2451
        %v2542 = vpack.c.b16 %v2458, %v2452
        %v2543 = vpack.c.b16 %v2459, %v2453
        %v2544 = vpack.c.b16 %v2460, %v2454
        %v2545 = vpack.c.b16 %v2467, %v2461
        %v2546 = vpack.c.b16 %v2468, %v2462
        %v2547 = vpack.c.b16 %v2469, %v2463
        %v2548 = vpack.c.b16 %v2470, %v2464
        %v2549 = vpack.c.b16 %v2471, %v2465
        %v2550 = vpack.c.b16 %v2472, %v2466
        %v2551 = vpack.c.b16 %v2479, %v2473
        %v2552 = vpack.c.b16 %v2480, %v2474
        %v2553 = vpack.c.b16 %v2481, %v2475
        %v2554 = vpack.c.b16 %v2482, %v2476
        %v2555 = vpack.c.b16 %v2483, %v2477
        %v2556 = vpack.c.b16 %v2484, %v2478
        %v2630 = vsel %vm1284, %v2162, 0
        %v2633 = vsel %vm1284, %v2164, 0
        %2635 = vmatprep.subr.bf16.mxu0 %v2486
        %2636 = vmatpush1.bf16.msra.mxu0 %v2485
        %2637 = vmatprep.subr.bf16.mxu0 %v2492
        %2638 = vmatpush1.bf16.msra.mxu0 %v2491
        %2639 = vmatprep.subr.bf16.mxu0 %v2498
        %2640 = vmatpush1.bf16.msra.mxu0 %v2497
        %2641 = vmatprep.subr.bf16.mxu0 %v2504
        %2642 = vmatpush1.bf16.msra.mxu0 %v2503
        %2643 = vmatprep.subr.bf16.mxu0 %v2510
        %2644 = vmatpush1.bf16.msra.mxu0 %v2509
        %2645 = vmatprep.subr.bf16.mxu0 %v2516
        %2646 = vmatpush1.bf16.msra.mxu0 %v2515
        %2647 = vmatprep.subr.bf16.mxu0 %v2522
        %2648 = vmatpush1.bf16.msra.mxu0 %v2521
        %2649 = vmatprep.subr.bf16.mxu0 %v2528
        %2650 = vmatpush1.bf16.msra.mxu0 %v2527
        %2651 = vmatprep.subr.bf16.mxu0 %v2534
        %2652 = vmatpush1.bf16.msra.mxu0 %v2533
        %2653 = vmatprep.subr.bf16.mxu0 %v2540
        %2654 = vmatpush1.bf16.msra.mxu0 %v2539
        %2655 = vmatprep.subr.bf16.mxu0 %v2546
        %2656 = vmatpush1.bf16.msra.mxu0 %v2545
        %2657 = vmatprep.subr.bf16.mxu0 %v2552
        %2658 = vmatpush1.bf16.msra.mxu0 %v2551
        %2659 = vmatprep.subr.bf16.mxu0 0
        %2660 = vmatpush1.bf16.msra.mxu0 0
        %2661 = vmatprep.subr.bf16.mxu0 0
        %2662 = vmatpush1.bf16.msra.mxu0 0
        %2663 = vmatprep.subr.bf16.mxu0 0
        %2664 = vmatpush1.bf16.msra.mxu0 0
        %2665 = vmatprep.subr.bf16.mxu0 0
        %2666 = vmatpush1.bf16.msra.mxu0 0
        %2667 = vmatprep.mubr.bf16.mxu0 %v2630
        %2668 = vmatmul.mubr.bf16.gmra.mrb[0].mxu0 %v2161
        %v2669 = vpop.f32.mrb[0].mxu0
        %v2670 = vadd.f32 %v2242, %v2669
        %v2671 = vpop.f32.mrb[0].mxu0
        %v2672 = vadd.f32 %v2246, %v2671
        %v2673 = vpop.f32.mrb[0].mxu0
        %v2674 = vadd.f32 %v2242, %v2673
        %v2675 = vpop.f32.mrb[0].mxu0
        %v2676 = vadd.f32 %v2246, %v2675
        %2677 = vmatprep.mubr.bf16.mxu0 %v2633
        %2678 = vmatmul.mubr.bf16.gmra.mrb[0].mxu0 %v2163
        %v2679 = vpop.f32.mrb[0].mxu0
        %v2680 = vadd.f32 %v2242, %v2679
        %v2681 = vpop.f32.mrb[0].mxu0
        %v2682 = vadd.f32 %v2246, %v2681
        %v2683 = vpop.f32.mrb[0].mxu0
        %v2684 = vadd.f32 %v2242, %v2683
        %v2685 = vpop.f32.mrb[0].mxu0
        %v2686 = vadd.f32 %v2246, %v2685
        %2687 = vdwg.mxu0
        %2688 = vmatprep.subr.bf16.mxu0 %v2488
        %2689 = vmatpush1.bf16.msra.mxu0 %v2487
        %2690 = vmatprep.subr.bf16.mxu0 %v2494
        %2691 = vmatpush1.bf16.msra.mxu0 %v2493
        %2692 = vmatprep.subr.bf16.mxu0 %v2500
        %2693 = vmatpush1.bf16.msra.mxu0 %v2499
        %2694 = vmatprep.subr.bf16.mxu0 %v2506
        %2695 = vmatpush1.bf16.msra.mxu0 %v2505
        %2696 = vmatprep.subr.bf16.mxu0 %v2512
        %2697 = vmatpush1.bf16.msra.mxu0 %v2511
        %2698 = vmatprep.subr.bf16.mxu0 %v2518
        %2699 = vmatpush1.bf16.msra.mxu0 %v2517
        %2700 = vmatprep.subr.bf16.mxu0 %v2524
        %2701 = vmatpush1.bf16.msra.mxu0 %v2523
        %2702 = vmatprep.subr.bf16.mxu0 %v2530
        %2703 = vmatpush1.bf16.msra.mxu0 %v2529
        %2704 = vmatprep.subr.bf16.mxu0 %v2536
        %2705 = vmatpush1.bf16.msra.mxu0 %v2535
        %2706 = vmatprep.subr.bf16.mxu0 %v2542
        %2707 = vmatpush1.bf16.msra.mxu0 %v2541
        %2708 = vmatprep.subr.bf16.mxu0 %v2548
        %2709 = vmatpush1.bf16.msra.mxu0 %v2547
        %2710 = vmatprep.subr.bf16.mxu0 %v2554
        %2711 = vmatpush1.bf16.msra.mxu0 %v2553
        %2712 = vmatprep.subr.bf16.mxu0 0
        %2713 = vmatpush1.bf16.msra.mxu0 0
        %2714 = vmatprep.subr.bf16.mxu0 0
        %2715 = vmatpush1.bf16.msra.mxu0 0
        %2716 = vmatprep.subr.bf16.mxu0 0
        %2717 = vmatpush1.bf16.msra.mxu0 0
        %2718 = vmatprep.subr.bf16.mxu0 0
        %2719 = vmatpush1.bf16.msra.mxu0 0
        %2720 = vmatprep.mubr.bf16.mxu0 %v2630
        %2721 = vmatmul.mubr.bf16.gmra.mrb[0].mxu0 %v2161
        %v2722 = vpop.f32.mrb[0].mxu0
        %v2723 = vadd.f32 %v2250, %v2722
        %v2724 = vpop.f32.mrb[0].mxu0
        %v2725 = vadd.f32 %v2254, %v2724
        %v2726 = vpop.f32.mrb[0].mxu0
        %v2727 = vadd.f32 %v2250, %v2726
        %v2728 = vpop.f32.mrb[0].mxu0
        %v2729 = vadd.f32 %v2254, %v2728
        %2730 = vmatprep.mubr.bf16.mxu0 %v2633
        %2731 = vmatmul.mubr.bf16.gmra.mrb[0].mxu0 %v2163
        %v2732 = vpop.f32.mrb[0].mxu0
        %v2733 = vadd.f32 %v2250, %v2732
        %v2734 = vpop.f32.mrb[0].mxu0
        %v2735 = vadd.f32 %v2254, %v2734
        %v2736 = vpop.f32.mrb[0].mxu0
        %v2737 = vadd.f32 %v2250, %v2736
        %v2738 = vpop.f32.mrb[0].mxu0
        %v2739 = vadd.f32 %v2254, %v2738
        %2740 = vdwg.mxu0
        %2741 = vmatprep.subr.bf16.mxu0 %v2490
        %2742 = vmatpush1.bf16.msra.mxu0 %v2489
        %2743 = vmatprep.subr.bf16.mxu0 %v2496
        %2744 = vmatpush1.bf16.msra.mxu0 %v2495
        %2745 = vmatprep.subr.bf16.mxu0 %v2502
        %2746 = vmatpush1.bf16.msra.mxu0 %v2501
        %2747 = vmatprep.subr.bf16.mxu0 %v2508
        %2748 = vmatpush1.bf16.msra.mxu0 %v2507
        %2749 = vmatprep.subr.bf16.mxu0 %v2514
        %2750 = vmatpush1.bf16.msra.mxu0 %v2513
        %2751 = vmatprep.subr.bf16.mxu0 %v2520
        %2752 = vmatpush1.bf16.msra.mxu0 %v2519
        %2753 = vmatprep.subr.bf16.mxu0 %v2526
        %2754 = vmatpush1.bf16.msra.mxu0 %v2525
        %2755 = vmatprep.subr.bf16.mxu0 %v2532
        %2756 = vmatpush1.bf16.msra.mxu0 %v2531
        %2757 = vmatprep.subr.bf16.mxu0 %v2538
        %2758 = vmatpush1.bf16.msra.mxu0 %v2537
        %2759 = vmatprep.subr.bf16.mxu0 %v2544
        %2760 = vmatpush1.bf16.msra.mxu0 %v2543
        %2761 = vmatprep.subr.bf16.mxu0 %v2550
        %2762 = vmatpush1.bf16.msra.mxu0 %v2549
        %2763 = vmatprep.subr.bf16.mxu0 %v2556
        %2764 = vmatpush1.bf16.msra.mxu0 %v2555
        %2765 = vmatprep.subr.bf16.mxu0 0
        %2766 = vmatpush1.bf16.msra.mxu0 0
        %2767 = vmatprep.subr.bf16.mxu0 0
        %2768 = vmatpush1.bf16.msra.mxu0 0
        %2769 = vmatprep.subr.bf16.mxu0 0
        %2770 = vmatpush1.bf16.msra.mxu0 0
        %2771 = vmatprep.subr.bf16.mxu0 0
        %2772 = vmatpush1.bf16.msra.mxu0 0
        %2773 = vmatprep.mubr.bf16.mxu0 %v2630
        %2774 = vmatmul.mubr.bf16.gmra.mrb[0].mxu0 %v2161
        %v2775 = vpop.f32.mrb[0].mxu0
        %v2776 = vadd.f32 %v2258, %v2775
        %v2777 = vpop.f32.mrb[0].mxu0
        %v2778 = vadd.f32 %v2262, %v2777
        %v2779 = vpop.f32.mrb[0].mxu0
        %v2780 = vadd.f32 %v2258, %v2779
        %v2781 = vpop.f32.mrb[0].mxu0
        %v2782 = vadd.f32 %v2262, %v2781
        %2783 = vmatprep.mubr.bf16.mxu0 %v2633
        %2784 = vmatmul.mubr.bf16.gmra.mrb[0].mxu0 %v2163
        %v2785 = vpop.f32.mrb[0].mxu0
        %v2786 = vadd.f32 %v2258, %v2785
        %v2787 = vpop.f32.mrb[0].mxu0
        %v2788 = vadd.f32 %v2262, %v2787
        %v2789 = vpop.f32.mrb[0].mxu0
        %v2790 = vadd.f32 %v2258, %v2789
        %v2791 = vpop.f32.mrb[0].mxu0
        %v2792 = vadd.f32 %v2262, %v2791
        %2793 = vdwg.mxu0
        %v2794 = vmax.f32 %v2670, 0.0
        %v2795 = vmax.f32 %v2672, 0.0
        %v2796 = vmax.f32 %v2723, 0.0
        %v2797 = vmax.f32 %v2725, 0.0
        %v2798 = vmax.f32 %v2776, 0.0
        %v2799 = vmax.f32 %v2778, 0.0
        %v2800 = vmax.f32 %v2674, 0.0
        %v2801 = vmax.f32 %v2676, 0.0
        %v2802 = vmax.f32 %v2727, 0.0
        %v2803 = vmax.f32 %v2729, 0.0
        %v2804 = vmax.f32 %v2780, 0.0
        %v2805 = vmax.f32 %v2782, 0.0
        %v2806 = vmax.f32 %v2680, 0.0
        %v2807 = vmax.f32 %v2682, 0.0
        %v2808 = vmax.f32 %v2733, 0.0
        %v2809 = vmax.f32 %v2735, 0.0
        %v2810 = vmax.f32 %v2786, 0.0
        %v2811 = vmax.f32 %v2788, 0.0
        %v2812 = vmax.f32 %v2684, 0.0
        %v2813 = vmax.f32 %v2686, 0.0
        %v2814 = vmax.f32 %v2737, 0.0
        %v2815 = vmax.f32 %v2739, 0.0
        %v2816 = vmax.f32 %v2790, 0.0
        %v2817 = vmax.f32 %v2792, 0.0
        %v2818 = vpack.c.bf16 %v2800, %v2794
        %v2819 = vpack.c.bf16 %v2801, %v2795
        %v2820 = vpack.c.bf16 %v2802, %v2796
        %v2821 = vpack.c.bf16 %v2803, %v2797
        %v2822 = vpack.c.bf16 %v2804, %v2798
        %v2823 = vpack.c.bf16 %v2805, %v2799
        %v2824 = vpack.c.bf16 %v2812, %v2806
        %v2825 = vpack.c.bf16 %v2813, %v2807
        %v2826 = vpack.c.bf16 %v2814, %v2808
        %v2827 = vpack.c.bf16 %v2815, %v2809
        %v2828 = vpack.c.bf16 %v2816, %v2810
        %v2829 = vpack.c.bf16 %v2817, %v2811
        %v2830 = vld [vmem:[%s745] sm:$0xff]
        %v2831 = vld [vmem:[%s745 + $0x8] sm:$0xff]
        %v2832 = vld [vmem:[%s745 + $0x10] sm:$0xff]
        %v2833 = vld [vmem:[%s745 + $0x18] sm:$0xff]
        %v2834 = vld [vmem:[%s745 + $0x20] sm:$0xff]
        %v2835 = vld [vmem:[%s745 + $0x28] sm:$0xff]
        %v2836 = vld [vmem:[%s745 + $0x30] sm:$0xff]
        %v2837 = vld [vmem:[%s745 + $0x38] sm:$0xff]
        %v2838 = vld [vmem:[%s745 + $0x40] sm:$0xff]
        %v2839 = vld [vmem:[%s745 + $0x48] sm:$0xff]
        %v2840 = vld [vmem:[%s745 + $0x50] sm:$0xff]
        %v2841 = vld [vmem:[%s745 + $0x58] sm:$0xff]
        %v2842 = vld [vmem:[%s745 + $0x60] sm:$0xff]
        %v2843 = vld [vmem:[%s745 + $0x68] sm:$0xff]
        %v2844 = vld [vmem:[%s745 + $0x70] sm:$0xff]
        %v2845 = vld [vmem:[%s745 + $0x78] sm:$0xff]
        %v2846 = vld [vmem:[%s745 + $0x80] sm:$0xff]
        %v2847 = vld [vmem:[%s745 + $0x88] sm:$0xff]
        %v2848 = vld [vmem:[%s745 + $0x90] sm:$0xff]
        %v2849 = vld [vmem:[%s745 + $0x98] sm:$0xff]
        %v2850 = vld [vmem:[%s745 + $0xa0] sm:$0xff]
        %v2851 = vld [vmem:[%s745 + $0xa8] sm:$0xff]
        %v2852 = vld [vmem:[%s745 + $0xb0] sm:$0xff]
        %v2853 = vld [vmem:[%s745 + $0xb8] sm:$0xff]
        %v2854 = vld [vmem:[%s745 + $0xc0] sm:$0xff]
        %v2855 = vld [vmem:[%s745 + $0xc8] sm:$0xff]
        %v2856 = vld [vmem:[%s745 + $0xd0] sm:$0xff]
        %v2857 = vld [vmem:[%s745 + $0xd8] sm:$0xff]
        %v2858 = vld [vmem:[%s745 + $0xe0] sm:$0xff]
        %v2859 = vld [vmem:[%s745 + $0xe8] sm:$0xff]
        %v2860 = vld [vmem:[%s745 + $0xf0] sm:$0xff]
        %v2861 = vld [vmem:[%s745 + $0xf8] sm:$0xff]
        %v2862 = vld [vmem:[%s745 + $0x100] sm:$0xff]
        %v2863 = vld [vmem:[%s745 + $0x108] sm:$0xff]
        %v2864 = vld [vmem:[%s745 + $0x110] sm:$0xff]
        %v2865 = vld [vmem:[%s745 + $0x118] sm:$0xff]
        %v2866 = vld [vmem:[%s745 + $0x120] sm:$0xff]
        %v2867 = vld [vmem:[%s745 + $0x128] sm:$0xff]
        %v2868 = vld [vmem:[%s745 + $0x130] sm:$0xff]
        %v2869 = vld [vmem:[%s745 + $0x138] sm:$0xff]
        %v2870 = vld [vmem:[%s745 + $0x140] sm:$0xff]
        %v2871 = vld [vmem:[%s745 + $0x148] sm:$0xff]
        %v2872 = vld [vmem:[%s745 + $0x150] sm:$0xff]
        %v2873 = vld [vmem:[%s745 + $0x158] sm:$0xff]
        %v2874 = vld [vmem:[%s745 + $0x160] sm:$0xff]
        %v2875 = vld [vmem:[%s745 + $0x168] sm:$0xff]
        %v2876 = vld [vmem:[%s745 + $0x170] sm:$0xff]
        %v2877 = vld [vmem:[%s745 + $0x178] sm:$0xff]
        %v2878 = vld [vmem:[%s745 + $0x180] sm:$0xff]
        %v2879 = vld [vmem:[%s745 + $0x188] sm:$0xff]
        %v2880 = vld [vmem:[%s745 + $0x190] sm:$0xff]
        %v2881 = vld [vmem:[%s745 + $0x198] sm:$0xff]
        %v2882 = vld [vmem:[%s745 + $0x1a0] sm:$0xff]
        %v2883 = vld [vmem:[%s745 + $0x1a8] sm:$0xff]
        %v2884 = vld [vmem:[%s745 + $0x1b0] sm:$0xff]
        %v2885 = vld [vmem:[%s745 + $0x1b8] sm:$0xff]
        %v2886 = vld [vmem:[%s745 + $0x1c0] sm:$0xff]
        %v2887 = vld [vmem:[%s745 + $0x1c8] sm:$0xff]
        %v2888 = vld [vmem:[%s745 + $0x1d0] sm:$0xff]
        %v2889 = vld [vmem:[%s745 + $0x1d8] sm:$0xff]
        %v2890 = vld [vmem:[%s745 + $0x1e0] sm:$0xff]
        %v2891 = vld [vmem:[%s745 + $0x1e8] sm:$0xff]
        %v2892 = vld [vmem:[%s745 + $0x1f0] sm:$0xff]
        %v2893 = vld [vmem:[%s745 + $0x1f8] sm:$0xff]
        %v2894 = vld [vmem:[%s745 + $0x200] sm:$0xff]
        %v2895 = vld [vmem:[%s745 + $0x208] sm:$0xff]
        %v2896 = vld [vmem:[%s745 + $0x210] sm:$0xff]
        %v2897 = vld [vmem:[%s745 + $0x218] sm:$0xff]
        %v2898 = vld [vmem:[%s745 + $0x220] sm:$0xff]
        %v2899 = vld [vmem:[%s745 + $0x228] sm:$0xff]
        %v2900 = vld [vmem:[%s745 + $0x230] sm:$0xff]
        %v2901 = vld [vmem:[%s745 + $0x238] sm:$0xff]
        %v2902 = vld [vmem:[%s745 + $0x240] sm:$0xff]
        %v2903 = vld [vmem:[%s745 + $0x248] sm:$0xff]
        %v2904 = vld [vmem:[%s745 + $0x250] sm:$0xff]
        %v2905 = vld [vmem:[%s745 + $0x258] sm:$0xff]
        %v2906 = vld [vmem:[%s745 + $0x260] sm:$0xff]
        %v2907 = vld [vmem:[%s745 + $0x268] sm:$0xff]
        %v2908 = vld [vmem:[%s745 + $0x270] sm:$0xff]
        %v2909 = vld [vmem:[%s745 + $0x278] sm:$0xff]
        %v2910 = vld [vmem:[%s745 + $0x280] sm:$0xff]
        %v2911 = vld [vmem:[%s745 + $0x288] sm:$0xff]
        %v2912 = vld [vmem:[%s745 + $0x290] sm:$0xff]
        %v2913 = vld [vmem:[%s745 + $0x298] sm:$0xff]
        %v2914 = vld [vmem:[%s745 + $0x2a0] sm:$0xff]
        %v2915 = vld [vmem:[%s745 + $0x2a8] sm:$0xff]
        %v2916 = vld [vmem:[%s745 + $0x2b0] sm:$0xff]
        %v2917 = vld [vmem:[%s745 + $0x2b8] sm:$0xff]
        %v2918 = vld [vmem:[%s745 + $0x2c0] sm:$0xff]
        %v2919 = vld [vmem:[%s745 + $0x2c8] sm:$0xff]
        %v2920 = vld [vmem:[%s745 + $0x2d0] sm:$0xff]
        %v2921 = vld [vmem:[%s745 + $0x2d8] sm:$0xff]
        %v2922 = vld [vmem:[%s745 + $0x2e0] sm:$0xff]
        %v2923 = vld [vmem:[%s745 + $0x2e8] sm:$0xff]
        %v2924 = vld [vmem:[%s745 + $0x2f0] sm:$0xff]
        %v2925 = vld [vmem:[%s745 + $0x2f8] sm:$0xff]
        %v2926 = vld [vmem:[%s749] sm:$0x3]
        %v2928 = vlaneseq
        %v2929 = vshrl.u32 %v2928, 7
        %v2930 = vsub.s32 0, %v2929
        %v2931 = vrot.slane %v2926, %v2930
        %v2932 = vlaneseq
        %v2933 = vshrl.u32 %v2932, 7
        %v2934 = vsub.s32 1, %v2933
        %v2935 = vrot.slane %v2926, %v2934
        %v3034 = vunpack.c.l.b16 %v2830
        %v3035 = vunpack.c.h.b16 %v2830
        %v3036 = vunpack.c.l.b16 %v2831
        %v3037 = vunpack.c.h.b16 %v2831
        %v3038 = vunpack.c.l.b16 %v2832
        %v3039 = vunpack.c.h.b16 %v2832
        %v3040 = vunpack.c.l.b16 %v2833
        %v3041 = vunpack.c.h.b16 %v2833
        %v3042 = vunpack.c.l.b16 %v2834
        %v3043 = vunpack.c.h.b16 %v2834
        %v3044 = vunpack.c.l.b16 %v2835
        %v3045 = vunpack.c.h.b16 %v2835
        %v3046 = vunpack.c.l.b16 %v2836
        %v3047 = vunpack.c.h.b16 %v2836
        %v3048 = vunpack.c.l.b16 %v2837
        %v3049 = vunpack.c.h.b16 %v2837
        %v3050 = vunpack.c.l.b16 %v2838
        %v3051 = vunpack.c.h.b16 %v2838
        %v3052 = vunpack.c.l.b16 %v2839
        %v3053 = vunpack.c.h.b16 %v2839
        %v3054 = vunpack.c.l.b16 %v2840
        %v3055 = vunpack.c.h.b16 %v2840
        %v3056 = vunpack.c.l.b16 %v2841
        %v3057 = vunpack.c.h.b16 %v2841
        %v3058 = vunpack.c.l.b16 %v2842
        %v3059 = vunpack.c.h.b16 %v2842
        %v3060 = vunpack.c.l.b16 %v2843
        %v3061 = vunpack.c.h.b16 %v2843
        %v3062 = vunpack.c.l.b16 %v2844
        %v3063 = vunpack.c.h.b16 %v2844
        %v3064 = vunpack.c.l.b16 %v2845
        %v3065 = vunpack.c.h.b16 %v2845
        %v3066 = vunpack.c.l.b16 %v2846
        %v3067 = vunpack.c.h.b16 %v2846
        %v3068 = vunpack.c.l.b16 %v2847
        %v3069 = vunpack.c.h.b16 %v2847
        %v3070 = vunpack.c.l.b16 %v2848
        %v3071 = vunpack.c.h.b16 %v2848
        %v3072 = vunpack.c.l.b16 %v2849
        %v3073 = vunpack.c.h.b16 %v2849
        %v3074 = vunpack.c.l.b16 %v2850
        %v3075 = vunpack.c.h.b16 %v2850
        %v3076 = vunpack.c.l.b16 %v2851
        %v3077 = vunpack.c.h.b16 %v2851
        %v3078 = vunpack.c.l.b16 %v2852
        %v3079 = vunpack.c.h.b16 %v2852
        %v3080 = vunpack.c.l.b16 %v2853
        %v3081 = vunpack.c.h.b16 %v2853
        %v3082 = vunpack.c.l.b16 %v2854
        %v3083 = vunpack.c.h.b16 %v2854
        %v3084 = vunpack.c.l.b16 %v2855
        %v3085 = vunpack.c.h.b16 %v2855
        %v3086 = vunpack.c.l.b16 %v2856
        %v3087 = vunpack.c.h.b16 %v2856
        %v3088 = vunpack.c.l.b16 %v2857
        %v3089 = vunpack.c.h.b16 %v2857
        %v3090 = vunpack.c.l.b16 %v2858
        %v3091 = vunpack.c.h.b16 %v2858
        %v3092 = vunpack.c.l.b16 %v2859
        %v3093 = vunpack.c.h.b16 %v2859
        %v3094 = vunpack.c.l.b16 %v2860
        %v3095 = vunpack.c.h.b16 %v2860
        %v3096 = vunpack.c.l.b16 %v2861
        %v3097 = vunpack.c.h.b16 %v2861
        %v3098 = vunpack.c.l.b16 %v2862
        %v3099 = vunpack.c.h.b16 %v2862
        %v3100 = vunpack.c.l.b16 %v2863
        %v3101 = vunpack.c.h.b16 %v2863
        %v3102 = vunpack.c.l.b16 %v2864
        %v3103 = vunpack.c.h.b16 %v2864
        %v3104 = vunpack.c.l.b16 %v2865
        %v3105 = vunpack.c.h.b16 %v2865
        %v3106 = vunpack.c.l.b16 %v2866
        %v3107 = vunpack.c.h.b16 %v2866
        %v3108 = vunpack.c.l.b16 %v2867
        %v3109 = vunpack.c.h.b16 %v2867
        %v3110 = vunpack.c.l.b16 %v2868
        %v3111 = vunpack.c.h.b16 %v2868
        %v3112 = vunpack.c.l.b16 %v2869
        %v3113 = vunpack.c.h.b16 %v2869
        %v3114 = vunpack.c.l.b16 %v2870
        %v3115 = vunpack.c.h.b16 %v2870
        %v3116 = vunpack.c.l.b16 %v2871
        %v3117 = vunpack.c.h.b16 %v2871
        %v3118 = vunpack.c.l.b16 %v2872
        %v3119 = vunpack.c.h.b16 %v2872
        %v3120 = vunpack.c.l.b16 %v2873
        %v3121 = vunpack.c.h.b16 %v2873
        %v3122 = vunpack.c.l.b16 %v2874
        %v3123 = vunpack.c.h.b16 %v2874
        %v3124 = vunpack.c.l.b16 %v2875
        %v3125 = vunpack.c.h.b16 %v2875
        %v3126 = vunpack.c.l.b16 %v2876
        %v3127 = vunpack.c.h.b16 %v2876
        %v3128 = vunpack.c.l.b16 %v2877
        %v3129 = vunpack.c.h.b16 %v2877
        %v3130 = vunpack.c.l.b16 %v2878
        %v3131 = vunpack.c.h.b16 %v2878
        %v3132 = vunpack.c.l.b16 %v2879
        %v3133 = vunpack.c.h.b16 %v2879
        %v3134 = vunpack.c.l.b16 %v2880
        %v3135 = vunpack.c.h.b16 %v2880
        %v3136 = vunpack.c.l.b16 %v2881
        %v3137 = vunpack.c.h.b16 %v2881
        %v3138 = vunpack.c.l.b16 %v2882
        %v3139 = vunpack.c.h.b16 %v2882
        %v3140 = vunpack.c.l.b16 %v2883
        %v3141 = vunpack.c.h.b16 %v2883
        %v3142 = vunpack.c.l.b16 %v2884
        %v3143 = vunpack.c.h.b16 %v2884
        %v3144 = vunpack.c.l.b16 %v2885
        %v3145 = vunpack.c.h.b16 %v2885
        %v3146 = vunpack.c.l.b16 %v2886
        %v3147 = vunpack.c.h.b16 %v2886
        %v3148 = vunpack.c.l.b16 %v2887
        %v3149 = vunpack.c.h.b16 %v2887
        %v3150 = vunpack.c.l.b16 %v2888
        %v3151 = vunpack.c.h.b16 %v2888
        %v3152 = vunpack.c.l.b16 %v2889
        %v3153 = vunpack.c.h.b16 %v2889
        %v3154 = vunpack.c.l.b16 %v2890
        %v3155 = vunpack.c.h.b16 %v2890
        %v3156 = vunpack.c.l.b16 %v2891
        %v3157 = vunpack.c.h.b16 %v2891
        %v3158 = vunpack.c.l.b16 %v2892
        %v3159 = vunpack.c.h.b16 %v2892
        %v3160 = vunpack.c.l.b16 %v2893
        %v3161 = vunpack.c.h.b16 %v2893
        %v3162 = vunpack.c.l.b16 %v2894
        %v3163 = vunpack.c.h.b16 %v2894
        %v3164 = vunpack.c.l.b16 %v2895
        %v3165 = vunpack.c.h.b16 %v2895
        %v3166 = vunpack.c.l.b16 %v2896
        %v3167 = vunpack.c.h.b16 %v2896
        %v3168 = vunpack.c.l.b16 %v2897
        %v3169 = vunpack.c.h.b16 %v2897
        %v3170 = vunpack.c.l.b16 %v2898
        %v3171 = vunpack.c.h.b16 %v2898
        %v3172 = vunpack.c.l.b16 %v2899
        %v3173 = vunpack.c.h.b16 %v2899
        %v3174 = vunpack.c.l.b16 %v2900
        %v3175 = vunpack.c.h.b16 %v2900
        %v3176 = vunpack.c.l.b16 %v2901
        %v3177 = vunpack.c.h.b16 %v2901
        %v3178 = vunpack.c.l.b16 %v2902
        %v3179 = vunpack.c.h.b16 %v2902
        %v3180 = vunpack.c.l.b16 %v2903
        %v3181 = vunpack.c.h.b16 %v2903
        %v3182 = vunpack.c.l.b16 %v2904
        %v3183 = vunpack.c.h.b16 %v2904
        %v3184 = vunpack.c.l.b16 %v2905
        %v3185 = vunpack.c.h.b16 %v2905
        %v3186 = vunpack.c.l.b16 %v2906
        %v3187 = vunpack.c.h.b16 %v2906
        %v3188 = vunpack.c.l.b16 %v2907
        %v3189 = vunpack.c.h.b16 %v2907
        %v3190 = vunpack.c.l.b16 %v2908
        %v3191 = vunpack.c.h.b16 %v2908
        %v3192 = vunpack.c.l.b16 %v2909
        %v3193 = vunpack.c.h.b16 %v2909
        %v3194 = vunpack.c.l.b16 %v2910
        %v3195 = vunpack.c.h.b16 %v2910
        %v3196 = vunpack.c.l.b16 %v2911
        %v3197 = vunpack.c.h.b16 %v2911
        %v3198 = vunpack.c.l.b16 %v2912
        %v3199 = vunpack.c.h.b16 %v2912
        %v3200 = vunpack.c.l.b16 %v2913
        %v3201 = vunpack.c.h.b16 %v2913
        %v3202 = vunpack.c.l.b16 %v2914
        %v3203 = vunpack.c.h.b16 %v2914
        %v3204 = vunpack.c.l.b16 %v2915
        %v3205 = vunpack.c.h.b16 %v2915
        %v3206 = vunpack.c.l.b16 %v2916
        %v3207 = vunpack.c.h.b16 %v2916
        %v3208 = vunpack.c.l.b16 %v2917
        %v3209 = vunpack.c.h.b16 %v2917
        %v3210 = vunpack.c.l.b16 %v2918
        %v3211 = vunpack.c.h.b16 %v2918
        %v3212 = vunpack.c.l.b16 %v2919
        %v3213 = vunpack.c.h.b16 %v2919
        %v3214 = vunpack.c.l.b16 %v2920
        %v3215 = vunpack.c.h.b16 %v2920
        %v3216 = vunpack.c.l.b16 %v2921
        %v3217 = vunpack.c.h.b16 %v2921
        %v3218 = vunpack.c.l.b16 %v2922
        %v3219 = vunpack.c.h.b16 %v2922
        %v3220 = vunpack.c.l.b16 %v2923
        %v3221 = vunpack.c.h.b16 %v2923
        %v3222 = vunpack.c.l.b16 %v2924
        %v3223 = vunpack.c.h.b16 %v2924
        %v3224 = vunpack.c.l.b16 %v2925
        %v3225 = vunpack.c.h.b16 %v2925
        %v3226 = vpack.c.b16 %v3036, %v3034
        %v3227 = vpack.c.b16 %v3037, %v3035
        %v3228 = vpack.c.b16 %v3040, %v3038
        %v3229 = vpack.c.b16 %v3041, %v3039
        %v3230 = vpack.c.b16 %v3044, %v3042
        %v3231 = vpack.c.b16 %v3045, %v3043
        %v3232 = vpack.c.b16 %v3048, %v3046
        %v3233 = vpack.c.b16 %v3049, %v3047
        %v3234 = vpack.c.b16 %v3052, %v3050
        %v3235 = vpack.c.b16 %v3053, %v3051
        %v3236 = vpack.c.b16 %v3056, %v3054
        %v3237 = vpack.c.b16 %v3057, %v3055
        %v3238 = vpack.c.b16 %v3060, %v3058
        %v3239 = vpack.c.b16 %v3061, %v3059
        %v3240 = vpack.c.b16 %v3064, %v3062
        %v3241 = vpack.c.b16 %v3065, %v3063
        %v3242 = vpack.c.b16 %v3068, %v3066
        %v3243 = vpack.c.b16 %v3069, %v3067
        %v3244 = vpack.c.b16 %v3072, %v3070
        %v3245 = vpack.c.b16 %v3073, %v3071
        %v3246 = vpack.c.b16 %v3076, %v3074
        %v3247 = vpack.c.b16 %v3077, %v3075
        %v3248 = vpack.c.b16 %v3080, %v3078
        %v3249 = vpack.c.b16 %v3081, %v3079
        %v3250 = vpack.c.b16 %v3084, %v3082
        %v3251 = vpack.c.b16 %v3085, %v3083
        %v3252 = vpack.c.b16 %v3088, %v3086
        %v3253 = vpack.c.b16 %v3089, %v3087
        %v3254 = vpack.c.b16 %v3092, %v3090
        %v3255 = vpack.c.b16 %v3093, %v3091
        %v3256 = vpack.c.b16 %v3096, %v3094
        %v3257 = vpack.c.b16 %v3097, %v3095
        %v3258 = vpack.c.b16 %v3100, %v3098
        %v3259 = vpack.c.b16 %v3101, %v3099
        %v3260 = vpack.c.b16 %v3104, %v3102
        %v3261 = vpack.c.b16 %v3105, %v3103
        %v3262 = vpack.c.b16 %v3108, %v3106
        %v3263 = vpack.c.b16 %v3109, %v3107
        %v3264 = vpack.c.b16 %v3112, %v3110
        %v3265 = vpack.c.b16 %v3113, %v3111
        %v3266 = vpack.c.b16 %v3116, %v3114
        %v3267 = vpack.c.b16 %v3117, %v3115
        %v3268 = vpack.c.b16 %v3120, %v3118
        %v3269 = vpack.c.b16 %v3121, %v3119
        %v3270 = vpack.c.b16 %v3124, %v3122
        %v3271 = vpack.c.b16 %v3125, %v3123
        %v3272 = vpack.c.b16 %v3128, %v3126
        %v3273 = vpack.c.b16 %v3129, %v3127
        %v3274 = vpack.c.b16 %v3132, %v3130
        %v3275 = vpack.c.b16 %v3133, %v3131
        %v3276 = vpack.c.b16 %v3136, %v3134
        %v3277 = vpack.c.b16 %v3137, %v3135
        %v3278 = vpack.c.b16 %v3140, %v3138
        %v3279 = vpack.c.b16 %v3141, %v3139
        %v3280 = vpack.c.b16 %v3144, %v3142
        %v3281 = vpack.c.b16 %v3145, %v3143
        %v3282 = vpack.c.b16 %v3148, %v3146
        %v3283 = vpack.c.b16 %v3149, %v3147
        %v3284 = vpack.c.b16 %v3152, %v3150
        %v3285 = vpack.c.b16 %v3153, %v3151
        %v3286 = vpack.c.b16 %v3156, %v3154
        %v3287 = vpack.c.b16 %v3157, %v3155
        %v3288 = vpack.c.b16 %v3160, %v3158
        %v3289 = vpack.c.b16 %v3161, %v3159
        %v3290 = vpack.c.b16 %v3164, %v3162
        %v3291 = vpack.c.b16 %v3165, %v3163
        %v3292 = vpack.c.b16 %v3168, %v3166
        %v3293 = vpack.c.b16 %v3169, %v3167
        %v3294 = vpack.c.b16 %v3172, %v3170
        %v3295 = vpack.c.b16 %v3173, %v3171
        %v3296 = vpack.c.b16 %v3176, %v3174
        %v3297 = vpack.c.b16 %v3177, %v3175
        %v3298 = vpack.c.b16 %v3180, %v3178
        %v3299 = vpack.c.b16 %v3181, %v3179
        %v3300 = vpack.c.b16 %v3184, %v3182
        %v3301 = vpack.c.b16 %v3185, %v3183
        %v3302 = vpack.c.b16 %v3188, %v3186
        %v3303 = vpack.c.b16 %v3189, %v3187
        %v3304 = vpack.c.b16 %v3192, %v3190
        %v3305 = vpack.c.b16 %v3193, %v3191
        %v3306 = vpack.c.b16 %v3196, %v3194
        %v3307 = vpack.c.b16 %v3197, %v3195
        %v3308 = vpack.c.b16 %v3200, %v3198
        %v3309 = vpack.c.b16 %v3201, %v3199
        %v3310 = vpack.c.b16 %v3204, %v3202
        %v3311 = vpack.c.b16 %v3205, %v3203
        %v3312 = vpack.c.b16 %v3208, %v3206
        %v3313 = vpack.c.b16 %v3209, %v3207
        %v3314 = vpack.c.b16 %v3212, %v3210
        %v3315 = vpack.c.b16 %v3213, %v3211
        %v3316 = vpack.c.b16 %v3216, %v3214
        %v3317 = vpack.c.b16 %v3217, %v3215
        %v3318 = vpack.c.b16 %v3220, %v3218
        %v3319 = vpack.c.b16 %v3221, %v3219
        %v3320 = vpack.c.b16 %v3224, %v3222
        %v3321 = vpack.c.b16 %v3225, %v3223
        %3418 = vmatprep.subr.bf16.mxu0 %v3227
        %3419 = vmatpush1.bf16.msra.mxu0 %v3226
        %3420 = vmatprep.subr.bf16.mxu0 %v3229
        %3421 = vmatpush1.bf16.msra.mxu0 %v3228
        %3422 = vmatprep.subr.bf16.mxu0 %v3231
        %3423 = vmatpush1.bf16.msra.mxu0 %v3230
        %3424 = vmatprep.subr.bf16.mxu0 %v3233
        %3425 = vmatpush1.bf16.msra.mxu0 %v3232
        %3426 = vmatprep.subr.bf16.mxu0 %v3235
        %3427 = vmatpush1.bf16.msra.mxu0 %v3234
        %3428 = vmatprep.subr.bf16.mxu0 %v3237
        %3429 = vmatpush1.bf16.msra.mxu0 %v3236
        %3430 = vmatprep.subr.bf16.mxu0 %v3239
        %3431 = vmatpush1.bf16.msra.mxu0 %v3238
        %3432 = vmatprep.subr.bf16.mxu0 %v3241
        %3433 = vmatpush1.bf16.msra.mxu0 %v3240
        %3434 = vmatprep.subr.bf16.mxu0 %v3243
        %3435 = vmatpush1.bf16.msra.mxu0 %v3242
        %3436 = vmatprep.subr.bf16.mxu0 %v3245
        %3437 = vmatpush1.bf16.msra.mxu0 %v3244
        %3438 = vmatprep.subr.bf16.mxu0 %v3247
        %3439 = vmatpush1.bf16.msra.mxu0 %v3246
        %3440 = vmatprep.subr.bf16.mxu0 %v3249
        %3441 = vmatpush1.bf16.msra.mxu0 %v3248
        %3442 = vmatprep.subr.bf16.mxu0 %v3251
        %3443 = vmatpush1.bf16.msra.mxu0 %v3250
        %3444 = vmatprep.subr.bf16.mxu0 %v3253
        %3445 = vmatpush1.bf16.msra.mxu0 %v3252
        %3446 = vmatprep.subr.bf16.mxu0 %v3255
        %3447 = vmatpush1.bf16.msra.mxu0 %v3254
        %3448 = vmatprep.subr.bf16.mxu0 %v3257
        %3449 = vmatpush1.bf16.msra.mxu0 %v3256
        %3450 = vmatprep.mubr.bf16.mxu0 %v2819
        %3451 = vmatmul.mubr.bf16.gmra.mrb[0].mxu0 %v2818
        %v3452 = vpop.f32.mrb[0].mxu0
        %v3453 = vadd.f32 %v2931, %v3452
        %v3454 = vpop.f32.mrb[0].mxu0
        %v3455 = vadd.f32 %v2935, %v3454
        %v3456 = vpop.f32.mrb[0].mxu0
        %v3457 = vadd.f32 %v2931, %v3456
        %v3458 = vpop.f32.mrb[0].mxu0
        %v3459 = vadd.f32 %v2935, %v3458
        %3460 = vmatprep.mubr.bf16.mxu0 %v2825
        %3461 = vmatmul.mubr.bf16.gmra.mrb[0].mxu0 %v2824
        %v3462 = vpop.f32.mrb[0].mxu0
        %v3463 = vadd.f32 %v2931, %v3462
        %v3464 = vpop.f32.mrb[0].mxu0
        %v3465 = vadd.f32 %v2935, %v3464
        %v3466 = vpop.f32.mrb[0].mxu0
        %v3467 = vadd.f32 %v2931, %v3466
        %v3468 = vpop.f32.mrb[0].mxu0
        %v3469 = vadd.f32 %v2935, %v3468
        %3470 = vdwg.mxu0
        %3471 = vmatprep.subr.bf16.mxu0 %v3259
        %3472 = vmatpush1.bf16.msra.mxu0 %v3258
        %3473 = vmatprep.subr.bf16.mxu0 %v3261
        %3474 = vmatpush1.bf16.msra.mxu0 %v3260
        %3475 = vmatprep.subr.bf16.mxu0 %v3263
        %3476 = vmatpush1.bf16.msra.mxu0 %v3262
        %3477 = vmatprep.subr.bf16.mxu0 %v3265
        %3478 = vmatpush1.bf16.msra.mxu0 %v3264
        %3479 = vmatprep.subr.bf16.mxu0 %v3267
        %3480 = vmatpush1.bf16.msra.mxu0 %v3266
        %3481 = vmatprep.subr.bf16.mxu0 %v3269
        %3482 = vmatpush1.bf16.msra.mxu0 %v3268
        %3483 = vmatprep.subr.bf16.mxu0 %v3271
        %3484 = vmatpush1.bf16.msra.mxu0 %v3270
        %3485 = vmatprep.subr.bf16.mxu0 %v3273
        %3486 = vmatpush1.bf16.msra.mxu0 %v3272
        %3487 = vmatprep.subr.bf16.mxu0 %v3275
        %3488 = vmatpush1.bf16.msra.mxu0 %v3274
        %3489 = vmatprep.subr.bf16.mxu0 %v3277
        %3490 = vmatpush1.bf16.msra.mxu0 %v3276
        %3491 = vmatprep.subr.bf16.mxu0 %v3279
        %3492 = vmatpush1.bf16.msra.mxu0 %v3278
        %3493 = vmatprep.subr.bf16.mxu0 %v3281
        %3494 = vmatpush1.bf16.msra.mxu0 %v3280
        %3495 = vmatprep.subr.bf16.mxu0 %v3283
        %3496 = vmatpush1.bf16.msra.mxu0 %v3282
        %3497 = vmatprep.subr.bf16.mxu0 %v3285
        %3498 = vmatpush1.bf16.msra.mxu0 %v3284
        %3499 = vmatprep.subr.bf16.mxu0 %v3287
        %3500 = vmatpush1.bf16.msra.mxu0 %v3286
        %3501 = vmatprep.subr.bf16.mxu0 %v3289
        %3502 = vmatpush1.bf16.msra.mxu0 %v3288
        %3503 = vmatprep.mubr.bf16.mxu0 %v2821
        %3504 = vmatmul.mubr.bf16.gmra.mrb[0].mxu0 %v2820
        %v3505 = vpop.f32.mrb[0].mxu0
        %v3506 = vadd.f32 %v3453, %v3505
        %v3507 = vpop.f32.mrb[0].mxu0
        %v3508 = vadd.f32 %v3455, %v3507
        %v3509 = vpop.f32.mrb[0].mxu0
        %v3510 = vadd.f32 %v3457, %v3509
        %v3511 = vpop.f32.mrb[0].mxu0
        %v3512 = vadd.f32 %v3459, %v3511
        %3513 = vmatprep.mubr.bf16.mxu0 %v2827
        %3514 = vmatmul.mubr.bf16.gmra.mrb[0].mxu0 %v2826
        %v3515 = vpop.f32.mrb[0].mxu0
        %v3516 = vadd.f32 %v3463, %v3515
        %v3517 = vpop.f32.mrb[0].mxu0
        %v3518 = vadd.f32 %v3465, %v3517
        %v3519 = vpop.f32.mrb[0].mxu0
        %v3520 = vadd.f32 %v3467, %v3519
        %v3521 = vpop.f32.mrb[0].mxu0
        %v3522 = vadd.f32 %v3469, %v3521
        %3523 = vdwg.mxu0
        %3524 = vmatprep.subr.bf16.mxu0 %v3291
        %3525 = vmatpush1.bf16.msra.mxu0 %v3290
        %3526 = vmatprep.subr.bf16.mxu0 %v3293
        %3527 = vmatpush1.bf16.msra.mxu0 %v3292
        %3528 = vmatprep.subr.bf16.mxu0 %v3295
        %3529 = vmatpush1.bf16.msra.mxu0 %v3294
        %3530 = vmatprep.subr.bf16.mxu0 %v3297
        %3531 = vmatpush1.bf16.msra.mxu0 %v3296
        %3532 = vmatprep.subr.bf16.mxu0 %v3299
        %3533 = vmatpush1.bf16.msra.mxu0 %v3298
        %3534 = vmatprep.subr.bf16.mxu0 %v3301
        %3535 = vmatpush1.bf16.msra.mxu0 %v3300
        %3536 = vmatprep.subr.bf16.mxu0 %v3303
        %3537 = vmatpush1.bf16.msra.mxu0 %v3302
        %3538 = vmatprep.subr.bf16.mxu0 %v3305
        %3539 = vmatpush1.bf16.msra.mxu0 %v3304
        %3540 = vmatprep.subr.bf16.mxu0 %v3307
        %3541 = vmatpush1.bf16.msra.mxu0 %v3306
        %3542 = vmatprep.subr.bf16.mxu0 %v3309
        %3543 = vmatpush1.bf16.msra.mxu0 %v3308
        %3544 = vmatprep.subr.bf16.mxu0 %v3311
        %3545 = vmatpush1.bf16.msra.mxu0 %v3310
        %3546 = vmatprep.subr.bf16.mxu0 %v3313
        %3547 = vmatpush1.bf16.msra.mxu0 %v3312
        %3548 = vmatprep.subr.bf16.mxu0 %v3315
        %3549 = vmatpush1.bf16.msra.mxu0 %v3314
        %3550 = vmatprep.subr.bf16.mxu0 %v3317
        %3551 = vmatpush1.bf16.msra.mxu0 %v3316
        %3552 = vmatprep.subr.bf16.mxu0 %v3319
        %3553 = vmatpush1.bf16.msra.mxu0 %v3318
        %3554 = vmatprep.subr.bf16.mxu0 %v3321
        %3555 = vmatpush1.bf16.msra.mxu0 %v3320
        %3556 = vmatprep.mubr.bf16.mxu0 %v2823
        %3557 = vmatmul.mubr.bf16.gmra.mrb[0].mxu0 %v2822
        %v3558 = vpop.f32.mrb[0].mxu0
        %v3559 = vadd.f32 %v3506, %v3558
        %v3560 = vpop.f32.mrb[0].mxu0
        %v3561 = vadd.f32 %v3508, %v3560
        %v3562 = vpop.f32.mrb[0].mxu0
        %v3563 = vadd.f32 %v3510, %v3562
        %v3564 = vpop.f32.mrb[0].mxu0
        %v3565 = vadd.f32 %v3512, %v3564
        %3566 = vmatprep.mubr.bf16.mxu0 %v2829
        %3567 = vmatmul.mubr.bf16.gmra.mrb[0].mxu0 %v2828
        %v3568 = vpop.f32.mrb[0].mxu0
        %v3569 = vadd.f32 %v3516, %v3568
        %v3570 = vpop.f32.mrb[0].mxu0
        %v3571 = vadd.f32 %v3518, %v3570
        %v3572 = vpop.f32.mrb[0].mxu0
        %v3573 = vadd.f32 %v3520, %v3572
        %v3574 = vpop.f32.mrb[0].mxu0
        %v3575 = vadd.f32 %v3522, %v3574
        %3576 = vdwg.mxu0
        %v3577 = vadd.f32 %v2153, %v3559
        %v3578 = vadd.f32 %v2154, %v3561
        %v3579 = vadd.f32 %v2155, %v3563
        %v3580 = vadd.f32 %v2156, %v3565
        %v3581 = vadd.f32 %v2157, %v3569
        %v3582 = vadd.f32 %v2158, %v3571
        %v3583 = vadd.f32 %v2159, %v3573
        %v3584 = vadd.f32 %v2160, %v3575
        %v3585 = vld [vmem:[%s753] sm:$0x3]
        %v3586 = vld [vmem:[%s757] sm:$0x3]
        %v3587 = vsel %vm1284, %v3578, 0.0
        %v3588 = vadd.f32 %v3577, %v3587
        %3589 = vadd.xlane.f32.xlu0 %v3588
        %v3590 = vpop.xlane.xlu0 %3589
        %v3591 = vsel %vm1284, %v3580, 0.0
        %v3592 = vadd.f32 %v3579, %v3591
        %3593 = vadd.xlane.f32.xlu0 %v3592
        %v3594 = vpop.xlane.xlu0 %3593
        %v3595 = vsel %vm1284, %v3582, 0.0
        %v3596 = vadd.f32 %v3581, %v3595
        %3597 = vadd.xlane.f32.xlu0 %v3596
        %v3598 = vpop.xlane.xlu0 %3597
        %v3599 = vsel %vm1284, %v3584, 0.0
        %v3600 = vadd.f32 %v3583, %v3599
        %3601 = vadd.xlane.f32.xlu0 %v3600
        %v3602 = vpop.xlane.xlu0 %3601
        %v3603 = vmul.f32 %v3590, %v2066
        %v3604 = vmul.f32 %v3594, %v2066
        %v3605 = vmul.f32 %v3598, %v2066
        %v3606 = vmul.f32 %v3602, %v2066
        %v3607 = vsub.f32 %v3577, %v3603
        %v3608 = vsub.f32 %v3578, %v3603
        %v3609 = vsub.f32 %v3579, %v3604
        %v3610 = vsub.f32 %v3580, %v3604
        %v3611 = vsub.f32 %v3581, %v3605
        %v3612 = vsub.f32 %v3582, %v3605
        %v3613 = vsub.f32 %v3583, %v3606
        %v3614 = vsub.f32 %v3584, %v3606
        %v3615 = vmul.f32 %v3607, %v3607
        %v3616 = vmul.f32 %v3608, %v3608
        %v3617 = vmul.f32 %v3609, %v3609
        %v3618 = vmul.f32 %v3610, %v3610
        %v3619 = vmul.f32 %v3611, %v3611
        %v3620 = vmul.f32 %v3612, %v3612
        %v3621 = vmul.f32 %v3613, %v3613
        %v3622 = vmul.f32 %v3614, %v3614
        %v3623 = vsel %vm1284, %v3616, 0.0
        %v3624 = vadd.f32 %v3615, %v3623
        %3625 = vadd.xlane.f32.xlu0 %v3624
        %v3626 = vpop.xlane.xlu0 %3625
        %v3627 = vsel %vm1284, %v3618, 0.0
        %v3628 = vadd.f32 %v3617, %v3627
        %3629 = vadd.xlane.f32.xlu0 %v3628
        %v3630 = vpop.xlane.xlu0 %3629
        %v3631 = vsel %vm1284, %v3620, 0.0
        %v3632 = vadd.f32 %v3619, %v3631
        %3633 = vadd.xlane.f32.xlu0 %v3632
        %v3634 = vpop.xlane.xlu0 %3633
        %v3635 = vsel %vm1284, %v3622, 0.0
        %v3636 = vadd.f32 %v3621, %v3635
        %3637 = vadd.xlane.f32.xlu0 %v3636
        %v3638 = vpop.xlane.xlu0 %3637
        %v3639 = vmul.f32 %v3626, %v2066
        %v3640 = vmul.f32 %v3630, %v2066
        %v3641 = vmul.f32 %v3634, %v2066
        %v3642 = vmul.f32 %v3638, %v2066
        %v3643 = vadd.f32 %v3639, 1e-05
        %v3644 = vadd.f32 %v3640, 1e-05
        %v3645 = vadd.f32 %v3641, 1e-05
        %v3646 = vadd.f32 %v3642, 1e-05
        %v3647 = vrsqrt.pop %v3643
        %v3648 = vrsqrt.pop %v3644
        %v3649 = vrsqrt.pop %v3645
        %v3650 = vrsqrt.pop %v3646
        %v3651 = vmul.f32 %v3607, %v3647
        %v3652 = vmul.f32 %v3608, %v3647
        %v3653 = vmul.f32 %v3609, %v3648
        %v3654 = vmul.f32 %v3610, %v3648
        %v3655 = vmul.f32 %v3611, %v3649
        %v3656 = vmul.f32 %v3612, %v3649
        %v3657 = vmul.f32 %v3613, %v3650
        %v3658 = vmul.f32 %v3614, %v3650
        %v3660 = vlaneseq
        %v3661 = vshrl.u32 %v3660, 7
        %v3662 = vsub.s32 0, %v3661
        %v3663 = vrot.slane %v3585, %v3662
        %v3664 = vlaneseq
        %v3665 = vshrl.u32 %v3664, 7
        %v3666 = vsub.s32 1, %v3665
        %v3667 = vrot.slane %v3585, %v3666
        %v3670 = vmul.f32 %v3651, %v3663
        %v3671 = vmul.f32 %v3652, %v3667
        %v3672 = vmul.f32 %v3653, %v3663
        %v3673 = vmul.f32 %v3654, %v3667
        %v3674 = vmul.f32 %v3655, %v3663
        %v3675 = vmul.f32 %v3656, %v3667
        %v3676 = vmul.f32 %v3657, %v3663
        %v3677 = vmul.f32 %v3658, %v3667
        %v3679 = vlaneseq
        %v3680 = vshrl.u32 %v3679, 7
        %v3681 = vsub.s32 0, %v3680
        %v3682 = vrot.slane %v3586, %v3681
        %v3683 = vlaneseq
        %v3684 = vshrl.u32 %v3683, 7
        %v3685 = vsub.s32 1, %v3684
        %v3686 = vrot.slane %v3586, %v3685
        %v3689 = vadd.f32 %v3670, %v3682
        %v3690 = vadd.f32 %v3671, %v3686
        %v3691 = vadd.f32 %v3672, %v3682
        %v3692 = vadd.f32 %v3673, %v3686
        %v3693 = vadd.f32 %v3674, %v3682
        %v3694 = vadd.f32 %v3675, %v3686
        %v3695 = vadd.f32 %v3676, %v3682
        %v3696 = vadd.f32 %v3677, %v3686
        %3697 = vst [vmem:[#allocation2] sm:$0xff] %v3689
        %3698 = vst.msk [vmem:[#allocation2 + $0x8] sm:$0xff] %vm1284, %v3690
        %3699 = vst [vmem:[#allocation2 + $0x10] sm:$0xff] %v3691
        %3700 = vst.msk [vmem:[#allocation2 + $0x18] sm:$0xff] %vm1284, %v3692
        %3701 = vst [vmem:[#allocation2 + $0x20] sm:$0xff] %v3693
        %3702 = vst.msk [vmem:[#allocation2 + $0x28] sm:$0xff] %vm1284, %v3694
        %3703 = vst [vmem:[#allocation2 + $0x30] sm:$0xff] %v3695
        %3704 = vst.msk [vmem:[#allocation2 + $0x38] sm:$0xff] %vm1284, %v3696
        %p3705 = scmp.eq.s32.totalorder %s30, 1
        // Predicated region
        $region97: #{transformer_classifier_forward.1} parent=91 // pred_check
          %p3706 = pneg %p3705
        $region98: #{transformer_classifier_forward.1} parent=91 // pred_check_branch
          %3708 = sbr.rel (%p3706) target = $region100
        $region99: #{transformer_classifier_forward.1} parent=91 // pred_region
          %v3709 = vpack.c.bf16 %v3691, %v3689
          %v3710 = vpack.c.bf16 %v3692, %v3690
          %v3711 = vpack.c.bf16 %v3695, %v3693
          %v3712 = vpack.c.bf16 %v3696, %v3694
          %v3713 = vld [vmem:[%s14] sm:$0xff]
          %v3714 = vld [vmem:[%s14 + $0x8] sm:$0xf]
          %v3715 = vld [vmem:[%s14 + $0xc] sm:$0xff]
          %v3716 = vld [vmem:[%s14 + $0x14] sm:$0xf]
          %v3717 = vld [vmem:[%s14 + $0x18] sm:$0xff]
          %v3718 = vld [vmem:[%s14 + $0x20] sm:$0xf]
          %v3719 = vld [vmem:[%s14 + $0x24] sm:$0xff]
          %v3720 = vld [vmem:[%s14 + $0x2c] sm:$0xf]
          %v3721 = vld [vmem:[%s14 + $0x30] sm:$0xff]
          %v3722 = vld [vmem:[%s14 + $0x38] sm:$0xf]
          %v3723 = vld [vmem:[%s14 + $0x3c] sm:$0xff]
          %v3724 = vld [vmem:[%s14 + $0x44] sm:$0xf]
          %v3725 = vld [vmem:[%s14 + $0x48] sm:$0xff]
          %v3726 = vld [vmem:[%s14 + $0x50] sm:$0xf]
          %v3727 = vld [vmem:[%s14 + $0x54] sm:$0xff]
          %v3728 = vld [vmem:[%s14 + $0x5c] sm:$0xf]
          %v3729 = vld [vmem:[%s14 + $0x60] sm:$0xff]
          %v3730 = vld [vmem:[%s14 + $0x68] sm:$0xf]
          %v3731 = vld [vmem:[%s14 + $0x6c] sm:$0xff]
          %v3732 = vld [vmem:[%s14 + $0x74] sm:$0xf]
          %v3733 = vld [vmem:[%s14 + $0x78] sm:$0xff]
          %v3734 = vld [vmem:[%s14 + $0x80] sm:$0xf]
          %v3735 = vld [vmem:[%s14 + $0x84] sm:$0xff]
          %v3736 = vld [vmem:[%s14 + $0x8c] sm:$0xf]
          %v3737 = vld [vmem:[%s14 + $0x90] sm:$0xff]
          %v3738 = vld [vmem:[%s14 + $0x98] sm:$0xf]
          %v3739 = vld [vmem:[%s14 + $0x9c] sm:$0xff]
          %v3740 = vld [vmem:[%s14 + $0xa4] sm:$0xf]
          %v3741 = vld [vmem:[%s14 + $0xa8] sm:$0xff]
          %v3742 = vld [vmem:[%s14 + $0xb0] sm:$0xf]
          %v3743 = vld [vmem:[%s14 + $0xb4] sm:$0xff]
          %v3744 = vld [vmem:[%s14 + $0xbc] sm:$0xf]
          %v3745 = vld [vmem:[%s14 + $0xc0] sm:$0xff]
          %v3746 = vld [vmem:[%s14 + $0xc8] sm:$0xf]
          %v3747 = vld [vmem:[%s14 + $0xcc] sm:$0xff]
          %v3748 = vld [vmem:[%s14 + $0xd4] sm:$0xf]
          %v3749 = vld [vmem:[%s14 + $0xd8] sm:$0xff]
          %v3750 = vld [vmem:[%s14 + $0xe0] sm:$0xf]
          %v3751 = vld [vmem:[%s14 + $0xe4] sm:$0xff]
          %v3752 = vld [vmem:[%s14 + $0xec] sm:$0xf]
          %v3753 = vld [vmem:[%s14 + $0xf0] sm:$0xff]
          %v3754 = vld [vmem:[%s14 + $0xf8] sm:$0xf]
          %v3755 = vld [vmem:[%s14 + $0xfc] sm:$0xff]
          %v3756 = vld [vmem:[%s14 + $0x104] sm:$0xf]
          %v3757 = vld [vmem:[%s14 + $0x108] sm:$0xff]
          %v3758 = vld [vmem:[%s14 + $0x110] sm:$0xf]
          %v3759 = vld [vmem:[%s14 + $0x114] sm:$0xff]
          %v3760 = vld [vmem:[%s14 + $0x11c] sm:$0xf]
          %v3809 = vunpack.c.l.b16 %v3713
          %v3810 = vunpack.c.h.b16 %v3713
          %v3811 = vunpack.c.l.b16 %v3714
          %v3812 = vunpack.c.l.b16 %v3715
          %v3813 = vunpack.c.h.b16 %v3715
          %v3814 = vunpack.c.l.b16 %v3716
          %v3815 = vunpack.c.l.b16 %v3717
          %v3816 = vunpack.c.h.b16 %v3717
          %v3817 = vunpack.c.l.b16 %v3718
          %v3818 = vunpack.c.l.b16 %v3719
          %v3819 = vunpack.c.h.b16 %v3719
          %v3820 = vunpack.c.l.b16 %v3720
          %v3821 = vunpack.c.l.b16 %v3721
          %v3822 = vunpack.c.h.b16 %v3721
          %v3823 = vunpack.c.l.b16 %v3722
          %v3824 = vunpack.c.l.b16 %v3723
          %v3825 = vunpack.c.h.b16 %v3723
          %v3826 = vunpack.c.l.b16 %v3724
          %v3827 = vunpack.c.l.b16 %v3725
          %v3828 = vunpack.c.h.b16 %v3725
          %v3829 = vunpack.c.l.b16 %v3726
          %v3830 = vunpack.c.l.b16 %v3727
          %v3831 = vunpack.c.h.b16 %v3727
          %v3832 = vunpack.c.l.b16 %v3728
          %v3833 = vunpack.c.l.b16 %v3729
          %v3834 = vunpack.c.h.b16 %v3729
          %v3835 = vunpack.c.l.b16 %v3730
          %v3836 = vunpack.c.l.b16 %v3731
          %v3837 = vunpack.c.h.b16 %v3731
          %v3838 = vunpack.c.l.b16 %v3732
          %v3839 = vunpack.c.l.b16 %v3733
          %v3840 = vunpack.c.h.b16 %v3733
          %v3841 = vunpack.c.l.b16 %v3734
          %v3842 = vunpack.c.l.b16 %v3735
          %v3843 = vunpack.c.h.b16 %v3735
          %v3844 = vunpack.c.l.b16 %v3736
          %v3845 = vunpack.c.l.b16 %v3737
          %v3846 = vunpack.c.h.b16 %v3737
          %v3847 = vunpack.c.l.b16 %v3738
          %v3848 = vunpack.c.l.b16 %v3739
          %v3849 = vunpack.c.h.b16 %v3739
          %v3850 = vunpack.c.l.b16 %v3740
          %v3851 = vunpack.c.l.b16 %v3741
          %v3852 = vunpack.c.h.b16 %v3741
          %v3853 = vunpack.c.l.b16 %v3742
          %v3854 = vunpack.c.l.b16 %v3743
          %v3855 = vunpack.c.h.b16 %v3743
          %v3856 = vunpack.c.l.b16 %v3744
          %v3857 = vunpack.c.l.b16 %v3745
          %v3858 = vunpack.c.h.b16 %v3745
          %v3859 = vunpack.c.l.b16 %v3746
          %v3860 = vunpack.c.l.b16 %v3747
          %v3861 = vunpack.c.h.b16 %v3747
          %v3862 = vunpack.c.l.b16 %v3748
          %v3863 = vunpack.c.l.b16 %v3749
          %v3864 = vunpack.c.h.b16 %v3749
          %v3865 = vunpack.c.l.b16 %v3750
          %v3866 = vunpack.c.l.b16 %v3751
          %v3867 = vunpack.c.h.b16 %v3751
          %v3868 = vunpack.c.l.b16 %v3752
          %v3869 = vunpack.c.l.b16 %v3753
          %v3870 = vunpack.c.h.b16 %v3753
          %v3871 = vunpack.c.l.b16 %v3754
          %v3872 = vunpack.c.l.b16 %v3755
          %v3873 = vunpack.c.h.b16 %v3755
          %v3874 = vunpack.c.l.b16 %v3756
          %v3875 = vunpack.c.l.b16 %v3757
          %v3876 = vunpack.c.h.b16 %v3757
          %v3877 = vunpack.c.l.b16 %v3758
          %v3878 = vunpack.c.l.b16 %v3759
          %v3879 = vunpack.c.h.b16 %v3759
          %v3880 = vunpack.c.l.b16 %v3760
          %v3881 = vpack.c.b16 %v3812, %v3809
          %v3882 = vpack.c.b16 %v3813, %v3810
          %v3883 = vpack.c.b16 %v3814, %v3811
          %v3884 = vpack.c.b16 %v3818, %v3815
          %v3885 = vpack.c.b16 %v3819, %v3816
          %v3886 = vpack.c.b16 %v3820, %v3817
          %v3887 = vpack.c.b16 %v3824, %v3821
          %v3888 = vpack.c.b16 %v3825, %v3822
          %v3889 = vpack.c.b16 %v3826, %v3823
          %v3890 = vpack.c.b16 %v3830, %v3827
          %v3891 = vpack.c.b16 %v3831, %v3828
          %v3892 = vpack.c.b16 %v3832, %v3829
          %v3893 = vpack.c.b16 %v3836, %v3833
          %v3894 = vpack.c.b16 %v3837, %v3834
          %v3895 = vpack.c.b16 %v3838, %v3835
          %v3896 = vpack.c.b16 %v3842, %v3839
          %v3897 = vpack.c.b16 %v3843, %v3840
          %v3898 = vpack.c.b16 %v3844, %v3841
          %v3899 = vpack.c.b16 %v3848, %v3845
          %v3900 = vpack.c.b16 %v3849, %v3846
          %v3901 = vpack.c.b16 %v3850, %v3847
          %v3902 = vpack.c.b16 %v3854, %v3851
          %v3903 = vpack.c.b16 %v3855, %v3852
          %v3904 = vpack.c.b16 %v3856, %v3853
          %v3905 = vpack.c.b16 %v3860, %v3857
          %v3906 = vpack.c.b16 %v3861, %v3858
          %v3907 = vpack.c.b16 %v3862, %v3859
          %v3908 = vpack.c.b16 %v3866, %v3863
          %v3909 = vpack.c.b16 %v3867, %v3864
          %v3910 = vpack.c.b16 %v3868, %v3865
          %v3911 = vpack.c.b16 %v3872, %v3869
          %v3912 = vpack.c.b16 %v3873, %v3870
          %v3913 = vpack.c.b16 %v3874, %v3871
          %v3914 = vpack.c.b16 %v3878, %v3875
          %v3915 = vpack.c.b16 %v3879, %v3876
          %v3916 = vpack.c.b16 %v3880, %v3877
          %v3954 = vsel %vm1284, %v3710, 0
          %v3957 = vsel %vm1284, %v3712, 0
          %3959 = vmatprep.subr.bf16.mxu0 %v3882
          %3960 = vmatpush1.bf16.msra.mxu0 %v3881
          %3961 = vmatprep.subr.bf16.mxu0 %v3885
          %3962 = vmatpush1.bf16.msra.mxu0 %v3884
          %3963 = vmatprep.subr.bf16.mxu0 %v3888
          %3964 = vmatpush1.bf16.msra.mxu0 %v3887
          %3965 = vmatprep.subr.bf16.mxu0 %v3891
          %3966 = vmatpush1.bf16.msra.mxu0 %v3890
          %3967 = vmatprep.subr.bf16.mxu0 %v3894
          %3968 = vmatpush1.bf16.msra.mxu0 %v3893
          %3969 = vmatprep.subr.bf16.mxu0 %v3897
          %3970 = vmatpush1.bf16.msra.mxu0 %v3896
          %3971 = vmatprep.subr.bf16.mxu0 %v3900
          %3972 = vmatpush1.bf16.msra.mxu0 %v3899
          %3973 = vmatprep.subr.bf16.mxu0 %v3903
          %3974 = vmatpush1.bf16.msra.mxu0 %v3902
          %3975 = vmatprep.subr.bf16.mxu0 %v3906
          %3976 = vmatpush1.bf16.msra.mxu0 %v3905
          %3977 = vmatprep.subr.bf16.mxu0 %v3909
          %3978 = vmatpush1.bf16.msra.mxu0 %v3908
          %3979 = vmatprep.subr.bf16.mxu0 %v3912
          %3980 = vmatpush1.bf16.msra.mxu0 %v3911
          %3981 = vmatprep.subr.bf16.mxu0 %v3915
          %3982 = vmatpush1.bf16.msra.mxu0 %v3914
          %3983 = vmatprep.subr.bf16.mxu0 0
          %3984 = vmatpush1.bf16.msra.mxu0 0
          %3985 = vmatprep.subr.bf16.mxu0 0
          %3986 = vmatpush1.bf16.msra.mxu0 0
          %3987 = vmatprep.subr.bf16.mxu0 0
          %3988 = vmatpush1.bf16.msra.mxu0 0
          %3989 = vmatprep.subr.bf16.mxu0 0
          %3990 = vmatpush1.bf16.msra.mxu0 0
          %3991 = vmatprep.mubr.bf16.mxu0 %v3954
          %3992 = vmatmul.mubr.bf16.gmra.mrb[0].mxu0 %v3709
          %v3993 = vpop.f32.mrb[0].mxu0
          %v3994 = vadd.f32 0.0, %v3993
          %v3995 = vpop.f32.mrb[0].mxu0
          %v3996 = vadd.f32 0.0, %v3995
          %v3997 = vpop.f32.mrb[0].mxu0
          %v3998 = vadd.f32 0.0, %v3997
          %v3999 = vpop.f32.mrb[0].mxu0
          %v4000 = vadd.f32 0.0, %v3999
          %4001 = vmatprep.mubr.bf16.mxu0 %v3957
          %4002 = vmatmul.mubr.bf16.gmra.mrb[0].mxu0 %v3711
          %v4003 = vpop.f32.mrb[0].mxu0
          %v4004 = vadd.f32 0.0, %v4003
          %v4005 = vpop.f32.mrb[0].mxu0
          %v4006 = vadd.f32 0.0, %v4005
          %v4007 = vpop.f32.mrb[0].mxu0
          %v4008 = vadd.f32 0.0, %v4007
          %v4009 = vpop.f32.mrb[0].mxu0
          %v4010 = vadd.f32 0.0, %v4009
          %4011 = vdwg.mxu0
          %4012 = vmatprep.subr.bf16.mxu0 0
          %4013 = vmatpush1.bf16.msra.mxu0 %v3883
          %4014 = vmatprep.subr.bf16.mxu0 0
          %4015 = vmatpush1.bf16.msra.mxu0 %v3886
          %4016 = vmatprep.subr.bf16.mxu0 0
          %4017 = vmatpush1.bf16.msra.mxu0 %v3889
          %4018 = vmatprep.subr.bf16.mxu0 0
          %4019 = vmatpush1.bf16.msra.mxu0 %v3892
          %4020 = vmatprep.subr.bf16.mxu0 0
          %4021 = vmatpush1.bf16.msra.mxu0 %v3895
          %4022 = vmatprep.subr.bf16.mxu0 0
          %4023 = vmatpush1.bf16.msra.mxu0 %v3898
          %4024 = vmatprep.subr.bf16.mxu0 0
          %4025 = vmatpush1.bf16.msra.mxu0 %v3901
          %4026 = vmatprep.subr.bf16.mxu0 0
          %4027 = vmatpush1.bf16.msra.mxu0 %v3904
          %4028 = vmatprep.subr.bf16.mxu0 0
          %4029 = vmatpush1.bf16.msra.mxu0 %v3907
          %4030 = vmatprep.subr.bf16.mxu0 0
          %4031 = vmatpush1.bf16.msra.mxu0 %v3910
          %4032 = vmatprep.subr.bf16.mxu0 0
          %4033 = vmatpush1.bf16.msra.mxu0 %v3913
          %4034 = vmatprep.subr.bf16.mxu0 0
          %4035 = vmatpush1.bf16.msra.mxu0 %v3916
          %4036 = vmatprep.subr.bf16.mxu0 0
          %4037 = vmatpush1.bf16.msra.mxu0 0
          %4038 = vmatprep.subr.bf16.mxu0 0
          %4039 = vmatpush1.bf16.msra.mxu0 0
          %4040 = vmatprep.subr.bf16.mxu0 0
          %4041 = vmatpush1.bf16.msra.mxu0 0
          %4042 = vmatprep.subr.bf16.mxu0 0
          %4043 = vmatpush1.bf16.msra.mxu0 0
          %4044 = vmatprep.mubr.bf16.mxu0 %v3954
          %4045 = vmatmul.mubr.bf16.gmra.mrb[0].mxu0 %v3709
          %v4046 = vpop.f32.mrb[0].mxu0
          %v4047 = vadd.f32 0.0, %v4046
          %v4048 = vpop.f32.mrb[0].mxu0
          %v4049 = vpop.f32.mrb[0].mxu0
          %v4050 = vadd.f32 0.0, %v4049
          %v4051 = vpop.f32.mrb[0].mxu0
          %4052 = vmatprep.mubr.bf16.mxu0 %v3957
          %4053 = vmatmul.mubr.bf16.gmra.mrb[0].mxu0 %v3711
          %v4054 = vpop.f32.mrb[0].mxu0
          %v4055 = vadd.f32 0.0, %v4054
          %v4056 = vpop.f32.mrb[0].mxu0
          %v4057 = vpop.f32.mrb[0].mxu0
          %v4058 = vadd.f32 0.0, %v4057
          %v4059 = vpop.f32.mrb[0].mxu0
          %4060 = vdwg.mxu0
          %v4061 = vld [vmem:[%s16] sm:$0xff]
          %v4062 = vld [vmem:[%s16 + $0x8] sm:$0xff]
          %v4063 = vld [vmem:[%s16 + $0x10] sm:$0xff]
          %v4064 = vld [vmem:[%s16 + $0x18] sm:$0xff]
          %v4065 = vld [vmem:[%s16 + $0x20] sm:$0xff]
          %v4066 = vld [vmem:[%s16 + $0x28] sm:$0xff]
          %v4067 = vmul.f32 %v3994, %v4061
          %v4068 = vmul.f32 %v3996, %v4062
          %v4069 = vmul.f32 %v4047, %v4063
          %v4070 = vmul.f32 %v3998, %v4064
          %v4071 = vmul.f32 %v4000, %v4065
          %v4072 = vmul.f32 %v4050, %v4066
          %v4073 = vmul.f32 %v4004, %v4061
          %v4074 = vmul.f32 %v4006, %v4062
          %v4075 = vmul.f32 %v4055, %v4063
          %v4076 = vmul.f32 %v4008, %v4064
          %v4077 = vmul.f32 %v4010, %v4065
          %v4078 = vmul.f32 %v4058, %v4066
          %v4079 = vld [vmem:[%s15] sm:$0xff]
          %v4080 = vld [vmem:[%s15 + $0x8] sm:$0xff]
          %v4081 = vld [vmem:[%s15 + $0x10] sm:$0xff]
          %v4082 = vld [vmem:[%s15 + $0x18] sm:$0xff]
          %v4083 = vld [vmem:[%s15 + $0x20] sm:$0xff]
          %v4084 = vld [vmem:[%s15 + $0x28] sm:$0xff]
          %v4085 = vld [vmem:[%s15 + $0x30] sm:$0xff]
          %v4086 = vld [vmem:[%s15 + $0x38] sm:$0xff]
          %v4087 = vld [vmem:[%s15 + $0x40] sm:$0xff]
          %v4088 = vld [vmem:[%s15 + $0x48] sm:$0xff]
          %v4089 = vld [vmem:[%s15 + $0x50] sm:$0xff]
          %v4090 = vld [vmem:[%s15 + $0x58] sm:$0xff]
          %v4091 = vld [vmem:[%s15 + $0x60] sm:$0xff]
          %v4092 = vld [vmem:[%s15 + $0x68] sm:$0xff]
          %v4093 = vld [vmem:[%s15 + $0x70] sm:$0xff]
          %v4094 = vld [vmem:[%s15 + $0x78] sm:$0xff]
          %v4095 = vld [vmem:[%s15 + $0x80] sm:$0xff]
          %v4096 = vld [vmem:[%s15 + $0x88] sm:$0xff]
          %v4097 = vld [vmem:[%s15 + $0x90] sm:$0xff]
          %v4098 = vld [vmem:[%s15 + $0x98] sm:$0xff]
          %v4099 = vld [vmem:[%s15 + $0xa0] sm:$0xff]
          %v4100 = vld [vmem:[%s15 + $0xa8] sm:$0xff]
          %v4101 = vld [vmem:[%s15 + $0xb0] sm:$0xff]
          %v4102 = vld [vmem:[%s15 + $0xb8] sm:$0xff]
          %v4103 = vld [vmem:[%s15 + $0xc0] sm:$0xff]
          %v4104 = vld [vmem:[%s15 + $0xc8] sm:$0xff]
          %v4105 = vld [vmem:[%s15 + $0xd0] sm:$0xff]
          %v4106 = vld [vmem:[%s15 + $0xd8] sm:$0xff]
          %v4107 = vld [vmem:[%s15 + $0xe0] sm:$0xff]
          %v4108 = vld [vmem:[%s15 + $0xe8] sm:$0xff]
          %v4109 = vld [vmem:[%s15 + $0xf0] sm:$0xff]
          %v4110 = vld [vmem:[%s15 + $0xf8] sm:$0xff]
          %v4111 = vld [vmem:[%s15 + $0x100] sm:$0xff]
          %v4112 = vld [vmem:[%s15 + $0x108] sm:$0xff]
          %v4113 = vld [vmem:[%s15 + $0x110] sm:$0xff]
          %v4114 = vld [vmem:[%s15 + $0x118] sm:$0xff]
          %v4115 = vld [vmem:[%s15 + $0x120] sm:$0xff]
          %v4116 = vld [vmem:[%s15 + $0x128] sm:$0xff]
          %v4117 = vld [vmem:[%s15 + $0x130] sm:$0xff]
          %v4118 = vld [vmem:[%s15 + $0x138] sm:$0xff]
          %v4119 = vld [vmem:[%s15 + $0x140] sm:$0xff]
          %v4120 = vld [vmem:[%s15 + $0x148] sm:$0xff]
          %vm4121 = vcmask 654336
          %v4123 = vsel %vm4121, %v4069, 0
          %v4126 = vsel %vm4121, %v4072, 0
          %v4129 = vsel %vm4121, %v4075, 0
          %v4132 = vsel %vm4121, %v4078, 0
          %4134 = vmatprep.subr.mxu0 0.0
          %4135 = vmatpush1.msra.mxu0 %v4079
          %4136 = vmatprep.subr.mxu0 0.0
          %4137 = vmatpush1.msra.mxu0 %v4080
          %4138 = vmatprep.subr.mxu0 0.0
          %4139 = vmatpush1.msra.mxu0 %v4081
          %4140 = vmatprep.subr.mxu0 0.0
          %4141 = vmatpush1.msra.mxu0 %v4082
          %4142 = vmatprep.subr.mxu0 0.0
          %4143 = vmatpush1.msra.mxu0 %v4083
          %4144 = vmatprep.subr.mxu0 0.0
          %4145 = vmatpush1.msra.mxu0 %v4084
          %4146 = vmatprep.subr.mxu0 0.0
          %4147 = vmatpush1.msra.mxu0 %v4085
          %4148 = vmatprep.subr.mxu0 0.0
          %4149 = vmatpush1.msra.mxu0 %v4086
          %4150 = vmatprep.subr.mxu0 0.0
          %4151 = vmatpush1.msra.mxu0 %v4087
          %4152 = vmatprep.subr.mxu0 0.0
          %4153 = vmatpush1.msra.mxu0 %v4088
          %4154 = vmatprep.subr.mxu0 0.0
          %4155 = vmatpush1.msra.mxu0 %v4089
          %4156 = vmatprep.subr.mxu0 0.0
          %4157 = vmatpush1.msra.mxu0 %v4090
          %4158 = vmatprep.subr.mxu0 0.0
          %4159 = vmatpush1.msra.mxu0 %v4091
          %4160 = vmatprep.subr.mxu0 0.0
          %4161 = vmatpush1.msra.mxu0 %v4092
          %4162 = vmatprep.subr.mxu0 0.0
          %4163 = vmatpush1.msra.mxu0 %v4093
          %4164 = vmatprep.subr.mxu0 0.0
          %4165 = vmatpush1.msra.mxu0 %v4094
          %4166 = vmatprep.subr.mxu0 0.0
          %4167 = vmatpush1.msra.mxu0 %v4095
          %4168 = vmatprep.subr.mxu0 0.0
          %4169 = vmatpush1.msra.mxu0 %v4096
          %4170 = vmatprep.subr.mxu0 0.0
          %4171 = vmatpush1.msra.mxu0 %v4097
          %4172 = vmatprep.subr.mxu0 0.0
          %4173 = vmatpush1.msra.mxu0 %v4098
          %4174 = vmatprep.subr.mxu0 0.0
          %4175 = vmatpush1.msra.mxu0 %v4099
          %4176 = vmatprep.subr.mxu0 0.0
          %4177 = vmatpush1.msra.mxu0 %v4100
          %4178 = vmatprep.subr.mxu0 0.0
          %4179 = vmatpush1.msra.mxu0 %v4101
          %4180 = vmatprep.subr.mxu0 0.0
          %4181 = vmatpush1.msra.mxu0 %v4102
          %4182 = vmatprep.subr.mxu0 0.0
          %4183 = vmatpush1.msra.mxu0 %v4103
          %4184 = vmatprep.subr.mxu0 0.0
          %4185 = vmatpush1.msra.mxu0 %v4104
          %4186 = vmatprep.subr.mxu0 0.0
          %4187 = vmatpush1.msra.mxu0 %v4105
          %4188 = vmatprep.subr.mxu0 0.0
          %4189 = vmatpush1.msra.mxu0 %v4106
          %4190 = vmatprep.subr.mxu0 0.0
          %4191 = vmatpush1.msra.mxu0 %v4107
          %4192 = vmatprep.subr.mxu0 0.0
          %4193 = vmatpush1.msra.mxu0 %v4108
          %4194 = vmatprep.subr.mxu0 0.0
          %4195 = vmatpush1.msra.mxu0 %v4109
          %4196 = vmatprep.subr.mxu0 0.0
          %4197 = vmatpush1.msra.mxu0 %v4110
          %4198 = vmatprep.mubr.f32.mxu0 %v4068
          %4199 = vmatmul.mubr.f32.gmra.mrb[0].mxu0 %v4067
          %v4200 = vpop.f32.mrb[0].mxu0
          %v4201 = vadd.f32 0.0, %v4200
          %v4202 = vpop.f32.mrb[0].mxu0
          %4203 = vmatprep.mubr.f32.mxu0 %v4071
          %4204 = vmatmul.mubr.f32.gmra.mrb[0].mxu0 %v4070
          %v4205 = vpop.f32.mrb[0].mxu0
          %v4206 = vadd.f32 0.0, %v4205
          %v4207 = vpop.f32.mrb[0].mxu0
          %4208 = vmatprep.mubr.f32.mxu0 %v4074
          %4209 = vmatmul.mubr.f32.gmra.mrb[0].mxu0 %v4073
          %v4210 = vpop.f32.mrb[0].mxu0
          %v4211 = vadd.f32 0.0, %v4210
          %v4212 = vpop.f32.mrb[0].mxu0
          %4213 = vmatprep.mubr.f32.mxu0 %v4077
          %4214 = vmatmul.mubr.f32.gmra.mrb[0].mxu0 %v4076
          %v4215 = vpop.f32.mrb[0].mxu0
          %v4216 = vadd.f32 0.0, %v4215
          %v4217 = vpop.f32.mrb[0].mxu0
          %4218 = vdwg.mxu0
          %4219 = vmatprep.subr.mxu0 0.0
          %4220 = vmatpush1.msra.mxu0 %v4111
          %4221 = vmatprep.subr.mxu0 0.0
          %4222 = vmatpush1.msra.mxu0 %v4112
          %4223 = vmatprep.subr.mxu0 0.0
          %4224 = vmatpush1.msra.mxu0 %v4113
          %4225 = vmatprep.subr.mxu0 0.0
          %4226 = vmatpush1.msra.mxu0 %v4114
          %4227 = vmatprep.subr.mxu0 0.0
          %4228 = vmatpush1.msra.mxu0 %v4115
          %4229 = vmatprep.subr.mxu0 0.0
          %4230 = vmatpush1.msra.mxu0 %v4116
          %4231 = vmatprep.subr.mxu0 0.0
          %4232 = vmatpush1.msra.mxu0 %v4117
          %4233 = vmatprep.subr.mxu0 0.0
          %4234 = vmatpush1.msra.mxu0 %v4118
          %4235 = vmatprep.subr.mxu0 0.0
          %4236 = vmatpush1.msra.mxu0 %v4119
          %4237 = vmatprep.subr.mxu0 0.0
          %4238 = vmatpush1.msra.mxu0 %v4120
          %4239 = vmatprep.subr.mxu0 0.0
          %4240 = vmatpush1.msra.mxu0 0.0
          %4241 = vmatprep.subr.mxu0 0.0
          %4242 = vmatpush1.msra.mxu0 0.0
          %4243 = vmatprep.subr.mxu0 0.0
          %4244 = vmatpush1.msra.mxu0 0.0
          %4245 = vmatprep.subr.mxu0 0.0
          %4246 = vmatpush1.msra.mxu0 0.0
          %4247 = vmatprep.subr.mxu0 0.0
          %4248 = vmatpush1.msra.mxu0 0.0
          %4249 = vmatprep.subr.mxu0 0.0
          %4250 = vmatpush1.msra.mxu0 0.0
          %4251 = vmatprep.subr.mxu0 0.0
          %4252 = vmatpush1.msra.mxu0 0.0
          %4253 = vmatprep.subr.mxu0 0.0
          %4254 = vmatpush1.msra.mxu0 0.0
          %4255 = vmatprep.subr.mxu0 0.0
          %4256 = vmatpush1.msra.mxu0 0.0
          %4257 = vmatprep.subr.mxu0 0.0
          %4258 = vmatpush1.msra.mxu0 0.0
          %4259 = vmatprep.subr.mxu0 0.0
          %4260 = vmatpush1.msra.mxu0 0.0
          %4261 = vmatprep.subr.mxu0 0.0
          %4262 = vmatpush1.msra.mxu0 0.0
          %4263 = vmatprep.subr.mxu0 0.0
          %4264 = vmatpush1.msra.mxu0 0.0
          %4265 = vmatprep.subr.mxu0 0.0
          %4266 = vmatpush1.msra.mxu0 0.0
          %4267 = vmatprep.subr.mxu0 0.0
          %4268 = vmatpush1.msra.mxu0 0.0
          %4269 = vmatprep.subr.mxu0 0.0
          %4270 = vmatpush1.msra.mxu0 0.0
          %4271 = vmatprep.subr.mxu0 0.0
          %4272 = vmatpush1.msra.mxu0 0.0
          %4273 = vmatprep.subr.mxu0 0.0
          %4274 = vmatpush1.msra.mxu0 0.0
          %4275 = vmatprep.subr.mxu0 0.0
          %4276 = vmatpush1.msra.mxu0 0.0
          %4277 = vmatprep.subr.mxu0 0.0
          %4278 = vmatpush1.msra.mxu0 0.0
          %4279 = vmatprep.subr.mxu0 0.0
          %4280 = vmatpush1.msra.mxu0 0.0
          %4281 = vmatprep.subr.mxu0 0.0
          %4282 = vmatpush1.msra.mxu0 0.0
          %4283 = vmatprep.mubr.f32.mxu0 0.0
          %4284 = vmatmul.mubr.f32.gmra.mrb[0].mxu0 %v4123
          %v4285 = vpop.f32.mrb[0].mxu0
          %v4286 = vadd.f32 %v4201, %v4285
          %v4287 = vpop.f32.mrb[0].mxu0
          %4288 = vmatprep.mubr.f32.mxu0 0.0
          %4289 = vmatmul.mubr.f32.gmra.mrb[0].mxu0 %v4126
          %v4290 = vpop.f32.mrb[0].mxu0
          %v4291 = vadd.f32 %v4206, %v4290
          %v4292 = vpop.f32.mrb[0].mxu0
          %4293 = vmatprep.mubr.f32.mxu0 0.0
          %4294 = vmatmul.mubr.f32.gmra.mrb[0].mxu0 %v4129
          %v4295 = vpop.f32.mrb[0].mxu0
          %v4296 = vadd.f32 %v4211, %v4295
          %v4297 = vpop.f32.mrb[0].mxu0
          %4298 = vmatprep.mubr.f32.mxu0 0.0
          %4299 = vmatmul.mubr.f32.gmra.mrb[0].mxu0 %v4132
          %v4300 = vpop.f32.mrb[0].mxu0
          %v4301 = vadd.f32 %v4216, %v4300
          %v4302 = vpop.f32.mrb[0].mxu0
          %4303 = vdwg.mxu0
          %v4304 = vmul.u32 %v801, 16
          %vm4305 = vcmp.ge.s32.totalorder %v810, %v4304
          %v4306 = vadd.s32 %v801, 1
          %v4307 = vmul.u32 %v4306, 16
          %vm4308 = vcmp.lt.s32.totalorder %v810, %v4307
          %vm4309 = vmand %vm4305, %vm4308
          %v4310 = vsel %vm4309, 1.0, 0.0
          %v4311 = vld [vmem:[%s17] sm:$0x1]
          %v4313 = vlaneseq
          %v4314 = vshrl.u32 %v4313, 7
          %v4315 = vsub.s32 0, %v4314
          %v4316 = vrot.slane %v4311, %v4315
          %v4319 = vsel %vm1513, %v4310, 0
          %4321 = vmatprep.subr.mxu0 0.0
          %4322 = vmatpush1.msra.mxu0 %v4286
          %4323 = vmatprep.subr.mxu0 0.0
          %4324 = vmatpush1.msra.mxu0 %v4291
          %4325 = vmatprep.subr.mxu0 0.0
          %4326 = vmatpush1.msra.mxu0 %v4296
          %4327 = vmatprep.subr.mxu0 0.0
          %4328 = vmatpush1.msra.mxu0 %v4301
          %4329 = vmatprep.subr.mxu0 0.0
          %4330 = vmatpush1.msra.mxu0 0.0
          %4331 = vmatprep.subr.mxu0 0.0
          %4332 = vmatpush1.msra.mxu0 0.0
          %4333 = vmatprep.subr.mxu0 0.0
          %4334 = vmatpush1.msra.mxu0 0.0
          %4335 = vmatprep.subr.mxu0 0.0
          %4336 = vmatpush1.msra.mxu0 0.0
          %4337 = vmatprep.subr.mxu0 0.0
          %4338 = vmatpush1.msra.mxu0 0.0
          %4339 = vmatprep.subr.mxu0 0.0
          %4340 = vmatpush1.msra.mxu0 0.0
          %4341 = vmatprep.subr.mxu0 0.0
          %4342 = vmatpush1.msra.mxu0 0.0
          %4343 = vmatprep.subr.mxu0 0.0
          %4344 = vmatpush1.msra.mxu0 0.0
          %4345 = vmatprep.subr.mxu0 0.0
          %4346 = vmatpush1.msra.mxu0 0.0
          %4347 = vmatprep.subr.mxu0 0.0
          %4348 = vmatpush1.msra.mxu0 0.0
          %4349 = vmatprep.subr.mxu0 0.0
          %4350 = vmatpush1.msra.mxu0 0.0
          %4351 = vmatprep.subr.mxu0 0.0
          %4352 = vmatpush1.msra.mxu0 0.0
          %4353 = vmatprep.subr.mxu0 0.0
          %4354 = vmatpush1.msra.mxu0 0.0
          %4355 = vmatprep.subr.mxu0 0.0
          %4356 = vmatpush1.msra.mxu0 0.0
          %4357 = vmatprep.subr.mxu0 0.0
          %4358 = vmatpush1.msra.mxu0 0.0
          %4359 = vmatprep.subr.mxu0 0.0
          %4360 = vmatpush1.msra.mxu0 0.0
          %4361 = vmatprep.subr.mxu0 0.0
          %4362 = vmatpush1.msra.mxu0 0.0
          %4363 = vmatprep.subr.mxu0 0.0
          %4364 = vmatpush1.msra.mxu0 0.0
          %4365 = vmatprep.subr.mxu0 0.0
          %4366 = vmatpush1.msra.mxu0 0.0
          %4367 = vmatprep.subr.mxu0 0.0
          %4368 = vmatpush1.msra.mxu0 0.0
          %4369 = vmatprep.subr.mxu0 0.0
          %4370 = vmatpush1.msra.mxu0 0.0
          %4371 = vmatprep.subr.mxu0 0.0
          %4372 = vmatpush1.msra.mxu0 0.0
          %4373 = vmatprep.subr.mxu0 0.0
          %4374 = vmatpush1.msra.mxu0 0.0
          %4375 = vmatprep.subr.mxu0 0.0
          %4376 = vmatpush1.msra.mxu0 0.0
          %4377 = vmatprep.subr.mxu0 0.0
          %4378 = vmatpush1.msra.mxu0 0.0
          %4379 = vmatprep.subr.mxu0 0.0
          %4380 = vmatpush1.msra.mxu0 0.0
          %4381 = vmatprep.subr.mxu0 0.0
          %4382 = vmatpush1.msra.mxu0 0.0
          %4383 = vmatprep.subr.mxu0 0.0
          %4384 = vmatpush1.msra.mxu0 0.0
          %4385 = vmatprep.mubr.f32.mxu0 0.0
          %4386 = vmatmul.mubr.f32.gmra.mrb[0].mxu0 %v4319
          %v4387 = vpop.f32.mrb[0].mxu0
          %v4388 = vadd.f32 %v4316, %v4387
          %v4389 = vpop.f32.mrb[0].mxu0
          %4390 = vdwg.mxu0
          %vm4391 = vcmask 164864
          %4392 = vst.msk [vmem:[#allocation3] sm:$0x3] %vm4391, %v4388
        $region100: #{transformer_classifier_forward.1} parent=91 // pred_fallthru
          _
        // Predicated region
        $region101: #{transformer_classifier_forward.1} parent=91 // pred_check
          %p4393 = pneg %p481
        $region102: #{transformer_classifier_forward.1} parent=91 // pred_check_branch
          %4395 = sbr.rel (%p4393) target = $region104
        $region103: #{transformer_classifier_forward.1} parent=91 // pred_region
          %s4397 = ssub.s32 32, 32
          %4398 = vsyncadd [#allocation4], %s4397
          %s4400 = sshll.u32 [#allocation3], 4
          %s4401 = int_to_ptr.vmem [resolvable:$true] %s4400
          %4403 = dma.vmem_to_hbm [thread:$0]  %s4401, 32, %s18, [#allocation4]
        $region104: #{transformer_classifier_forward.1} parent=91 // pred_fallthru
          _
        // Predicated region
        $region105: #{transformer_classifier_forward.1} parent=91 // pred_check
          %p4404 = pneg %p481
        $region106: #{transformer_classifier_forward.1} parent=91 // pred_check_branch
          %4406 = sbr.rel (%p4404) target = $region108
        $region107: #{transformer_classifier_forward.1} parent=91 // pred_region
          %4407 = dma.done [#allocation4], 32
        $region108: #{transformer_classifier_forward.1} parent=91 // pred_fallthru
          _
      $region92: #{transformer_classifier_forward.1} parent=5 // pred_fallthru
        _
      %p4408 = scmp.le.s32.totalorder 2, %s25
      // Predicated region
      $region109: #{transformer_classifier_forward.1} parent=5 // pred_check
        %p4409 = pneg %p4408
      $region110: #{transformer_classifier_forward.1} parent=5 // pred_check_branch
        %4411 = sbr.rel (%p4409) target = $region112
      $region111: #{transformer_classifier_forward.1} parent=5 // pred_region
        %s4412 = ssub.s32 %s25, 2
      $region112: #{transformer_classifier_forward.1} parent=5 // pred_fallthru
        _
    $region6: #{transformer_classifier_forward.1} parent=1 // loop_footer
      %s29 = sadd.s32 1, %s25
    $region7: #{transformer_classifier_forward.1} parent=1 // loop_footer_branch
      %24 = sbr.rel target = $region3
    $region8: #{transformer_classifier_forward.1} parent=1 // loop_exit
      _
    %4413 = vsyncpa [#allocation4], 1
    %s4414 = scalar_lea.sflag [#allocation4], 1
    %4415 = vsyncpa %s4414, 1

</llo_original>
